<compile_context>
chip_gen: v6e
topology: v6e:2x2x1
jax: 0.10.0
libtpu: 0.0.40
codegen_flags: <defaults>
</compile_context>

<pallas_src>
import math

import jax
import jax.numpy as jnp
from jax.experimental import pallas as pl
from jax.experimental.pallas import tpu as pltpu


# ----------------------------------------------------------------------------
# Init-time glue: reproduce Scale_GroupConv2d.kernel_generation in plain JAX.
# ----------------------------------------------------------------------------
def _grid_sample_3d(inp, grid):
    """torch.nn.functional.grid_sample for 5-D input.
    inp: (N, C, D, H, W); grid: (N, Do, Ho, Wo, 3) with (x, y, z) in [-1, 1].
    mode='bilinear' (trilinear), padding_mode='zeros', align_corners=False."""
    N, C, D, H, W = inp.shape
    x, y, z = grid[..., 0], grid[..., 1], grid[..., 2]
    ix = ((x + 1.0) * W - 1.0) / 2.0
    iy = ((y + 1.0) * H - 1.0) / 2.0
    iz = ((z + 1.0) * D - 1.0) / 2.0
    ix0, iy0, iz0 = jnp.floor(ix), jnp.floor(iy), jnp.floor(iz)
    fx, fy, fz = ix - ix0, iy - iy0, iz - iz0

    inp_flat = inp.reshape(N, C, D * H * W)

    def sample(zc, yc, xc, wgt):
        valid = ((zc >= 0) & (zc < D) & (yc >= 0) & (yc < H) &
                 (xc >= 0) & (xc < W))
        zi = jnp.clip(zc, 0, D - 1).astype(jnp.int32)
        yi = jnp.clip(yc, 0, H - 1).astype(jnp.int32)
        xi = jnp.clip(xc, 0, W - 1).astype(jnp.int32)
        flat = (zi * H + yi) * W + xi                       # (N, Do, Ho, Wo)
        v = jnp.take_along_axis(inp_flat, flat.reshape(N, 1, -1), axis=2)
        v = v.reshape(N, C, *flat.shape[1:])                # (N, C, Do, Ho, Wo)
        w = (wgt * valid.astype(inp.dtype))[:, None]        # (N, 1, Do, Ho, Wo)
        return v * w

    out = jnp.zeros(inp.shape[:2] + grid.shape[1:4], inp.dtype)
    for dz in (0, 1):
        for dy in (0, 1):
            for dx in (0, 1):
                wz = fz if dz else (1.0 - fz)
                wy = fy if dy else (1.0 - fy)
                wx = fx if dx else (1.0 - fx)
                out = out + sample(iz0 + dz, iy0 + dy, ix0 + dx, wz * wy * wx)
    return out


def _make_grid(sizes, shrink_factor, n_repeat):
    d, h, w = sizes
    lz = jnp.linspace(-1.0, 1.0, d) * (shrink_factor ** 2)
    ly = jnp.linspace(-1.0, 1.0, h) * shrink_factor
    lx = jnp.linspace(-1.0, 1.0, w) * shrink_factor
    gz, gy, gx = jnp.meshgrid(lz, ly, lx, indexing="ij")
    grid = jnp.stack([gx, gy, gz], axis=-1)[None]           # (1, D, H, W, 3)
    return jnp.broadcast_to(grid, (n_repeat,) + grid.shape[1:])


def shrink_kernel(kernel, up_scale):
    up = float(up_scale)
    O, G, Cg, kh, kw = kernel.shape
    pad_in = int(math.ceil(up ** 2)) * ((Cg - 1) // 2)
    pad_h = int(math.ceil(up)) * ((kh - 1) // 2)
    pad_w = int(math.ceil(up)) * ((kw - 1) // 2)
    padded = jnp.pad(kernel, ((0, 0), (0, 0), (pad_in, pad_in),
                              (pad_h, pad_h), (pad_w, pad_w)))
    delta = up % 1
    if delta == 0:
        sf = 1.0
    else:
        sf = (kw - 1) / (padded.shape[-1] - 1) * (up + 1)
        sf = 1.5 * (sf - 0.5) ** 3 + 0.57
    grid = _make_grid((Cg, kh, kw), sf, O)
    new_kernel = _grid_sample_3d(padded, grid)
    if kw - 2 * up > 0:
        new_kernel = new_kernel * (kw ** 2 / ((kw - 2 * up) ** 2 + 0.01))
    return new_kernel


def dilate_kernel(kernel, dilation):
    if dilation == 0:
        return kernel
    dil = float(dilation)
    delta = dil % 1
    O, G, Cg, kh, kw = kernel.shape
    d_in = int(math.ceil(dil ** 2))
    new_in = Cg + (Cg - 1) * d_in
    d_h = int(math.ceil(dil))
    new_h = kh + (kh - 1) * d_h
    new_w = kw + (kw - 1) * d_h
    d_w = int(math.ceil(dil))
    new_kernel = jnp.zeros((O, G, new_in, new_h, new_w), kernel.dtype)
    new_kernel = new_kernel.at[:, :, ::d_in + 1, ::d_h + 1, ::d_w + 1].set(kernel)
    if delta != 0:
        p = (kw - 1) // 2
        new_kernel = jnp.pad(new_kernel, ((0, 0), (0, 0), (p, p), (p, p), (p, p)))
        sf = (new_kernel.shape[-1] - 1 - (kw - 1) * delta) / (new_kernel.shape[-1] - 1)
        grid = _make_grid((new_in, new_h, new_w), sf, O)
        new_kernel = _grid_sample_3d(new_kernel, grid)
    return new_kernel[:, :, -Cg:]


def kernel_generation(weights, sout):
    """weights: (O, 2, Cin//2, k, k) -> list over scales of OIHW conv kernels."""
    kernels = []
    for s in range(sout):
        if s - sout // 2 < 0:
            nk = shrink_kernel(weights, (sout // 2 - s) / 2.0)
        elif s - sout // 2 > 0:
            nk = dilate_kernel(weights, (s - sout // 2) / 2.0)
        else:
            nk = weights
        nk = jnp.transpose(nk, (0, 2, 1, 3, 4))              # transpose(1, 2)
        nk = nk.reshape(nk.shape[0], -1, nk.shape[3], nk.shape[4])
        kernels.append(nk)
    return kernels


# ----------------------------------------------------------------------------
# Fused Pallas forward pass (the hot path).
# ----------------------------------------------------------------------------
def build_scale_groupconvnet_forward(layer_scale_kernels_oihw, w_final_oihw,
                                     b_final, H, W, num_scales):
    """Builds the fused forward: xx (S, N, Cin, H, W) NCHW -> (N, Cout, H, W)."""
    S = num_scales
    n_group_layers = len(layer_scale_kernels_oihw)

    # ---- static metadata + packed (Cout, KH*KW*Cin) weight matrices ---------
    metas, wmats = [], []                       # metas[l][s] = (KH,KW,Cin,Cout,ph,pw)
    for l in range(n_group_layers):
        lm = []
        for s in range(S):
            k = jnp.asarray(layer_scale_kernels_oihw[l][s], jnp.float32)
            cout, cin, kh, kw = k.shape
            lm.append((kh, kw, cin, cout, (kh - 1) // 2, (kw - 1) // 2))
            # K-axis ordering (kh, kw, c) to match the in-kernel im2col concat.
            wmats.append(jnp.transpose(k, (0, 2, 3, 1)).reshape(cout, kh * kw * cin))
        metas.append(lm)

    kf = jnp.asarray(w_final_oihw, jnp.float32)
    cout_f, cin_f, kh_f, kw_f = kf.shape
    meta_f = (kh_f, kw_f, cin_f, cout_f, (kh_f - 1) // 2, (kw_f - 1) // 2)
    wf_mat = jnp.transpose(kf, (0, 2, 3, 1)).reshape(cout_f, kh_f * kw_f * cin_f)
    b_col = jnp.asarray(b_final, jnp.float32).reshape(cout_f, 1)

    hidden = metas[-1][0][3]                    # channels feeding the final conv
    cin0 = metas[0][0][2]                       # network input channels

    all_meta = [m for lm in metas for m in lm] + [meta_f]
    margin_h = max(m[4] for m in all_meta)      # max vertical halo of any conv
    margin_w = max(m[5] for m in all_meta)      # max horizontal halo of any conv

    # Row-padded width.  Extra right padding rounds H*Wp up to a multiple of 128
    # so accumulators / output stores are lane-dense.
    wp0 = W + 2 * margin_w
    step = 128 // math.gcd(H, 128)
    extra = (-wp0) % step
    if extra > 32:                              # don't blow up padding for odd H
        extra = 0
    Wp = wp0 + extra
    m_left, m_right = margin_w, margin_w + extra
    L = H * Wp                                  # flattened activation length

    # Scratch slab length: largest static tap offset + L.
    Ftot = max((m[4] + margin_h) * Wp + (m[5] + m_left) for m in all_meta) + L
    C_max = max(max(m[2], m[3]) for m in all_meta)

    base_in = margin_h * Wp                     # where the W-padded input rows go
    base_act = margin_h * Wp + m_left           # where masked layer activations go

    # Valid-column mask for the flattened row-stride-Wp layout (kills wrap garbage).
    col = jnp.arange(L, dtype=jnp.int32) % Wp
    col_mask = (col < W).astype(jnp.float32).reshape(1, L)

    n_w = n_group_layers * S

    def kernel(x_ref, mask_ref, *refs):
        w_refs = refs[:n_w]
        wf_ref = refs[n_w]
        bf_ref = refs[n_w + 1]
        o_ref = refs[n_w + 2]
        buf_a, buf_b, buf_m = refs[n_w + 3], refs[n_w + 4], refs[n_w + 5]
        pingpong = (buf_a, buf_b)

        # Zero the padded slabs: everything not explicitly overwritten below must
        # read as 0 — that is what provides the convs' zero halo.
        buf_a[...] = jnp.zeros_like(buf_a)
        buf_b[...] = jnp.zeros_like(buf_b)
        buf_m[...] = jnp.zeros_like(buf_m)

        mask = mask_ref[...]                                       # (1, L) f32

        def conv(buf, w_ref, kh_n, kw_n, cin, ph, pw):
            # im2col: every tap is a plain static lane-slice of the zero-haloed
            # slab; a single MXU dot with K = kh_n*kw_n*cin contracts all taps.
            taps = []
            for kh in range(kh_n):
                roff = (kh - ph + margin_h) * Wp
                for kw in range(kw_n):
                    off = roff + (kw - pw + m_left)
                    taps.append(buf[0:cin, off:off + L])
            patches = jnp.concatenate(taps, axis=0)                # (K, L)
            return jnp.dot(w_ref[...], patches,
                           preferred_element_type=jnp.float32)     # (Cout, L)

        mean_acc = jnp.zeros((hidden, L), jnp.float32)
        for s in range(S):
            # One contiguous lane-dense store of this scale's (already W-padded)
            # input rows into slab A.
            buf_a[0:cin0, base_in:base_in + L] = x_ref[s]
            for li in range(n_group_layers):
                kh_n, kw_n, cin, cout, ph, pw = metas[li][s]
                o = conv(pingpong[li % 2], w_refs[li * S + s],
                         kh_n, kw_n, cin, ph, pw)
                act = jnp.maximum(o, 0.0) * mask          # ReLU + kill wrap columns
                if li + 1 < n_group_layers:
                    pingpong[(li + 1) % 2][0:cout, base_act:base_act + L] = act
                else:
                    mean_acc = mean_acc + act             # mean folded into a sum
        buf_m[0:hidden, base_act:base_act + L] = mean_acc * (1.0 / S)

        kh_n, kw_n, cin, cout, ph, pw = meta_f
        out = conv(buf_m, wf_ref, kh_n, kw_n, cin, ph, pw) + bf_ref[...]
        o_ref[...] = out.astype(o_ref.dtype)

    w_specs = [pl.BlockSpec(wm.shape, lambda n: (0, 0)) for wm in wmats]

    def forward(xx):
        s_, n_, c_, h_, w_ = xx.shape
        assert (s_, c_, h_, w_) == (S, cin0, H, W), xx.shape
        # Pad W once (tiny) and flatten rows — the kernel never re-pads activations.
        xp = jnp.pad(xx.astype(jnp.float32),
                     ((0, 0), (0, 0), (0, 0), (0, 0), (m_left, m_right)))
        xp = jnp.transpose(xp, (1, 0, 2, 3, 4)).reshape(n_, S, cin0, L)

        out = pl.pallas_call(
            kernel,
            out_shape=jax.ShapeDtypeStruct((n_, cout_f, L), jnp.float32),
            grid=(n_,),
            in_specs=[
                pl.BlockSpec((None, S, cin0, L), lambda n: (n, 0, 0, 0)),
                pl.BlockSpec((1, L), lambda n: (0, 0)),
            ] + w_specs + [
                pl.BlockSpec(wf_mat.shape, lambda n: (0, 0)),
                pl.BlockSpec(b_col.shape, lambda n: (0, 0)),
            ],
            out_specs=pl.BlockSpec((None, cout_f, L), lambda n: (n, 0, 0)),
            scratch_shapes=[pltpu.VMEM((C_max, Ftot), jnp.float32)] * 3,
            compiler_params=pltpu.CompilerParams(
                dimension_semantics=("parallel",)),
        )(xp, col_mask, *wmats, wf_mat, b_col)

        # Drop the row-stride padding -> NCHW.
        return out.reshape(n_, cout_f, H, Wp)[:, :, :, :W]

    return forward


# ----------------------------------------------------------------------------
# Pure-JAX reference (XLA convs) with identical semantics, for a sanity check.
# ----------------------------------------------------------------------------
def _reference_forward(xx, layer_scale_kernels, w_final, b_final, num_scales):
    dn = ("NCHW", "OIHW", "NCHW")
    outs = []
    for s in range(num_scales):
        h = xx[s]
        for layer_kernels in layer_scale_kernels:
            k = layer_kernels[s]
            ph, pw = (k.shape[2] - 1) // 2, (k.shape[3] - 1) // 2
            h = jax.lax.conv_general_dilated(h, k, (1, 1), ((ph, ph), (pw, pw)),
                                             dimension_numbers=dn)
            h = jnp.maximum(h, 0.0)
        outs.append(h)
    m = jnp.mean(jnp.stack(outs, axis=0), axis=0)
    ph, pw = (w_final.shape[2] - 1) // 2, (w_final.shape[3] - 1) // 2
    o = jax.lax.conv_general_dilated(m, w_final, (1, 1), ((ph, ph), (pw, pw)),
                                     dimension_numbers=dn)
    return o + b_final.reshape(1, -1, 1, 1)


if __name__ == "__main__":
    # Small config consistent with the module: in=4, hidden=8, out=4, k=3,
    # num_layers=3 (-> 2 Scale_GroupConv2d layers), num_scales=5, batch=2, 16x16.
    in_channels, hidden_dim, out_channels = 4, 8, 4
    kernel_size, num_layers, num_scales = 3, 3, 5
    N, Himg, Wimg = 2, 16, 16

    key = jax.random.PRNGKey(0)
    keys = jax.random.split(key, 8)

    # Scale_GroupConv2d weights: (out, 2, in//2, k, k), uniform(-stdv, stdv).
    layer_cins = [in_channels] + [hidden_dim] * (num_layers - 2)
    group_weights = []
    for i, cin in enumerate(layer_cins):
        stdv = math.sqrt(1.0 / (kernel_size * kernel_size * cin))
        w = jax.random.uniform(keys[i], (hidden_dim, 2, cin // 2,
                                         kernel_size, kernel_size),
                               jnp.float32, -stdv, stdv)
        group_weights.append(w)

    # Final nn.Conv2d(hidden, out, k): uniform init (Kaiming-style bound).
    fan_in = hidden_dim * kernel_size * kernel_size
    bound = 1.0 / math.sqrt(fan_in)
    w_final = jax.random.uniform(keys[5], (out_channels, hidden_dim,
                                           kernel_size, kernel_size),
                                 jnp.float32, -bound, bound)
    b_final = jax.random.uniform(keys[6], (out_channels,), jnp.float32,
                                 -bound, bound)

    # Init-time per-scale kernel generation (shrink / identity / dilate).
    layer_scale_kernels = [kernel_generation(w, num_scales) for w in group_weights]

    # Input: one NCHW batch per scale level.
    xx = jax.random.normal(keys[7], (num_scales, N, in_channels, Himg, Wimg),
                           jnp.float32)

    forward = jax.jit(build_scale_groupconvnet_forward(
        layer_scale_kernels, w_final, b_final, Himg, Wimg, num_scales))

    out = jax.block_until_ready(forward(xx))
    assert out.shape == (N, out_channels, Himg, Wimg), out.shape
    assert bool(jnp.all(jnp.isfinite(out)))

    # Cross-check against the pure-JAX reference (loose tol: MXU/XLA conv
    # precision modes differ slightly).
    ref = _reference_forward(xx, layer_scale_kernels, w_final, b_final, num_scales)
    assert bool(jnp.allclose(out, ref, rtol=5e-2, atol=5e-2)), \
        float(jnp.max(jnp.abs(out - ref)))

    print("KERNEL_OK")
</pallas_src>

<mosaic_0001>
module attributes {stable_mosaic.version = 11 : i64} {
  func.func @kernel(%arg0: i32, %arg1: memref<1x5x4x384xf32, #tpu.memory_space<vmem>>, %arg2: memref<1x384xf32, #tpu.memory_space<vmem>>, %arg3: memref<8x36xf32, #tpu.memory_space<vmem>>, %arg4: memref<8x36xf32, #tpu.memory_space<vmem>>, %arg5: memref<8x36xf32, #tpu.memory_space<vmem>>, %arg6: memref<8x100xf32, #tpu.memory_space<vmem>>, %arg7: memref<8x100xf32, #tpu.memory_space<vmem>>, %arg8: memref<8x72xf32, #tpu.memory_space<vmem>>, %arg9: memref<8x72xf32, #tpu.memory_space<vmem>>, %arg10: memref<8x72xf32, #tpu.memory_space<vmem>>, %arg11: memref<8x200xf32, #tpu.memory_space<vmem>>, %arg12: memref<8x200xf32, #tpu.memory_space<vmem>>, %arg13: memref<4x72xf32, #tpu.memory_space<vmem>>, %arg14: memref<4x1xf32, #tpu.memory_space<vmem>>, %arg15: memref<1x4x384xf32, #tpu.memory_space<vmem>>, %arg16: memref<8x484xf32, #tpu.memory_space<vmem>>, %arg17: memref<8x484xf32, #tpu.memory_space<vmem>>, %arg18: memref<8x484xf32, #tpu.memory_space<vmem>>) attributes {dimension_semantics = [#tpu.dimension_semantics<parallel>], iteration_bounds = array<i64: 2>, scalar_prefetch = 0 : i64, scratch_operands = 3 : i64, tpu.core_type = #tpu.core_type<tc>, window_params = [{transform_indices = @transform_0, window_bounds = array<i64: 1, 5, 4, 384>}, {pipeline_mode = #tpu.pipeline_mode<synchronous>, transform_indices = @transform_1, window_bounds = array<i64: 1, 384>}, {pipeline_mode = #tpu.pipeline_mode<synchronous>, transform_indices = @transform_2, window_bounds = array<i64: 8, 36>}, {pipeline_mode = #tpu.pipeline_mode<synchronous>, transform_indices = @transform_3, window_bounds = array<i64: 8, 36>}, {pipeline_mode = #tpu.pipeline_mode<synchronous>, transform_indices = @transform_4, window_bounds = array<i64: 8, 36>}, {pipeline_mode = #tpu.pipeline_mode<synchronous>, transform_indices = @transform_5, window_bounds = array<i64: 8, 100>}, {pipeline_mode = #tpu.pipeline_mode<synchronous>, transform_indices = @transform_6, window_bounds = array<i64: 8, 100>}, {pipeline_mode = #tpu.pipeline_mode<synchronous>, transform_indices = @transform_7, window_bounds = array<i64: 8, 72>}, {pipeline_mode = #tpu.pipeline_mode<synchronous>, transform_indices = @transform_8, window_bounds = array<i64: 8, 72>}, {pipeline_mode = #tpu.pipeline_mode<synchronous>, transform_indices = @transform_9, window_bounds = array<i64: 8, 72>}, {pipeline_mode = #tpu.pipeline_mode<synchronous>, transform_indices = @transform_10, window_bounds = array<i64: 8, 200>}, {pipeline_mode = #tpu.pipeline_mode<synchronous>, transform_indices = @transform_11, window_bounds = array<i64: 8, 200>}, {pipeline_mode = #tpu.pipeline_mode<synchronous>, transform_indices = @transform_12, window_bounds = array<i64: 4, 72>}, {pipeline_mode = #tpu.pipeline_mode<synchronous>, transform_indices = @transform_13, window_bounds = array<i64: 4, 1>}, {transform_indices = @transform_14, window_bounds = array<i64: 1, 4, 384>}]} {
    %cst = arith.constant 0.000000e+00 : f32
    %0 = vector.broadcast %cst : f32 to vector<8x484xf32>
    %c0 = arith.constant 0 : index
    %c0_0 = arith.constant 0 : index
    %1 = vector.load %arg16[%c0, %c0_0] : memref<8x484xf32, #tpu.memory_space<vmem>>, vector<8x484xf32>
    tpu.vector_store %arg16[%c0, %c0_0], %0 {strides = array<i32>} : memref<8x484xf32, #tpu.memory_space<vmem>>, vector<8x484xf32>,
    %cst_1 = arith.constant 0.000000e+00 : f32
    %2 = vector.broadcast %cst_1 : f32 to vector<8x484xf32>
    %c0_2 = arith.constant 0 : index
    %c0_3 = arith.constant 0 : index
    %3 = vector.load %arg17[%c0_2, %c0_3] : memref<8x484xf32, #tpu.memory_space<vmem>>, vector<8x484xf32>
    tpu.vector_store %arg17[%c0_2, %c0_3], %2 {strides = array<i32>} : memref<8x484xf32, #tpu.memory_space<vmem>>, vector<8x484xf32>,
    %cst_4 = arith.constant 0.000000e+00 : f32
    %4 = vector.broadcast %cst_4 : f32 to vector<8x484xf32>
    %c0_5 = arith.constant 0 : index
    %c0_6 = arith.constant 0 : index
    %5 = vector.load %arg18[%c0_5, %c0_6] : memref<8x484xf32, #tpu.memory_space<vmem>>, vector<8x484xf32>
    tpu.vector_store %arg18[%c0_5, %c0_6], %4 {strides = array<i32>} : memref<8x484xf32, #tpu.memory_space<vmem>>, vector<8x484xf32>,
    %c0_7 = arith.constant 0 : index
    %c0_8 = arith.constant 0 : index
    %6 = vector.load %arg2[%c0_7, %c0_8] : memref<1x384xf32, #tpu.memory_space<vmem>>, vector<1x384xf32>
    %cst_9 = arith.constant 0.000000e+00 : f32
    %7 = vector.broadcast %cst_9 : f32 to vector<8x384xf32>
    %c0_10 = arith.constant 0 : index
    %c0_11 = arith.constant 0 : index
    %c0_12 = arith.constant 0 : index
    %c0_13 = arith.constant 0 : index
    %8 = vector.load %arg1[%c0_10, %c0_11, %c0_12, %c0_13] : memref<1x5x4x384xf32, #tpu.memory_space<vmem>>, vector<1x1x4x384xf32>
    %9 = vector.shape_cast %8 : vector<1x1x4x384xf32> to vector<4x384xf32>
    %c0_14 = arith.constant 0 : index
    %c48 = arith.constant 48 : index
    %10 = vector.load %arg16[%c0_14, %c48] : memref<8x484xf32, #tpu.memory_space<vmem>>, vector<4x384xf32>
    tpu.vector_store %arg16[%c0_14, %c48], %9 {strides = array<i32>} : memref<8x484xf32, #tpu.memory_space<vmem>>, vector<4x384xf32>,
    %c0_15 = arith.constant 0 : index
    %c25 = arith.constant 25 : index
    %11 = vector.load %arg16[%c0_15, %c25] : memref<8x484xf32, #tpu.memory_space<vmem>>, vector<4x384xf32>
    %c0_16 = arith.constant 0 : index
    %c26 = arith.constant 26 : index
    %12 = vector.load %arg16[%c0_16, %c26] : memref<8x484xf32, #tpu.memory_space<vmem>>, vector<4x384xf32>
    %c0_17 = arith.constant 0 : index
    %c27 = arith.constant 27 : index
    %13 = vector.load %arg16[%c0_17, %c27] : memref<8x484xf32, #tpu.memory_space<vmem>>, vector<4x384xf32>
    %c0_18 = arith.constant 0 : index
    %c49 = arith.constant 49 : index
    %14 = vector.load %arg16[%c0_18, %c49] : memref<8x484xf32, #tpu.memory_space<vmem>>, vector<4x384xf32>
    %c0_19 = arith.constant 0 : index
    %c50 = arith.constant 50 : index
    %15 = vector.load %arg16[%c0_19, %c50] : memref<8x484xf32, #tpu.memory_space<vmem>>, vector<4x384xf32>
    %c0_20 = arith.constant 0 : index
    %c51 = arith.constant 51 : index
    %16 = vector.load %arg16[%c0_20, %c51] : memref<8x484xf32, #tpu.memory_space<vmem>>, vector<4x384xf32>
    %c0_21 = arith.constant 0 : index
    %c73 = arith.constant 73 : index
    %17 = vector.load %arg16[%c0_21, %c73] : memref<8x484xf32, #tpu.memory_space<vmem>>, vector<4x384xf32>
    %c0_22 = arith.constant 0 : index
    %c74 = arith.constant 74 : index
    %18 = vector.load %arg16[%c0_22, %c74] : memref<8x484xf32, #tpu.memory_space<vmem>>, vector<4x384xf32>
    %c0_23 = arith.constant 0 : index
    %c75 = arith.constant 75 : index
    %19 = vector.load %arg16[%c0_23, %c75] : memref<8x484xf32, #tpu.memory_space<vmem>>, vector<4x384xf32>
    %20 = tpu.concatenate %11, %12, %13, %14, %15, %16, %17, %18, %19 in 0 : vector<4x384xf32>, vector<4x384xf32>, vector<4x384xf32>, vector<4x384xf32>, vector<4x384xf32>, vector<4x384xf32>, vector<4x384xf32>, vector<4x384xf32>, vector<4x384xf32> -> vector<36x384xf32>
    %c0_24 = arith.constant 0 : index
    %c0_25 = arith.constant 0 : index
    %21 = vector.load %arg3[%c0_24, %c0_25] : memref<8x36xf32, #tpu.memory_space<vmem>>, vector<8x36xf32>
    %cst_26 = arith.constant dense<0.000000e+00> : vector<8x384xf32>
    %22 = tpu.matmul %21, %20, %cst_26 {dimension_numbers = #tpu.dot_dimension_numbers<[1], [0], [0], [1], [0, 0, 1, 1], [], []>} : vector<8x36xf32>, vector<36x384xf32>, vector<8x384xf32> -> vector<8x384xf32>
    %cst_27 = arith.constant 0.000000e+00 : f32
    %23 = vector.broadcast %cst_27 : f32 to vector<8x384xf32>
    %24 = arith.maximumf %22, %23 : vector<8x384xf32>
    %25 = vector.broadcast %6 : vector<1x384xf32> to vector<8x384xf32>
    %26 = arith.mulf %24, %25 : vector<8x384xf32>
    %c0_28 = arith.constant 0 : index
    %c50_29 = arith.constant 50 : index
    %27 = vector.load %arg17[%c0_28, %c50_29] : memref<8x484xf32, #tpu.memory_space<vmem>>, vector<8x384xf32>
    tpu.vector_store %arg17[%c0_28, %c50_29], %26 {strides = array<i32>} : memref<8x484xf32, #tpu.memory_space<vmem>>, vector<8x384xf32>,
    %c0_30 = arith.constant 0 : index
    %c25_31 = arith.constant 25 : index
    %28 = vector.load %arg17[%c0_30, %c25_31] : memref<8x484xf32, #tpu.memory_space<vmem>>, vector<8x384xf32>
    %c0_32 = arith.constant 0 : index
    %c26_33 = arith.constant 26 : index
    %29 = vector.load %arg17[%c0_32, %c26_33] : memref<8x484xf32, #tpu.memory_space<vmem>>, vector<8x384xf32>
    %c0_34 = arith.constant 0 : index
    %c27_35 = arith.constant 27 : index
    %30 = vector.load %arg17[%c0_34, %c27_35] : memref<8x484xf32, #tpu.memory_space<vmem>>, vector<8x384xf32>
    %c0_36 = arith.constant 0 : index
    %c49_37 = arith.constant 49 : index
    %31 = vector.load %arg17[%c0_36, %c49_37] : memref<8x484xf32, #tpu.memory_space<vmem>>, vector<8x384xf32>
    %c0_38 = arith.constant 0 : index
    %c50_39 = arith.constant 50 : index
    %32 = vector.load %arg17[%c0_38, %c50_39] : memref<8x484xf32, #tpu.memory_space<vmem>>, vector<8x384xf32>
    %c0_40 = arith.constant 0 : index
    %c51_41 = arith.constant 51 : index
    %33 = vector.load %arg17[%c0_40, %c51_41] : memref<8x484xf32, #tpu.memory_space<vmem>>, vector<8x384xf32>
    %c0_42 = arith.constant 0 : index
    %c73_43 = arith.constant 73 : index
    %34 = vector.load %arg17[%c0_42, %c73_43] : memref<8x484xf32, #tpu.memory_space<vmem>>, vector<8x384xf32>
    %c0_44 = arith.constant 0 : index
    %c74_45 = arith.constant 74 : index
    %35 = vector.load %arg17[%c0_44, %c74_45] : memref<8x484xf32, #tpu.memory_space<vmem>>, vector<8x384xf32>
    %c0_46 = arith.constant 0 : index
    %c75_47 = arith.constant 75 : index
    %36 = vector.load %arg17[%c0_46, %c75_47] : memref<8x484xf32, #tpu.memory_space<vmem>>, vector<8x384xf32>
    %37 = tpu.concatenate %28, %29, %30, %31, %32, %33, %34, %35, %36 in 0 : vector<8x384xf32>, vector<8x384xf32>, vector<8x384xf32>, vector<8x384xf32>, vector<8x384xf32>, vector<8x384xf32>, vector<8x384xf32>, vector<8x384xf32>, vector<8x384xf32> -> vector<72x384xf32>
    %c0_48 = arith.constant 0 : index
    %c0_49 = arith.constant 0 : index
    %38 = vector.load %arg8[%c0_48, %c0_49] : memref<8x72xf32, #tpu.memory_space<vmem>>, vector<8x72xf32>
    %cst_50 = arith.constant dense<0.000000e+00> : vector<8x384xf32>
    %39 = tpu.matmul %38, %37, %cst_50 {dimension_numbers = #tpu.dot_dimension_numbers<[1], [0], [0], [1], [0, 0, 1, 1], [], []>} : vector<8x72xf32>, vector<72x384xf32>, vector<8x384xf32> -> vector<8x384xf32>
    %cst_51 = arith.constant 0.000000e+00 : f32
    %40 = vector.broadcast %cst_51 : f32 to vector<8x384xf32>
    %41 = arith.maximumf %39, %40 : vector<8x384xf32>
    %42 = vector.broadcast %6 : vector<1x384xf32> to vector<8x384xf32>
    %43 = arith.mulf %41, %42 : vector<8x384xf32>
    %44 = arith.addf %7, %43 : vector<8x384xf32>
    %c0_52 = arith.constant 0 : index
    %c1 = arith.constant 1 : index
    %c0_53 = arith.constant 0 : index
    %c0_54 = arith.constant 0 : index
    %45 = vector.load %arg1[%c0_52, %c1, %c0_53, %c0_54] : memref<1x5x4x384xf32, #tpu.memory_space<vmem>>, vector<1x1x4x384xf32>
    %46 = vector.shape_cast %45 : vector<1x1x4x384xf32> to vector<4x384xf32>
    %c0_55 = arith.constant 0 : index
    %c48_56 = arith.constant 48 : index
    %47 = vector.load %arg16[%c0_55, %c48_56] : memref<8x484xf32, #tpu.memory_space<vmem>>, vector<4x384xf32>
    tpu.vector_store %arg16[%c0_55, %c48_56], %46 {strides = array<i32>} : memref<8x484xf32, #tpu.memory_space<vmem>>, vector<4x384xf32>,
    %c0_57 = arith.constant 0 : index
    %c25_58 = arith.constant 25 : index
    %48 = vector.load %arg16[%c0_57, %c25_58] : memref<8x484xf32, #tpu.memory_space<vmem>>, vector<4x384xf32>
    %c0_59 = arith.constant 0 : index
    %c26_60 = arith.constant 26 : index
    %49 = vector.load %arg16[%c0_59, %c26_60] : memref<8x484xf32, #tpu.memory_space<vmem>>, vector<4x384xf32>
    %c0_61 = arith.constant 0 : index
    %c27_62 = arith.constant 27 : index
    %50 = vector.load %arg16[%c0_61, %c27_62] : memref<8x484xf32, #tpu.memory_space<vmem>>, vector<4x384xf32>
    %c0_63 = arith.constant 0 : index
    %c49_64 = arith.constant 49 : index
    %51 = vector.load %arg16[%c0_63, %c49_64] : memref<8x484xf32, #tpu.memory_space<vmem>>, vector<4x384xf32>
    %c0_65 = arith.constant 0 : index
    %c50_66 = arith.constant 50 : index
    %52 = vector.load %arg16[%c0_65, %c50_66] : memref<8x484xf32, #tpu.memory_space<vmem>>, vector<4x384xf32>
    %c0_67 = arith.constant 0 : index
    %c51_68 = arith.constant 51 : index
    %53 = vector.load %arg16[%c0_67, %c51_68] : memref<8x484xf32, #tpu.memory_space<vmem>>, vector<4x384xf32>
    %c0_69 = arith.constant 0 : index
    %c73_70 = arith.constant 73 : index
    %54 = vector.load %arg16[%c0_69, %c73_70] : memref<8x484xf32, #tpu.memory_space<vmem>>, vector<4x384xf32>
    %c0_71 = arith.constant 0 : index
    %c74_72 = arith.constant 74 : index
    %55 = vector.load %arg16[%c0_71, %c74_72] : memref<8x484xf32, #tpu.memory_space<vmem>>, vector<4x384xf32>
    %c0_73 = arith.constant 0 : index
    %c75_74 = arith.constant 75 : index
    %56 = vector.load %arg16[%c0_73, %c75_74] : memref<8x484xf32, #tpu.memory_space<vmem>>, vector<4x384xf32>
    %57 = tpu.concatenate %48, %49, %50, %51, %52, %53, %54, %55, %56 in 0 : vector<4x384xf32>, vector<4x384xf32>, vector<4x384xf32>, vector<4x384xf32>, vector<4x384xf32>, vector<4x384xf32>, vector<4x384xf32>, vector<4x384xf32>, vector<4x384xf32> -> vector<36x384xf32>
    %c0_75 = arith.constant 0 : index
    %c0_76 = arith.constant 0 : index
    %58 = vector.load %arg4[%c0_75, %c0_76] : memref<8x36xf32, #tpu.memory_space<vmem>>, vector<8x36xf32>
    %cst_77 = arith.constant dense<0.000000e+00> : vector<8x384xf32>
    %59 = tpu.matmul %58, %57, %cst_77 {dimension_numbers = #tpu.dot_dimension_numbers<[1], [0], [0], [1], [0, 0, 1, 1], [], []>} : vector<8x36xf32>, vector<36x384xf32>, vector<8x384xf32> -> vector<8x384xf32>
    %cst_78 = arith.constant 0.000000e+00 : f32
    %60 = vector.broadcast %cst_78 : f32 to vector<8x384xf32>
    %61 = arith.maximumf %59, %60 : vector<8x384xf32>
    %62 = vector.broadcast %6 : vector<1x384xf32> to vector<8x384xf32>
    %63 = arith.mulf %61, %62 : vector<8x384xf32>
    %c0_79 = arith.constant 0 : index
    %c50_80 = arith.constant 50 : index
    %64 = vector.load %arg17[%c0_79, %c50_80] : memref<8x484xf32, #tpu.memory_space<vmem>>, vector<8x384xf32>
    tpu.vector_store %arg17[%c0_79, %c50_80], %63 {strides = array<i32>} : memref<8x484xf32, #tpu.memory_space<vmem>>, vector<8x384xf32>,
    %c0_81 = arith.constant 0 : index
    %c25_82 = arith.constant 25 : index
    %65 = vector.load %arg17[%c0_81, %c25_82] : memref<8x484xf32, #tpu.memory_space<vmem>>, vector<8x384xf32>
    %c0_83 = arith.constant 0 : index
    %c26_84 = arith.constant 26 : index
    %66 = vector.load %arg17[%c0_83, %c26_84] : memref<8x484xf32, #tpu.memory_space<vmem>>, vector<8x384xf32>
    %c0_85 = arith.constant 0 : index
    %c27_86 = arith.constant 27 : index
    %67 = vector.load %arg17[%c0_85, %c27_86] : memref<8x484xf32, #tpu.memory_space<vmem>>, vector<8x384xf32>
    %c0_87 = arith.constant 0 : index
    %c49_88 = arith.constant 49 : index
    %68 = vector.load %arg17[%c0_87, %c49_88] : memref<8x484xf32, #tpu.memory_space<vmem>>, vector<8x384xf32>
    %c0_89 = arith.constant 0 : index
    %c50_90 = arith.constant 50 : index
    %69 = vector.load %arg17[%c0_89, %c50_90] : memref<8x484xf32, #tpu.memory_space<vmem>>, vector<8x384xf32>
    %c0_91 = arith.constant 0 : index
    %c51_92 = arith.constant 51 : index
    %70 = vector.load %arg17[%c0_91, %c51_92] : memref<8x484xf32, #tpu.memory_space<vmem>>, vector<8x384xf32>
    %c0_93 = arith.constant 0 : index
    %c73_94 = arith.constant 73 : index
    %71 = vector.load %arg17[%c0_93, %c73_94] : memref<8x484xf32, #tpu.memory_space<vmem>>, vector<8x384xf32>
    %c0_95 = arith.constant 0 : index
    %c74_96 = arith.constant 74 : index
    %72 = vector.load %arg17[%c0_95, %c74_96] : memref<8x484xf32, #tpu.memory_space<vmem>>, vector<8x384xf32>
    %c0_97 = arith.constant 0 : index
    %c75_98 = arith.constant 75 : index
    %73 = vector.load %arg17[%c0_97, %c75_98] : memref<8x484xf32, #tpu.memory_space<vmem>>, vector<8x384xf32>
    %74 = tpu.concatenate %65, %66, %67, %68, %69, %70, %71, %72, %73 in 0 : vector<8x384xf32>, vector<8x384xf32>, vector<8x384xf32>, vector<8x384xf32>, vector<8x384xf32>, vector<8x384xf32>, vector<8x384xf32>, vector<8x384xf32>, vector<8x384xf32> -> vector<72x384xf32>
    %c0_99 = arith.constant 0 : index
    %c0_100 = arith.constant 0 : index
    %75 = vector.load %arg9[%c0_99, %c0_100] : memref<8x72xf32, #tpu.memory_space<vmem>>, vector<8x72xf32>
    %cst_101 = arith.constant dense<0.000000e+00> : vector<8x384xf32>
    %76 = tpu.matmul %75, %74, %cst_101 {dimension_numbers = #tpu.dot_dimension_numbers<[1], [0], [0], [1], [0, 0, 1, 1], [], []>} : vector<8x72xf32>, vector<72x384xf32>, vector<8x384xf32> -> vector<8x384xf32>
    %cst_102 = arith.constant 0.000000e+00 : f32
    %77 = vector.broadcast %cst_102 : f32 to vector<8x384xf32>
    %78 = arith.maximumf %76, %77 : vector<8x384xf32>
    %79 = vector.broadcast %6 : vector<1x384xf32> to vector<8x384xf32>
    %80 = arith.mulf %78, %79 : vector<8x384xf32>
    %81 = arith.addf %44, %80 : vector<8x384xf32>
    %c0_103 = arith.constant 0 : index
    %c2 = arith.constant 2 : index
    %c0_104 = arith.constant 0 : index
    %c0_105 = arith.constant 0 : index
    %82 = vector.load %arg1[%c0_103, %c2, %c0_104, %c0_105] : memref<1x5x4x384xf32, #tpu.memory_space<vmem>>, vector<1x1x4x384xf32>
    %83 = vector.shape_cast %82 : vector<1x1x4x384xf32> to vector<4x384xf32>
    %c0_106 = arith.constant 0 : index
    %c48_107 = arith.constant 48 : index
    %84 = vector.load %arg16[%c0_106, %c48_107] : memref<8x484xf32, #tpu.memory_space<vmem>>, vector<4x384xf32>
    tpu.vector_store %arg16[%c0_106, %c48_107], %83 {strides = array<i32>} : memref<8x484xf32, #tpu.memory_space<vmem>>, vector<4x384xf32>,
    %c0_108 = arith.constant 0 : index
    %c25_109 = arith.constant 25 : index
    %85 = vector.load %arg16[%c0_108, %c25_109] : memref<8x484xf32, #tpu.memory_space<vmem>>, vector<4x384xf32>
    %c0_110 = arith.constant 0 : index
    %c26_111 = arith.constant 26 : index
    %86 = vector.load %arg16[%c0_110, %c26_111] : memref<8x484xf32, #tpu.memory_space<vmem>>, vector<4x384xf32>
    %c0_112 = arith.constant 0 : index
    %c27_113 = arith.constant 27 : index
    %87 = vector.load %arg16[%c0_112, %c27_113] : memref<8x484xf32, #tpu.memory_space<vmem>>, vector<4x384xf32>
    %c0_114 = arith.constant 0 : index
    %c49_115 = arith.constant 49 : index
    %88 = vector.load %arg16[%c0_114, %c49_115] : memref<8x484xf32, #tpu.memory_space<vmem>>, vector<4x384xf32>
    %c0_116 = arith.constant 0 : index
    %c50_117 = arith.constant 50 : index
    %89 = vector.load %arg16[%c0_116, %c50_117] : memref<8x484xf32, #tpu.memory_space<vmem>>, vector<4x384xf32>
    %c0_118 = arith.constant 0 : index
    %c51_119 = arith.constant 51 : index
    %90 = vector.load %arg16[%c0_118, %c51_119] : memref<8x484xf32, #tpu.memory_space<vmem>>, vector<4x384xf32>
    %c0_120 = arith.constant 0 : index
    %c73_121 = arith.constant 73 : index
    %91 = vector.load %arg16[%c0_120, %c73_121] : memref<8x484xf32, #tpu.memory_space<vmem>>, vector<4x384xf32>
    %c0_122 = arith.constant 0 : index
    %c74_123 = arith.constant 74 : index
    %92 = vector.load %arg16[%c0_122, %c74_123] : memref<8x484xf32, #tpu.memory_space<vmem>>, vector<4x384xf32>
    %c0_124 = arith.constant 0 : index
    %c75_125 = arith.constant 75 : index
    %93 = vector.load %arg16[%c0_124, %c75_125] : memref<8x484xf32, #tpu.memory_space<vmem>>, vector<4x384xf32>
    %94 = tpu.concatenate %85, %86, %87, %88, %89, %90, %91, %92, %93 in 0 : vector<4x384xf32>, vector<4x384xf32>, vector<4x384xf32>, vector<4x384xf32>, vector<4x384xf32>, vector<4x384xf32>, vector<4x384xf32>, vector<4x384xf32>, vector<4x384xf32> -> vector<36x384xf32>
    %c0_126 = arith.constant 0 : index
    %c0_127 = arith.constant 0 : index
    %95 = vector.load %arg5[%c0_126, %c0_127] : memref<8x36xf32, #tpu.memory_space<vmem>>, vector<8x36xf32>
    %cst_128 = arith.constant dense<0.000000e+00> : vector<8x384xf32>
    %96 = tpu.matmul %95, %94, %cst_128 {dimension_numbers = #tpu.dot_dimension_numbers<[1], [0], [0], [1], [0, 0, 1, 1], [], []>} : vector<8x36xf32>, vector<36x384xf32>, vector<8x384xf32> -> vector<8x384xf32>
    %cst_129 = arith.constant 0.000000e+00 : f32
    %97 = vector.broadcast %cst_129 : f32 to vector<8x384xf32>
    %98 = arith.maximumf %96, %97 : vector<8x384xf32>
    %99 = vector.broadcast %6 : vector<1x384xf32> to vector<8x384xf32>
    %100 = arith.mulf %98, %99 : vector<8x384xf32>
    %c0_130 = arith.constant 0 : index
    %c50_131 = arith.constant 50 : index
    %101 = vector.load %arg17[%c0_130, %c50_131] : memref<8x484xf32, #tpu.memory_space<vmem>>, vector<8x384xf32>
    tpu.vector_store %arg17[%c0_130, %c50_131], %100 {strides = array<i32>} : memref<8x484xf32, #tpu.memory_space<vmem>>, vector<8x384xf32>,
    %c0_132 = arith.constant 0 : index
    %c25_133 = arith.constant 25 : index
    %102 = vector.load %arg17[%c0_132, %c25_133] : memref<8x484xf32, #tpu.memory_space<vmem>>, vector<8x384xf32>
    %c0_134 = arith.constant 0 : index
    %c26_135 = arith.constant 26 : index
    %103 = vector.load %arg17[%c0_134, %c26_135] : memref<8x484xf32, #tpu.memory_space<vmem>>, vector<8x384xf32>
    %c0_136 = arith.constant 0 : index
    %c27_137 = arith.constant 27 : index
    %104 = vector.load %arg17[%c0_136, %c27_137] : memref<8x484xf32, #tpu.memory_space<vmem>>, vector<8x384xf32>
    %c0_138 = arith.constant 0 : index
    %c49_139 = arith.constant 49 : index
    %105 = vector.load %arg17[%c0_138, %c49_139] : memref<8x484xf32, #tpu.memory_space<vmem>>, vector<8x384xf32>
    %c0_140 = arith.constant 0 : index
    %c50_141 = arith.constant 50 : index
    %106 = vector.load %arg17[%c0_140, %c50_141] : memref<8x484xf32, #tpu.memory_space<vmem>>, vector<8x384xf32>
    %c0_142 = arith.constant 0 : index
    %c51_143 = arith.constant 51 : index
    %107 = vector.load %arg17[%c0_142, %c51_143] : memref<8x484xf32, #tpu.memory_space<vmem>>, vector<8x384xf32>
    %c0_144 = arith.constant 0 : index
    %c73_145 = arith.constant 73 : index
    %108 = vector.load %arg17[%c0_144, %c73_145] : memref<8x484xf32, #tpu.memory_space<vmem>>, vector<8x384xf32>
    %c0_146 = arith.constant 0 : index
    %c74_147 = arith.constant 74 : index
    %109 = vector.load %arg17[%c0_146, %c74_147] : memref<8x484xf32, #tpu.memory_space<vmem>>, vector<8x384xf32>
    %c0_148 = arith.constant 0 : index
    %c75_149 = arith.constant 75 : index
    %110 = vector.load %arg17[%c0_148, %c75_149] : memref<8x484xf32, #tpu.memory_space<vmem>>, vector<8x384xf32>
    %111 = tpu.concatenate %102, %103, %104, %105, %106, %107, %108, %109, %110 in 0 : vector<8x384xf32>, vector<8x384xf32>, vector<8x384xf32>, vector<8x384xf32>, vector<8x384xf32>, vector<8x384xf32>, vector<8x384xf32>, vector<8x384xf32>, vector<8x384xf32> -> vector<72x384xf32>
    %c0_150 = arith.constant 0 : index
    %c0_151 = arith.constant 0 : index
    %112 = vector.load %arg10[%c0_150, %c0_151] : memref<8x72xf32, #tpu.memory_space<vmem>>, vector<8x72xf32>
    %cst_152 = arith.constant dense<0.000000e+00> : vector<8x384xf32>
    %113 = tpu.matmul %112, %111, %cst_152 {dimension_numbers = #tpu.dot_dimension_numbers<[1], [0], [0], [1], [0, 0, 1, 1], [], []>} : vector<8x72xf32>, vector<72x384xf32>, vector<8x384xf32> -> vector<8x384xf32>
    %cst_153 = arith.constant 0.000000e+00 : f32
    %114 = vector.broadcast %cst_153 : f32 to vector<8x384xf32>
    %115 = arith.maximumf %113, %114 : vector<8x384xf32>
    %116 = vector.broadcast %6 : vector<1x384xf32> to vector<8x384xf32>
    %117 = arith.mulf %115, %116 : vector<8x384xf32>
    %118 = arith.addf %81, %117 : vector<8x384xf32>
    %c0_154 = arith.constant 0 : index
    %c3 = arith.constant 3 : index
    %c0_155 = arith.constant 0 : index
    %c0_156 = arith.constant 0 : index
    %119 = vector.load %arg1[%c0_154, %c3, %c0_155, %c0_156] : memref<1x5x4x384xf32, #tpu.memory_space<vmem>>, vector<1x1x4x384xf32>
    %120 = vector.shape_cast %119 : vector<1x1x4x384xf32> to vector<4x384xf32>
    %c0_157 = arith.constant 0 : index
    %c48_158 = arith.constant 48 : index
    %121 = vector.load %arg16[%c0_157, %c48_158] : memref<8x484xf32, #tpu.memory_space<vmem>>, vector<4x384xf32>
    tpu.vector_store %arg16[%c0_157, %c48_158], %120 {strides = array<i32>} : memref<8x484xf32, #tpu.memory_space<vmem>>, vector<4x384xf32>,
    %c0_159 = arith.constant 0 : index
    %c0_160 = arith.constant 0 : index
    %122 = vector.load %arg16[%c0_159, %c0_160] : memref<8x484xf32, #tpu.memory_space<vmem>>, vector<4x384xf32>
    %c0_161 = arith.constant 0 : index
    %c1_162 = arith.constant 1 : index
    %123 = vector.load %arg16[%c0_161, %c1_162] : memref<8x484xf32, #tpu.memory_space<vmem>>, vector<4x384xf32>
    %c0_163 = arith.constant 0 : index
    %c2_164 = arith.constant 2 : index
    %124 = vector.load %arg16[%c0_163, %c2_164] : memref<8x484xf32, #tpu.memory_space<vmem>>, vector<4x384xf32>
    %c0_165 = arith.constant 0 : index
    %c3_166 = arith.constant 3 : index
    %125 = vector.load %arg16[%c0_165, %c3_166] : memref<8x484xf32, #tpu.memory_space<vmem>>, vector<4x384xf32>
    %c0_167 = arith.constant 0 : index
    %c4 = arith.constant 4 : index
    %126 = vector.load %arg16[%c0_167, %c4] : memref<8x484xf32, #tpu.memory_space<vmem>>, vector<4x384xf32>
    %c0_168 = arith.constant 0 : index
    %c24 = arith.constant 24 : index
    %127 = vector.load %arg16[%c0_168, %c24] : memref<8x484xf32, #tpu.memory_space<vmem>>, vector<4x384xf32>
    %c0_169 = arith.constant 0 : index
    %c25_170 = arith.constant 25 : index
    %128 = vector.load %arg16[%c0_169, %c25_170] : memref<8x484xf32, #tpu.memory_space<vmem>>, vector<4x384xf32>
    %c0_171 = arith.constant 0 : index
    %c26_172 = arith.constant 26 : index
    %129 = vector.load %arg16[%c0_171, %c26_172] : memref<8x484xf32, #tpu.memory_space<vmem>>, vector<4x384xf32>
    %c0_173 = arith.constant 0 : index
    %c27_174 = arith.constant 27 : index
    %130 = vector.load %arg16[%c0_173, %c27_174] : memref<8x484xf32, #tpu.memory_space<vmem>>, vector<4x384xf32>
    %c0_175 = arith.constant 0 : index
    %c28 = arith.constant 28 : index
    %131 = vector.load %arg16[%c0_175, %c28] : memref<8x484xf32, #tpu.memory_space<vmem>>, vector<4x384xf32>
    %c0_176 = arith.constant 0 : index
    %c48_177 = arith.constant 48 : index
    %132 = vector.load %arg16[%c0_176, %c48_177] : memref<8x484xf32, #tpu.memory_space<vmem>>, vector<4x384xf32>
    %c0_178 = arith.constant 0 : index
    %c49_179 = arith.constant 49 : index
    %133 = vector.load %arg16[%c0_178, %c49_179] : memref<8x484xf32, #tpu.memory_space<vmem>>, vector<4x384xf32>
    %c0_180 = arith.constant 0 : index
    %c50_181 = arith.constant 50 : index
    %134 = vector.load %arg16[%c0_180, %c50_181] : memref<8x484xf32, #tpu.memory_space<vmem>>, vector<4x384xf32>
    %c0_182 = arith.constant 0 : index
    %c51_183 = arith.constant 51 : index
    %135 = vector.load %arg16[%c0_182, %c51_183] : memref<8x484xf32, #tpu.memory_space<vmem>>, vector<4x384xf32>
    %c0_184 = arith.constant 0 : index
    %c52 = arith.constant 52 : index
    %136 = vector.load %arg16[%c0_184, %c52] : memref<8x484xf32, #tpu.memory_space<vmem>>, vector<4x384xf32>
    %c0_185 = arith.constant 0 : index
    %c72 = arith.constant 72 : index
    %137 = vector.load %arg16[%c0_185, %c72] : memref<8x484xf32, #tpu.memory_space<vmem>>, vector<4x384xf32>
    %c0_186 = arith.constant 0 : index
    %c73_187 = arith.constant 73 : index
    %138 = vector.load %arg16[%c0_186, %c73_187] : memref<8x484xf32, #tpu.memory_space<vmem>>, vector<4x384xf32>
    %c0_188 = arith.constant 0 : index
    %c74_189 = arith.constant 74 : index
    %139 = vector.load %arg16[%c0_188, %c74_189] : memref<8x484xf32, #tpu.memory_space<vmem>>, vector<4x384xf32>
    %c0_190 = arith.constant 0 : index
    %c75_191 = arith.constant 75 : index
    %140 = vector.load %arg16[%c0_190, %c75_191] : memref<8x484xf32, #tpu.memory_space<vmem>>, vector<4x384xf32>
    %c0_192 = arith.constant 0 : index
    %c76 = arith.constant 76 : index
    %141 = vector.load %arg16[%c0_192, %c76] : memref<8x484xf32, #tpu.memory_space<vmem>>, vector<4x384xf32>
    %c0_193 = arith.constant 0 : index
    %c96 = arith.constant 96 : index
    %142 = vector.load %arg16[%c0_193, %c96] : memref<8x484xf32, #tpu.memory_space<vmem>>, vector<4x384xf32>
    %c0_194 = arith.constant 0 : index
    %c97 = arith.constant 97 : index
    %143 = vector.load %arg16[%c0_194, %c97] : memref<8x484xf32, #tpu.memory_space<vmem>>, vector<4x384xf32>
    %c0_195 = arith.constant 0 : index
    %c98 = arith.constant 98 : index
    %144 = vector.load %arg16[%c0_195, %c98] : memref<8x484xf32, #tpu.memory_space<vmem>>, vector<4x384xf32>
    %c0_196 = arith.constant 0 : index
    %c99 = arith.constant 99 : index
    %145 = vector.load %arg16[%c0_196, %c99] : memref<8x484xf32, #tpu.memory_space<vmem>>, vector<4x384xf32>
    %c0_197 = arith.constant 0 : index
    %c100 = arith.constant 100 : index
    %146 = vector.load %arg16[%c0_197, %c100] : memref<8x484xf32, #tpu.memory_space<vmem>>, vector<4x384xf32>
    %147 = tpu.concatenate %122, %123, %124, %125, %126, %127, %128, %129, %130, %131, %132, %133, %134, %135, %136, %137 in 0 : vector<4x384xf32>, vector<4x384xf32>, vector<4x384xf32>, vector<4x384xf32>, vector<4x384xf32>, vector<4x384xf32>, vector<4x384xf32>, vector<4x384xf32>, vector<4x384xf32>, vector<4x384xf32>, vector<4x384xf32>, vector<4x384xf32>, vector<4x384xf32>, vector<4x384xf32>, vector<4x384xf32>, vector<4x384xf32> -> vector<64x384xf32>
    %148 = tpu.concatenate %138, %139, %140, %141, %142, %143, %144, %145, %146 in 0 : vector<4x384xf32>, vector<4x384xf32>, vector<4x384xf32>, vector<4x384xf32>, vector<4x384xf32>, vector<4x384xf32>, vector<4x384xf32>, vector<4x384xf32>, vector<4x384xf32> -> vector<36x384xf32>
    %149 = tpu.concatenate %147, %148 in 0 : vector<64x384xf32>, vector<36x384xf32> -> vector<100x384xf32>
    %c0_198 = arith.constant 0 : index
    %c0_199 = arith.constant 0 : index
    %150 = vector.load %arg6[%c0_198, %c0_199] : memref<8x100xf32, #tpu.memory_space<vmem>>, vector<8x100xf32>
    %cst_200 = arith.constant dense<0.000000e+00> : vector<8x384xf32>
    %151 = tpu.matmul %150, %149, %cst_200 {dimension_numbers = #tpu.dot_dimension_numbers<[1], [0], [0], [1], [0, 0, 1, 1], [], []>} : vector<8x100xf32>, vector<100x384xf32>, vector<8x384xf32> -> vector<8x384xf32>
    %cst_201 = arith.constant 0.000000e+00 : f32
    %152 = vector.broadcast %cst_201 : f32 to vector<8x384xf32>
    %153 = arith.maximumf %151, %152 : vector<8x384xf32>
    %154 = vector.broadcast %6 : vector<1x384xf32> to vector<8x384xf32>
    %155 = arith.mulf %153, %154 : vector<8x384xf32>
    %c0_202 = arith.constant 0 : index
    %c50_203 = arith.constant 50 : index
    %156 = vector.load %arg17[%c0_202, %c50_203] : memref<8x484xf32, #tpu.memory_space<vmem>>, vector<8x384xf32>
    tpu.vector_store %arg17[%c0_202, %c50_203], %155 {strides = array<i32>} : memref<8x484xf32, #tpu.memory_space<vmem>>, vector<8x384xf32>,
    %c0_204 = arith.constant 0 : index
    %c0_205 = arith.constant 0 : index
    %157 = vector.load %arg17[%c0_204, %c0_205] : memref<8x484xf32, #tpu.memory_space<vmem>>, vector<8x384xf32>
    %c0_206 = arith.constant 0 : index
    %c1_207 = arith.constant 1 : index
    %158 = vector.load %arg17[%c0_206, %c1_207] : memref<8x484xf32, #tpu.memory_space<vmem>>, vector<8x384xf32>
    %c0_208 = arith.constant 0 : index
    %c2_209 = arith.constant 2 : index
    %159 = vector.load %arg17[%c0_208, %c2_209] : memref<8x484xf32, #tpu.memory_space<vmem>>, vector<8x384xf32>
    %c0_210 = arith.constant 0 : index
    %c3_211 = arith.constant 3 : index
    %160 = vector.load %arg17[%c0_210, %c3_211] : memref<8x484xf32, #tpu.memory_space<vmem>>, vector<8x384xf32>
    %c0_212 = arith.constant 0 : index
    %c4_213 = arith.constant 4 : index
    %161 = vector.load %arg17[%c0_212, %c4_213] : memref<8x484xf32, #tpu.memory_space<vmem>>, vector<8x384xf32>
    %c0_214 = arith.constant 0 : index
    %c24_215 = arith.constant 24 : index
    %162 = vector.load %arg17[%c0_214, %c24_215] : memref<8x484xf32, #tpu.memory_space<vmem>>, vector<8x384xf32>
    %c0_216 = arith.constant 0 : index
    %c25_217 = arith.constant 25 : index
    %163 = vector.load %arg17[%c0_216, %c25_217] : memref<8x484xf32, #tpu.memory_space<vmem>>, vector<8x384xf32>
    %c0_218 = arith.constant 0 : index
    %c26_219 = arith.constant 26 : index
    %164 = vector.load %arg17[%c0_218, %c26_219] : memref<8x484xf32, #tpu.memory_space<vmem>>, vector<8x384xf32>
    %c0_220 = arith.constant 0 : index
    %c27_221 = arith.constant 27 : index
    %165 = vector.load %arg17[%c0_220, %c27_221] : memref<8x484xf32, #tpu.memory_space<vmem>>, vector<8x384xf32>
    %c0_222 = arith.constant 0 : index
    %c28_223 = arith.constant 28 : index
    %166 = vector.load %arg17[%c0_222, %c28_223] : memref<8x484xf32, #tpu.memory_space<vmem>>, vector<8x384xf32>
    %c0_224 = arith.constant 0 : index
    %c48_225 = arith.constant 48 : index
    %167 = vector.load %arg17[%c0_224, %c48_225] : memref<8x484xf32, #tpu.memory_space<vmem>>, vector<8x384xf32>
    %c0_226 = arith.constant 0 : index
    %c49_227 = arith.constant 49 : index
    %168 = vector.load %arg17[%c0_226, %c49_227] : memref<8x484xf32, #tpu.memory_space<vmem>>, vector<8x384xf32>
    %c0_228 = arith.constant 0 : index
    %c50_229 = arith.constant 50 : index
    %169 = vector.load %arg17[%c0_228, %c50_229] : memref<8x484xf32, #tpu.memory_space<vmem>>, vector<8x384xf32>
    %c0_230 = arith.constant 0 : index
    %c51_231 = arith.constant 51 : index
    %170 = vector.load %arg17[%c0_230, %c51_231] : memref<8x484xf32, #tpu.memory_space<vmem>>, vector<8x384xf32>
    %c0_232 = arith.constant 0 : index
    %c52_233 = arith.constant 52 : index
    %171 = vector.load %arg17[%c0_232, %c52_233] : memref<8x484xf32, #tpu.memory_space<vmem>>, vector<8x384xf32>
    %c0_234 = arith.constant 0 : index
    %c72_235 = arith.constant 72 : index
    %172 = vector.load %arg17[%c0_234, %c72_235] : memref<8x484xf32, #tpu.memory_space<vmem>>, vector<8x384xf32>
    %c0_236 = arith.constant 0 : index
    %c73_237 = arith.constant 73 : index
    %173 = vector.load %arg17[%c0_236, %c73_237] : memref<8x484xf32, #tpu.memory_space<vmem>>, vector<8x384xf32>
    %c0_238 = arith.constant 0 : index
    %c74_239 = arith.constant 74 : index
    %174 = vector.load %arg17[%c0_238, %c74_239] : memref<8x484xf32, #tpu.memory_space<vmem>>, vector<8x384xf32>
    %c0_240 = arith.constant 0 : index
    %c75_241 = arith.constant 75 : index
    %175 = vector.load %arg17[%c0_240, %c75_241] : memref<8x484xf32, #tpu.memory_space<vmem>>, vector<8x384xf32>
    %c0_242 = arith.constant 0 : index
    %c76_243 = arith.constant 76 : index
    %176 = vector.load %arg17[%c0_242, %c76_243] : memref<8x484xf32, #tpu.memory_space<vmem>>, vector<8x384xf32>
    %c0_244 = arith.constant 0 : index
    %c96_245 = arith.constant 96 : index
    %177 = vector.load %arg17[%c0_244, %c96_245] : memref<8x484xf32, #tpu.memory_space<vmem>>, vector<8x384xf32>
    %c0_246 = arith.constant 0 : index
    %c97_247 = arith.constant 97 : index
    %178 = vector.load %arg17[%c0_246, %c97_247] : memref<8x484xf32, #tpu.memory_space<vmem>>, vector<8x384xf32>
    %c0_248 = arith.constant 0 : index
    %c98_249 = arith.constant 98 : index
    %179 = vector.load %arg17[%c0_248, %c98_249] : memref<8x484xf32, #tpu.memory_space<vmem>>, vector<8x384xf32>
    %c0_250 = arith.constant 0 : index
    %c99_251 = arith.constant 99 : index
    %180 = vector.load %arg17[%c0_250, %c99_251] : memref<8x484xf32, #tpu.memory_space<vmem>>, vector<8x384xf32>
    %c0_252 = arith.constant 0 : index
    %c100_253 = arith.constant 100 : index
    %181 = vector.load %arg17[%c0_252, %c100_253] : memref<8x484xf32, #tpu.memory_space<vmem>>, vector<8x384xf32>
    %182 = tpu.concatenate %157, %158, %159, %160, %161, %162, %163, %164, %165, %166, %167, %168, %169, %170, %171, %172 in 0 : vector<8x384xf32>, vector<8x384xf32>, vector<8x384xf32>, vector<8x384xf32>, vector<8x384xf32>, vector<8x384xf32>, vector<8x384xf32>, vector<8x384xf32>, vector<8x384xf32>, vector<8x384xf32>, vector<8x384xf32>, vector<8x384xf32>, vector<8x384xf32>, vector<8x384xf32>, vector<8x384xf32>, vector<8x384xf32> -> vector<128x384xf32>
    %183 = tpu.concatenate %173, %174, %175, %176, %177, %178, %179, %180, %181 in 0 : vector<8x384xf32>, vector<8x384xf32>, vector<8x384xf32>, vector<8x384xf32>, vector<8x384xf32>, vector<8x384xf32>, vector<8x384xf32>, vector<8x384xf32>, vector<8x384xf32> -> vector<72x384xf32>
    %184 = tpu.concatenate %182, %183 in 0 : vector<128x384xf32>, vector<72x384xf32> -> vector<200x384xf32>
    %c0_254 = arith.constant 0 : index
    %c0_255 = arith.constant 0 : index
    %185 = vector.load %arg11[%c0_254, %c0_255] : memref<8x200xf32, #tpu.memory_space<vmem>>, vector<8x200xf32>
    %cst_256 = arith.constant dense<0.000000e+00> : vector<8x384xf32>
    %186 = tpu.matmul %185, %184, %cst_256 {dimension_numbers = #tpu.dot_dimension_numbers<[1], [0], [0], [1], [0, 0, 1, 1], [], []>} : vector<8x200xf32>, vector<200x384xf32>, vector<8x384xf32> -> vector<8x384xf32>
    %cst_257 = arith.constant 0.000000e+00 : f32
    %187 = vector.broadcast %cst_257 : f32 to vector<8x384xf32>
    %188 = arith.maximumf %186, %187 : vector<8x384xf32>
    %189 = vector.broadcast %6 : vector<1x384xf32> to vector<8x384xf32>
    %190 = arith.mulf %188, %189 : vector<8x384xf32>
    %191 = arith.addf %118, %190 : vector<8x384xf32>
    %c0_258 = arith.constant 0 : index
    %c4_259 = arith.constant 4 : index
    %c0_260 = arith.constant 0 : index
    %c0_261 = arith.constant 0 : index
    %192 = vector.load %arg1[%c0_258, %c4_259, %c0_260, %c0_261] : memref<1x5x4x384xf32, #tpu.memory_space<vmem>>, vector<1x1x4x384xf32>
    %193 = vector.shape_cast %192 : vector<1x1x4x384xf32> to vector<4x384xf32>
    %c0_262 = arith.constant 0 : index
    %c48_263 = arith.constant 48 : index
    %194 = vector.load %arg16[%c0_262, %c48_263] : memref<8x484xf32, #tpu.memory_space<vmem>>, vector<4x384xf32>
    tpu.vector_store %arg16[%c0_262, %c48_263], %193 {strides = array<i32>} : memref<8x484xf32, #tpu.memory_space<vmem>>, vector<4x384xf32>,
    %c0_264 = arith.constant 0 : index
    %c0_265 = arith.constant 0 : index
    %195 = vector.load %arg16[%c0_264, %c0_265] : memref<8x484xf32, #tpu.memory_space<vmem>>, vector<4x384xf32>
    %c0_266 = arith.constant 0 : index
    %c1_267 = arith.constant 1 : index
    %196 = vector.load %arg16[%c0_266, %c1_267] : memref<8x484xf32, #tpu.memory_space<vmem>>, vector<4x384xf32>
    %c0_268 = arith.constant 0 : index
    %c2_269 = arith.constant 2 : index
    %197 = vector.load %arg16[%c0_268, %c2_269] : memref<8x484xf32, #tpu.memory_space<vmem>>, vector<4x384xf32>
    %c0_270 = arith.constant 0 : index
    %c3_271 = arith.constant 3 : index
    %198 = vector.load %arg16[%c0_270, %c3_271] : memref<8x484xf32, #tpu.memory_space<vmem>>, vector<4x384xf32>
    %c0_272 = arith.constant 0 : index
    %c4_273 = arith.constant 4 : index
    %199 = vector.load %arg16[%c0_272, %c4_273] : memref<8x484xf32, #tpu.memory_space<vmem>>, vector<4x384xf32>
    %c0_274 = arith.constant 0 : index
    %c24_275 = arith.constant 24 : index
    %200 = vector.load %arg16[%c0_274, %c24_275] : memref<8x484xf32, #tpu.memory_space<vmem>>, vector<4x384xf32>
    %c0_276 = arith.constant 0 : index
    %c25_277 = arith.constant 25 : index
    %201 = vector.load %arg16[%c0_276, %c25_277] : memref<8x484xf32, #tpu.memory_space<vmem>>, vector<4x384xf32>
    %c0_278 = arith.constant 0 : index
    %c26_279 = arith.constant 26 : index
    %202 = vector.load %arg16[%c0_278, %c26_279] : memref<8x484xf32, #tpu.memory_space<vmem>>, vector<4x384xf32>
    %c0_280 = arith.constant 0 : index
    %c27_281 = arith.constant 27 : index
    %203 = vector.load %arg16[%c0_280, %c27_281] : memref<8x484xf32, #tpu.memory_space<vmem>>, vector<4x384xf32>
    %c0_282 = arith.constant 0 : index
    %c28_283 = arith.constant 28 : index
    %204 = vector.load %arg16[%c0_282, %c28_283] : memref<8x484xf32, #tpu.memory_space<vmem>>, vector<4x384xf32>
    %c0_284 = arith.constant 0 : index
    %c48_285 = arith.constant 48 : index
    %205 = vector.load %arg16[%c0_284, %c48_285] : memref<8x484xf32, #tpu.memory_space<vmem>>, vector<4x384xf32>
    %c0_286 = arith.constant 0 : index
    %c49_287 = arith.constant 49 : index
    %206 = vector.load %arg16[%c0_286, %c49_287] : memref<8x484xf32, #tpu.memory_space<vmem>>, vector<4x384xf32>
    %c0_288 = arith.constant 0 : index
    %c50_289 = arith.constant 50 : index
    %207 = vector.load %arg16[%c0_288, %c50_289] : memref<8x484xf32, #tpu.memory_space<vmem>>, vector<4x384xf32>
    %c0_290 = arith.constant 0 : index
    %c51_291 = arith.constant 51 : index
    %208 = vector.load %arg16[%c0_290, %c51_291] : memref<8x484xf32, #tpu.memory_space<vmem>>, vector<4x384xf32>
    %c0_292 = arith.constant 0 : index
    %c52_293 = arith.constant 52 : index
    %209 = vector.load %arg16[%c0_292, %c52_293] : memref<8x484xf32, #tpu.memory_space<vmem>>, vector<4x384xf32>
    %c0_294 = arith.constant 0 : index
    %c72_295 = arith.constant 72 : index
    %210 = vector.load %arg16[%c0_294, %c72_295] : memref<8x484xf32, #tpu.memory_space<vmem>>, vector<4x384xf32>
    %c0_296 = arith.constant 0 : index
    %c73_297 = arith.constant 73 : index
    %211 = vector.load %arg16[%c0_296, %c73_297] : memref<8x484xf32, #tpu.memory_space<vmem>>, vector<4x384xf32>
    %c0_298 = arith.constant 0 : index
    %c74_299 = arith.constant 74 : index
    %212 = vector.load %arg16[%c0_298, %c74_299] : memref<8x484xf32, #tpu.memory_space<vmem>>, vector<4x384xf32>
    %c0_300 = arith.constant 0 : index
    %c75_301 = arith.constant 75 : index
    %213 = vector.load %arg16[%c0_300, %c75_301] : memref<8x484xf32, #tpu.memory_space<vmem>>, vector<4x384xf32>
    %c0_302 = arith.constant 0 : index
    %c76_303 = arith.constant 76 : index
    %214 = vector.load %arg16[%c0_302, %c76_303] : memref<8x484xf32, #tpu.memory_space<vmem>>, vector<4x384xf32>
    %c0_304 = arith.constant 0 : index
    %c96_305 = arith.constant 96 : index
    %215 = vector.load %arg16[%c0_304, %c96_305] : memref<8x484xf32, #tpu.memory_space<vmem>>, vector<4x384xf32>
    %c0_306 = arith.constant 0 : index
    %c97_307 = arith.constant 97 : index
    %216 = vector.load %arg16[%c0_306, %c97_307] : memref<8x484xf32, #tpu.memory_space<vmem>>, vector<4x384xf32>
    %c0_308 = arith.constant 0 : index
    %c98_309 = arith.constant 98 : index
    %217 = vector.load %arg16[%c0_308, %c98_309] : memref<8x484xf32, #tpu.memory_space<vmem>>, vector<4x384xf32>
    %c0_310 = arith.constant 0 : index
    %c99_311 = arith.constant 99 : index
    %218 = vector.load %arg16[%c0_310, %c99_311] : memref<8x484xf32, #tpu.memory_space<vmem>>, vector<4x384xf32>
    %c0_312 = arith.constant 0 : index
    %c100_313 = arith.constant 100 : index
    %219 = vector.load %arg16[%c0_312, %c100_313] : memref<8x484xf32, #tpu.memory_space<vmem>>, vector<4x384xf32>
    %220 = tpu.concatenate %195, %196, %197, %198, %199, %200, %201, %202, %203, %204, %205, %206, %207, %208, %209, %210 in 0 : vector<4x384xf32>, vector<4x384xf32>, vector<4x384xf32>, vector<4x384xf32>, vector<4x384xf32>, vector<4x384xf32>, vector<4x384xf32>, vector<4x384xf32>, vector<4x384xf32>, vector<4x384xf32>, vector<4x384xf32>, vector<4x384xf32>, vector<4x384xf32>, vector<4x384xf32>, vector<4x384xf32>, vector<4x384xf32> -> vector<64x384xf32>
    %221 = tpu.concatenate %211, %212, %213, %214, %215, %216, %217, %218, %219 in 0 : vector<4x384xf32>, vector<4x384xf32>, vector<4x384xf32>, vector<4x384xf32>, vector<4x384xf32>, vector<4x384xf32>, vector<4x384xf32>, vector<4x384xf32>, vector<4x384xf32> -> vector<36x384xf32>
    %222 = tpu.concatenate %220, %221 in 0 : vector<64x384xf32>, vector<36x384xf32> -> vector<100x384xf32>
    %c0_314 = arith.constant 0 : index
    %c0_315 = arith.constant 0 : index
    %223 = vector.load %arg7[%c0_314, %c0_315] : memref<8x100xf32, #tpu.memory_space<vmem>>, vector<8x100xf32>
    %cst_316 = arith.constant dense<0.000000e+00> : vector<8x384xf32>
    %224 = tpu.matmul %223, %222, %cst_316 {dimension_numbers = #tpu.dot_dimension_numbers<[1], [0], [0], [1], [0, 0, 1, 1], [], []>} : vector<8x100xf32>, vector<100x384xf32>, vector<8x384xf32> -> vector<8x384xf32>
    %cst_317 = arith.constant 0.000000e+00 : f32
    %225 = vector.broadcast %cst_317 : f32 to vector<8x384xf32>
    %226 = arith.maximumf %224, %225 : vector<8x384xf32>
    %227 = vector.broadcast %6 : vector<1x384xf32> to vector<8x384xf32>
    %228 = arith.mulf %226, %227 : vector<8x384xf32>
    %c0_318 = arith.constant 0 : index
    %c50_319 = arith.constant 50 : index
    %229 = vector.load %arg17[%c0_318, %c50_319] : memref<8x484xf32, #tpu.memory_space<vmem>>, vector<8x384xf32>
    tpu.vector_store %arg17[%c0_318, %c50_319], %228 {strides = array<i32>} : memref<8x484xf32, #tpu.memory_space<vmem>>, vector<8x384xf32>,
    %c0_320 = arith.constant 0 : index
    %c0_321 = arith.constant 0 : index
    %230 = vector.load %arg17[%c0_320, %c0_321] : memref<8x484xf32, #tpu.memory_space<vmem>>, vector<8x384xf32>
    %c0_322 = arith.constant 0 : index
    %c1_323 = arith.constant 1 : index
    %231 = vector.load %arg17[%c0_322, %c1_323] : memref<8x484xf32, #tpu.memory_space<vmem>>, vector<8x384xf32>
    %c0_324 = arith.constant 0 : index
    %c2_325 = arith.constant 2 : index
    %232 = vector.load %arg17[%c0_324, %c2_325] : memref<8x484xf32, #tpu.memory_space<vmem>>, vector<8x384xf32>
    %c0_326 = arith.constant 0 : index
    %c3_327 = arith.constant 3 : index
    %233 = vector.load %arg17[%c0_326, %c3_327] : memref<8x484xf32, #tpu.memory_space<vmem>>, vector<8x384xf32>
    %c0_328 = arith.constant 0 : index
    %c4_329 = arith.constant 4 : index
    %234 = vector.load %arg17[%c0_328, %c4_329] : memref<8x484xf32, #tpu.memory_space<vmem>>, vector<8x384xf32>
    %c0_330 = arith.constant 0 : index
    %c24_331 = arith.constant 24 : index
    %235 = vector.load %arg17[%c0_330, %c24_331] : memref<8x484xf32, #tpu.memory_space<vmem>>, vector<8x384xf32>
    %c0_332 = arith.constant 0 : index
    %c25_333 = arith.constant 25 : index
    %236 = vector.load %arg17[%c0_332, %c25_333] : memref<8x484xf32, #tpu.memory_space<vmem>>, vector<8x384xf32>
    %c0_334 = arith.constant 0 : index
    %c26_335 = arith.constant 26 : index
    %237 = vector.load %arg17[%c0_334, %c26_335] : memref<8x484xf32, #tpu.memory_space<vmem>>, vector<8x384xf32>
    %c0_336 = arith.constant 0 : index
    %c27_337 = arith.constant 27 : index
    %238 = vector.load %arg17[%c0_336, %c27_337] : memref<8x484xf32, #tpu.memory_space<vmem>>, vector<8x384xf32>
    %c0_338 = arith.constant 0 : index
    %c28_339 = arith.constant 28 : index
    %239 = vector.load %arg17[%c0_338, %c28_339] : memref<8x484xf32, #tpu.memory_space<vmem>>, vector<8x384xf32>
    %c0_340 = arith.constant 0 : index
    %c48_341 = arith.constant 48 : index
    %240 = vector.load %arg17[%c0_340, %c48_341] : memref<8x484xf32, #tpu.memory_space<vmem>>, vector<8x384xf32>
    %c0_342 = arith.constant 0 : index
    %c49_343 = arith.constant 49 : index
    %241 = vector.load %arg17[%c0_342, %c49_343] : memref<8x484xf32, #tpu.memory_space<vmem>>, vector<8x384xf32>
    %c0_344 = arith.constant 0 : index
    %c50_345 = arith.constant 50 : index
    %242 = vector.load %arg17[%c0_344, %c50_345] : memref<8x484xf32, #tpu.memory_space<vmem>>, vector<8x384xf32>
    %c0_346 = arith.constant 0 : index
    %c51_347 = arith.constant 51 : index
    %243 = vector.load %arg17[%c0_346, %c51_347] : memref<8x484xf32, #tpu.memory_space<vmem>>, vector<8x384xf32>
    %c0_348 = arith.constant 0 : index
    %c52_349 = arith.constant 52 : index
    %244 = vector.load %arg17[%c0_348, %c52_349] : memref<8x484xf32, #tpu.memory_space<vmem>>, vector<8x384xf32>
    %c0_350 = arith.constant 0 : index
    %c72_351 = arith.constant 72 : index
    %245 = vector.load %arg17[%c0_350, %c72_351] : memref<8x484xf32, #tpu.memory_space<vmem>>, vector<8x384xf32>
    %c0_352 = arith.constant 0 : index
    %c73_353 = arith.constant 73 : index
    %246 = vector.load %arg17[%c0_352, %c73_353] : memref<8x484xf32, #tpu.memory_space<vmem>>, vector<8x384xf32>
    %c0_354 = arith.constant 0 : index
    %c74_355 = arith.constant 74 : index
    %247 = vector.load %arg17[%c0_354, %c74_355] : memref<8x484xf32, #tpu.memory_space<vmem>>, vector<8x384xf32>
    %c0_356 = arith.constant 0 : index
    %c75_357 = arith.constant 75 : index
    %248 = vector.load %arg17[%c0_356, %c75_357] : memref<8x484xf32, #tpu.memory_space<vmem>>, vector<8x384xf32>
    %c0_358 = arith.constant 0 : index
    %c76_359 = arith.constant 76 : index
    %249 = vector.load %arg17[%c0_358, %c76_359] : memref<8x484xf32, #tpu.memory_space<vmem>>, vector<8x384xf32>
    %c0_360 = arith.constant 0 : index
    %c96_361 = arith.constant 96 : index
    %250 = vector.load %arg17[%c0_360, %c96_361] : memref<8x484xf32, #tpu.memory_space<vmem>>, vector<8x384xf32>
    %c0_362 = arith.constant 0 : index
    %c97_363 = arith.constant 97 : index
    %251 = vector.load %arg17[%c0_362, %c97_363] : memref<8x484xf32, #tpu.memory_space<vmem>>, vector<8x384xf32>
    %c0_364 = arith.constant 0 : index
    %c98_365 = arith.constant 98 : index
    %252 = vector.load %arg17[%c0_364, %c98_365] : memref<8x484xf32, #tpu.memory_space<vmem>>, vector<8x384xf32>
    %c0_366 = arith.constant 0 : index
    %c99_367 = arith.constant 99 : index
    %253 = vector.load %arg17[%c0_366, %c99_367] : memref<8x484xf32, #tpu.memory_space<vmem>>, vector<8x384xf32>
    %c0_368 = arith.constant 0 : index
    %c100_369 = arith.constant 100 : index
    %254 = vector.load %arg17[%c0_368, %c100_369] : memref<8x484xf32, #tpu.memory_space<vmem>>, vector<8x384xf32>
    %255 = tpu.concatenate %230, %231, %232, %233, %234, %235, %236, %237, %238, %239, %240, %241, %242, %243, %244, %245 in 0 : vector<8x384xf32>, vector<8x384xf32>, vector<8x384xf32>, vector<8x384xf32>, vector<8x384xf32>, vector<8x384xf32>, vector<8x384xf32>, vector<8x384xf32>, vector<8x384xf32>, vector<8x384xf32>, vector<8x384xf32>, vector<8x384xf32>, vector<8x384xf32>, vector<8x384xf32>, vector<8x384xf32>, vector<8x384xf32> -> vector<128x384xf32>
    %256 = tpu.concatenate %246, %247, %248, %249, %250, %251, %252, %253, %254 in 0 : vector<8x384xf32>, vector<8x384xf32>, vector<8x384xf32>, vector<8x384xf32>, vector<8x384xf32>, vector<8x384xf32>, vector<8x384xf32>, vector<8x384xf32>, vector<8x384xf32> -> vector<72x384xf32>
    %257 = tpu.concatenate %255, %256 in 0 : vector<128x384xf32>, vector<72x384xf32> -> vector<200x384xf32>
    %c0_370 = arith.constant 0 : index
    %c0_371 = arith.constant 0 : index
    %258 = vector.load %arg12[%c0_370, %c0_371] : memref<8x200xf32, #tpu.memory_space<vmem>>, vector<8x200xf32>
    %cst_372 = arith.constant dense<0.000000e+00> : vector<8x384xf32>
    %259 = tpu.matmul %258, %257, %cst_372 {dimension_numbers = #tpu.dot_dimension_numbers<[1], [0], [0], [1], [0, 0, 1, 1], [], []>} : vector<8x200xf32>, vector<200x384xf32>, vector<8x384xf32> -> vector<8x384xf32>
    %cst_373 = arith.constant 0.000000e+00 : f32
    %260 = vector.broadcast %cst_373 : f32 to vector<8x384xf32>
    %261 = arith.maximumf %259, %260 : vector<8x384xf32>
    %262 = vector.broadcast %6 : vector<1x384xf32> to vector<8x384xf32>
    %263 = arith.mulf %261, %262 : vector<8x384xf32>
    %264 = arith.addf %191, %263 : vector<8x384xf32>
    %cst_374 = arith.constant 2.000000e-01 : f32
    %265 = vector.broadcast %cst_374 : f32 to vector<8x384xf32>
    %266 = arith.mulf %264, %265 : vector<8x384xf32>
    %c0_375 = arith.constant 0 : index
    %c50_376 = arith.constant 50 : index
    %267 = vector.load %arg18[%c0_375, %c50_376] : memref<8x484xf32, #tpu.memory_space<vmem>>, vector<8x384xf32>
    tpu.vector_store %arg18[%c0_375, %c50_376], %266 {strides = array<i32>} : memref<8x484xf32, #tpu.memory_space<vmem>>, vector<8x384xf32>,
    %c0_377 = arith.constant 0 : index
    %c25_378 = arith.constant 25 : index
    %268 = vector.load %arg18[%c0_377, %c25_378] : memref<8x484xf32, #tpu.memory_space<vmem>>, vector<8x384xf32>
    %c0_379 = arith.constant 0 : index
    %c26_380 = arith.constant 26 : index
    %269 = vector.load %arg18[%c0_379, %c26_380] : memref<8x484xf32, #tpu.memory_space<vmem>>, vector<8x384xf32>
    %c0_381 = arith.constant 0 : index
    %c27_382 = arith.constant 27 : index
    %270 = vector.load %arg18[%c0_381, %c27_382] : memref<8x484xf32, #tpu.memory_space<vmem>>, vector<8x384xf32>
    %c0_383 = arith.constant 0 : index
    %c49_384 = arith.constant 49 : index
    %271 = vector.load %arg18[%c0_383, %c49_384] : memref<8x484xf32, #tpu.memory_space<vmem>>, vector<8x384xf32>
    %c0_385 = arith.constant 0 : index
    %c50_386 = arith.constant 50 : index
    %272 = vector.load %arg18[%c0_385, %c50_386] : memref<8x484xf32, #tpu.memory_space<vmem>>, vector<8x384xf32>
    %c0_387 = arith.constant 0 : index
    %c51_388 = arith.constant 51 : index
    %273 = vector.load %arg18[%c0_387, %c51_388] : memref<8x484xf32, #tpu.memory_space<vmem>>, vector<8x384xf32>
    %c0_389 = arith.constant 0 : index
    %c73_390 = arith.constant 73 : index
    %274 = vector.load %arg18[%c0_389, %c73_390] : memref<8x484xf32, #tpu.memory_space<vmem>>, vector<8x384xf32>
    %c0_391 = arith.constant 0 : index
    %c74_392 = arith.constant 74 : index
    %275 = vector.load %arg18[%c0_391, %c74_392] : memref<8x484xf32, #tpu.memory_space<vmem>>, vector<8x384xf32>
    %c0_393 = arith.constant 0 : index
    %c75_394 = arith.constant 75 : index
    %276 = vector.load %arg18[%c0_393, %c75_394] : memref<8x484xf32, #tpu.memory_space<vmem>>, vector<8x384xf32>
    %277 = tpu.concatenate %268, %269, %270, %271, %272, %273, %274, %275, %276 in 0 : vector<8x384xf32>, vector<8x384xf32>, vector<8x384xf32>, vector<8x384xf32>, vector<8x384xf32>, vector<8x384xf32>, vector<8x384xf32>, vector<8x384xf32>, vector<8x384xf32> -> vector<72x384xf32>
    %c0_395 = arith.constant 0 : index
    %c0_396 = arith.constant 0 : index
    %278 = vector.load %arg13[%c0_395, %c0_396] : memref<4x72xf32, #tpu.memory_space<vmem>>, vector<4x72xf32>
    %cst_397 = arith.constant dense<0.000000e+00> : vector<4x384xf32>
    %279 = tpu.matmul %278, %277, %cst_397 {dimension_numbers = #tpu.dot_dimension_numbers<[1], [0], [0], [1], [0, 0, 1, 1], [], []>} : vector<4x72xf32>, vector<72x384xf32>, vector<4x384xf32> -> vector<4x384xf32>
    %c0_398 = arith.constant 0 : index
    %c0_399 = arith.constant 0 : index
    %280 = vector.load %arg14[%c0_398, %c0_399] : memref<4x1xf32, #tpu.memory_space<vmem>>, vector<4x1xf32>
    %281 = vector.broadcast %280 : vector<4x1xf32> to vector<4x384xf32>
    %282 = arith.addf %279, %281 : vector<4x384xf32>
    %c0_400 = arith.constant 0 : index
    %c0_401 = arith.constant 0 : index
    %c0_402 = arith.constant 0 : index
    %283 = vector.load %arg15[%c0_400, %c0_401, %c0_402] : memref<1x4x384xf32, #tpu.memory_space<vmem>>, vector<1x4x384xf32>
    %284 = vector.shape_cast %283 : vector<1x4x384xf32> to vector<4x384xf32>
    %285 = vector.shape_cast %282 : vector<4x384xf32> to vector<1x4x384xf32>
    tpu.vector_store %arg15[%c0_400, %c0_401, %c0_402], %285 {strides = array<i32>} : memref<1x4x384xf32, #tpu.memory_space<vmem>>, vector<1x4x384xf32>,
    return
  }
  func.func @transform_0(%arg0: i32) -> (i32, i32, i32, i32) {
    %c0_i32 = arith.constant 0 : i32
    %c0_i32_0 = arith.constant 0 : i32
    %c0_i32_1 = arith.constant 0 : i32
    %c0_i32_2 = arith.constant 0 : i32
    return %arg0, %c0_i32, %c0_i32_0, %c0_i32_1 : i32, i32, i32, i32
  }
  func.func @transform_1(%arg0: i32) -> (i32, i32) {
    %c0_i32 = arith.constant 0 : i32
    %c0_i32_0 = arith.constant 0 : i32
    %c0_i32_1 = arith.constant 0 : i32
    return %c0_i32, %c0_i32_0 : i32, i32
  }
  func.func @transform_2(%arg0: i32) -> (i32, i32) {
    %c0_i32 = arith.constant 0 : i32
    %c0_i32_0 = arith.constant 0 : i32
    %c0_i32_1 = arith.constant 0 : i32
    return %c0_i32, %c0_i32_0 : i32, i32
  }
  func.func @transform_3(%arg0: i32) -> (i32, i32) {
    %c0_i32 = arith.constant 0 : i32
    %c0_i32_0 = arith.constant 0 : i32
    %c0_i32_1 = arith.constant 0 : i32
    return %c0_i32, %c0_i32_0 : i32, i32
  }
  func.func @transform_4(%arg0: i32) -> (i32, i32) {
    %c0_i32 = arith.constant 0 : i32
    %c0_i32_0 = arith.constant 0 : i32
    %c0_i32_1 = arith.constant 0 : i32
    return %c0_i32, %c0_i32_0 : i32, i32
  }
  func.func @transform_5(%arg0: i32) -> (i32, i32) {
    %c0_i32 = arith.constant 0 : i32
    %c0_i32_0 = arith.constant 0 : i32
    %c0_i32_1 = arith.constant 0 : i32
    return %c0_i32, %c0_i32_0 : i32, i32
  }
  func.func @transform_6(%arg0: i32) -> (i32, i32) {
    %c0_i32 = arith.constant 0 : i32
    %c0_i32_0 = arith.constant 0 : i32
    %c0_i32_1 = arith.constant 0 : i32
    return %c0_i32, %c0_i32_0 : i32, i32
  }
  func.func @transform_7(%arg0: i32) -> (i32, i32) {
    %c0_i32 = arith.constant 0 : i32
    %c0_i32_0 = arith.constant 0 : i32
    %c0_i32_1 = arith.constant 0 : i32
    return %c0_i32, %c0_i32_0 : i32, i32
  }
  func.func @transform_8(%arg0: i32) -> (i32, i32) {
    %c0_i32 = arith.constant 0 : i32
    %c0_i32_0 = arith.constant 0 : i32
    %c0_i32_1 = arith.constant 0 : i32
    return %c0_i32, %c0_i32_0 : i32, i32
  }
  func.func @transform_9(%arg0: i32) -> (i32, i32) {
    %c0_i32 = arith.constant 0 : i32
    %c0_i32_0 = arith.constant 0 : i32
    %c0_i32_1 = arith.constant 0 : i32
    return %c0_i32, %c0_i32_0 : i32, i32
  }
  func.func @transform_10(%arg0: i32) -> (i32, i32) {
    %c0_i32 = arith.constant 0 : i32
    %c0_i32_0 = arith.constant 0 : i32
    %c0_i32_1 = arith.constant 0 : i32
    return %c0_i32, %c0_i32_0 : i32, i32
  }
  func.func @transform_11(%arg0: i32) -> (i32, i32) {
    %c0_i32 = arith.constant 0 : i32
    %c0_i32_0 = arith.constant 0 : i32
    %c0_i32_1 = arith.constant 0 : i32
    return %c0_i32, %c0_i32_0 : i32, i32
  }
  func.func @transform_12(%arg0: i32) -> (i32, i32) {
    %c0_i32 = arith.constant 0 : i32
    %c0_i32_0 = arith.constant 0 : i32
    %c0_i32_1 = arith.constant 0 : i32
    return %c0_i32, %c0_i32_0 : i32, i32
  }
  func.func @transform_13(%arg0: i32) -> (i32, i32) {
    %c0_i32 = arith.constant 0 : i32
    %c0_i32_0 = arith.constant 0 : i32
    %c0_i32_1 = arith.constant 0 : i32
    return %c0_i32, %c0_i32_0 : i32, i32
  }
  func.func @transform_14(%arg0: i32) -> (i32, i32, i32) {
    %c0_i32 = arith.constant 0 : i32
    %c0_i32_0 = arith.constant 0 : i32
    %c0_i32_1 = arith.constant 0 : i32
    return %arg0, %c0_i32, %c0_i32_0 : i32, i32, i32
  }
}

</mosaic_0001>

<llo_original>
// kernel: forward.1
$region0: #{forward.1}
  #allocation0 [shape = 'u32[]', space=smem, size = 0x4, offset = 0x4, fixed_abs, tag = 'smem constant byte address 0x4 - core index']
  #allocation1 [shape = 'u32[144,128]{1,0:T(1,128)}', space=vmem, size = 0x12000, scoped, tag = 'internal scratch']
  #allocation2 [shape = 'f32[8,484]{1,0:T(8,128)}', space=vmem, size = 0x4000, scoped, tag = 'scratch operand']
  #allocation3 [shape = 'f32[8,484]{1,0:T(8,128)}', space=vmem, size = 0x4000, scoped, tag = 'scratch operand']
  #allocation4 [shape = 'f32[8,484]{1,0:T(8,128)}', space=vmem, size = 0x4000, scoped, tag = 'scratch operand']
  %s0 = inlined_call_operand.vmem [shape: f32[2,5,4,384], index: 0, kind: input, shape index: {}]
  %s1 = inlined_call_operand.vmem [shape: f32[1,384], index: 1, kind: input, shape index: {}]
  %s2 = inlined_call_operand.vmem [shape: f32[8,36], index: 2, kind: input, shape index: {}]
  %s3 = inlined_call_operand.vmem [shape: f32[8,36], index: 3, kind: input, shape index: {}]
  %s4 = inlined_call_operand.vmem [shape: f32[8,36], index: 4, kind: input, shape index: {}]
  %s5 = inlined_call_operand.vmem [shape: f32[8,100], index: 5, kind: input, shape index: {}]
  %s6 = inlined_call_operand.vmem [shape: f32[8,100], index: 6, kind: input, shape index: {}]
  %s7 = inlined_call_operand.vmem [shape: f32[8,72], index: 7, kind: input, shape index: {}]
  %s8 = inlined_call_operand.vmem [shape: f32[8,72], index: 8, kind: input, shape index: {}]
  %s9 = inlined_call_operand.vmem [shape: f32[8,72], index: 9, kind: input, shape index: {}]
  %s10 = inlined_call_operand.vmem [shape: f32[8,200], index: 10, kind: input, shape index: {}]
  %s11 = inlined_call_operand.vmem [shape: f32[8,200], index: 11, kind: input, shape index: {}]
  %s12 = inlined_call_operand.vmem [shape: f32[4,72], index: 12, kind: input, shape index: {}]
  %s13 = inlined_call_operand.vmem [shape: f32[4,1], index: 13, kind: input, shape index: {}]
  %s14 = inlined_call_operand.vmem [shape: f32[2,4,384], index: 14, kind: output, shape index: {}]
  %s15 = sld [smem:[#allocation0]]
  $region89: #{forward.1} parent=0
    _
  %s17 = ssub.s32 1, %s15
  %s18 = scalar_select 0, %s17, %s15
  loop: start=0, step=1, limit=4
  $region2: #{forward.1} parent=0 // loop_pre_header
    _
  $region3: #{forward.1} parent=0 // loop_header
    %s20 = sphi 0, %s24
    %p21 = scmp.ge.s32.totalorder %s20, 4
    %s30 = sphi 0, %s32
    %s33 = sphi 0, %s30
    %s34 = sphi 0, %s33
    %s50 = sphi 0, %s34
    %s54 = sphi 0, %s54
    %s56 = sphi 0, %s54
    %s57 = sphi 0, %s56
    %s71 = sphi 0, %s57
    %s75 = sphi 0, %s75
    %s77 = sphi 0, %s75
    %s78 = sphi 0, %s77
    %s92 = sphi 0, %s78
    %s96 = sphi 0, %s96
    %s98 = sphi 0, %s96
    %s99 = sphi 0, %s98
    %s113 = sphi 0, %s99
    %s117 = sphi 0, %s117
    %s119 = sphi 0, %s117
    %s120 = sphi 0, %s119
    %s134 = sphi 0, %s120
    %s138 = sphi 0, %s138
    %s140 = sphi 0, %s138
    %s141 = sphi 0, %s140
    %s155 = sphi 0, %s141
    %s159 = sphi 0, %s159
    %s161 = sphi 0, %s159
    %s162 = sphi 0, %s161
    %s176 = sphi 0, %s162
    %s180 = sphi 0, %s180
    %s182 = sphi 0, %s180
    %s183 = sphi 0, %s182
    %s197 = sphi 0, %s183
    %s201 = sphi 0, %s201
    %s203 = sphi 0, %s201
    %s204 = sphi 0, %s203
    %s218 = sphi 0, %s204
    %s222 = sphi 0, %s222
    %s224 = sphi 0, %s222
    %s225 = sphi 0, %s224
    %s239 = sphi 0, %s225
    %s243 = sphi 0, %s243
    %s245 = sphi 0, %s243
    %s246 = sphi 0, %s245
    %s260 = sphi 0, %s246
    %s264 = sphi 0, %s264
    %s266 = sphi 0, %s264
    %s267 = sphi 0, %s266
    %s281 = sphi 0, %s267
    %s285 = sphi 0, %s285
    %s287 = sphi 0, %s285
    %s288 = sphi 0, %s287
    %s302 = sphi 0, %s288
    %s306 = sphi 0, %s306
    %s308 = sphi 0, %s306
    %s309 = sphi 0, %s308
    %s323 = sphi 0, %s309
    %s329 = sphi 0, %s331
    %s332 = sphi 0, %s329
    %s333 = sphi 0, %s332
    %s349 = sphi 0, %s333
  $region4: #{forward.1} parent=0 // loop_header_branch
    %23 = sbr.rel (%p21) target = $region8
  $region5: #{forward.1} parent=0 // loop_body
    %s25 = ssub.s32 %s20, 1
    %s26 = ssub.s32 %s20, 2
    %s27 = sadd.s32 %s20, 1
    %s28 = ssub.s32 %s20, %s27
    %p29 = scmp.eq.s32.totalorder %s28, 0
    %s31 = sadd.s32 %s30, 1
    %s32 = scalar_select %p29, %s30, %s31
    %p35 = pneg %p29
    %p36 = scmp.eq.s32.totalorder %s20, 1
    %p37 = por %p35, %p36
    %p38 = scmp.ne.s32.totalorder %s30, %s33
    %p39 = scmp.eq.s32.totalorder %s20, 0
    %p40 = por %p38, %p39
    %p41 = scmp.ne.s32.totalorder %s30, %s33
    %p42 = scmp.eq.s32.totalorder %s25, 1
    %p43 = por %p41, %p42
    %p44 = scmp.ne.s32.totalorder %s33, %s34
    %p45 = scmp.eq.s32.totalorder %s25, 0
    %p46 = por %p44, %p45
    %p47 = scmp.ne.s32.totalorder %s33, %s34
    %p48 = scmp.eq.s32.totalorder %s26, 1
    %p49 = por %p47, %p48
    %p51 = scmp.ne.s32.totalorder %s34, %s50
    %p52 = scmp.eq.s32.totalorder %s26, 0
    %p53 = por %p51, %p52
    %s55 = sadd.s32 %s54, 1
    %p58 = scmp.eq.s32.totalorder %s20, 1
    %p59 = scmp.ne.s32.totalorder %s54, %s56
    %p60 = scmp.eq.s32.totalorder %s20, 0
    %p61 = por %p59, %p60
    %p62 = scmp.ne.s32.totalorder %s54, %s56
    %p63 = scmp.eq.s32.totalorder %s25, 1
    %p64 = por %p62, %p63
    %p65 = scmp.ne.s32.totalorder %s56, %s57
    %p66 = scmp.eq.s32.totalorder %s25, 0
    %p67 = por %p65, %p66
    %p68 = scmp.ne.s32.totalorder %s56, %s57
    %p69 = scmp.eq.s32.totalorder %s26, 1
    %p70 = por %p68, %p69
    %p72 = scmp.ne.s32.totalorder %s57, %s71
    %p73 = scmp.eq.s32.totalorder %s26, 0
    %p74 = por %p72, %p73
    %s76 = sadd.s32 %s75, 1
    %p79 = scmp.eq.s32.totalorder %s20, 1
    %p80 = scmp.ne.s32.totalorder %s75, %s77
    %p81 = scmp.eq.s32.totalorder %s20, 0
    %p82 = por %p80, %p81
    %p83 = scmp.ne.s32.totalorder %s75, %s77
    %p84 = scmp.eq.s32.totalorder %s25, 1
    %p85 = por %p83, %p84
    %p86 = scmp.ne.s32.totalorder %s77, %s78
    %p87 = scmp.eq.s32.totalorder %s25, 0
    %p88 = por %p86, %p87
    %p89 = scmp.ne.s32.totalorder %s77, %s78
    %p90 = scmp.eq.s32.totalorder %s26, 1
    %p91 = por %p89, %p90
    %p93 = scmp.ne.s32.totalorder %s78, %s92
    %p94 = scmp.eq.s32.totalorder %s26, 0
    %p95 = por %p93, %p94
    %s97 = sadd.s32 %s96, 1
    %p100 = scmp.eq.s32.totalorder %s20, 1
    %p101 = scmp.ne.s32.totalorder %s96, %s98
    %p102 = scmp.eq.s32.totalorder %s20, 0
    %p103 = por %p101, %p102
    %p104 = scmp.ne.s32.totalorder %s96, %s98
    %p105 = scmp.eq.s32.totalorder %s25, 1
    %p106 = por %p104, %p105
    %p107 = scmp.ne.s32.totalorder %s98, %s99
    %p108 = scmp.eq.s32.totalorder %s25, 0
    %p109 = por %p107, %p108
    %p110 = scmp.ne.s32.totalorder %s98, %s99
    %p111 = scmp.eq.s32.totalorder %s26, 1
    %p112 = por %p110, %p111
    %p114 = scmp.ne.s32.totalorder %s99, %s113
    %p115 = scmp.eq.s32.totalorder %s26, 0
    %p116 = por %p114, %p115
    %s118 = sadd.s32 %s117, 1
    %p121 = scmp.eq.s32.totalorder %s20, 1
    %p122 = scmp.ne.s32.totalorder %s117, %s119
    %p123 = scmp.eq.s32.totalorder %s20, 0
    %p124 = por %p122, %p123
    %p125 = scmp.ne.s32.totalorder %s117, %s119
    %p126 = scmp.eq.s32.totalorder %s25, 1
    %p127 = por %p125, %p126
    %p128 = scmp.ne.s32.totalorder %s119, %s120
    %p129 = scmp.eq.s32.totalorder %s25, 0
    %p130 = por %p128, %p129
    %p131 = scmp.ne.s32.totalorder %s119, %s120
    %p132 = scmp.eq.s32.totalorder %s26, 1
    %p133 = por %p131, %p132
    %p135 = scmp.ne.s32.totalorder %s120, %s134
    %p136 = scmp.eq.s32.totalorder %s26, 0
    %p137 = por %p135, %p136
    %s139 = sadd.s32 %s138, 1
    %p142 = scmp.eq.s32.totalorder %s20, 1
    %p143 = scmp.ne.s32.totalorder %s138, %s140
    %p144 = scmp.eq.s32.totalorder %s20, 0
    %p145 = por %p143, %p144
    %p146 = scmp.ne.s32.totalorder %s138, %s140
    %p147 = scmp.eq.s32.totalorder %s25, 1
    %p148 = por %p146, %p147
    %p149 = scmp.ne.s32.totalorder %s140, %s141
    %p150 = scmp.eq.s32.totalorder %s25, 0
    %p151 = por %p149, %p150
    %p152 = scmp.ne.s32.totalorder %s140, %s141
    %p153 = scmp.eq.s32.totalorder %s26, 1
    %p154 = por %p152, %p153
    %p156 = scmp.ne.s32.totalorder %s141, %s155
    %p157 = scmp.eq.s32.totalorder %s26, 0
    %p158 = por %p156, %p157
    %s160 = sadd.s32 %s159, 1
    %p163 = scmp.eq.s32.totalorder %s20, 1
    %p164 = scmp.ne.s32.totalorder %s159, %s161
    %p165 = scmp.eq.s32.totalorder %s20, 0
    %p166 = por %p164, %p165
    %p167 = scmp.ne.s32.totalorder %s159, %s161
    %p168 = scmp.eq.s32.totalorder %s25, 1
    %p169 = por %p167, %p168
    %p170 = scmp.ne.s32.totalorder %s161, %s162
    %p171 = scmp.eq.s32.totalorder %s25, 0
    %p172 = por %p170, %p171
    %p173 = scmp.ne.s32.totalorder %s161, %s162
    %p174 = scmp.eq.s32.totalorder %s26, 1
    %p175 = por %p173, %p174
    %p177 = scmp.ne.s32.totalorder %s162, %s176
    %p178 = scmp.eq.s32.totalorder %s26, 0
    %p179 = por %p177, %p178
    %s181 = sadd.s32 %s180, 1
    %p184 = scmp.eq.s32.totalorder %s20, 1
    %p185 = scmp.ne.s32.totalorder %s180, %s182
    %p186 = scmp.eq.s32.totalorder %s20, 0
    %p187 = por %p185, %p186
    %p188 = scmp.ne.s32.totalorder %s180, %s182
    %p189 = scmp.eq.s32.totalorder %s25, 1
    %p190 = por %p188, %p189
    %p191 = scmp.ne.s32.totalorder %s182, %s183
    %p192 = scmp.eq.s32.totalorder %s25, 0
    %p193 = por %p191, %p192
    %p194 = scmp.ne.s32.totalorder %s182, %s183
    %p195 = scmp.eq.s32.totalorder %s26, 1
    %p196 = por %p194, %p195
    %p198 = scmp.ne.s32.totalorder %s183, %s197
    %p199 = scmp.eq.s32.totalorder %s26, 0
    %p200 = por %p198, %p199
    %s202 = sadd.s32 %s201, 1
    %p205 = scmp.eq.s32.totalorder %s20, 1
    %p206 = scmp.ne.s32.totalorder %s201, %s203
    %p207 = scmp.eq.s32.totalorder %s20, 0
    %p208 = por %p206, %p207
    %p209 = scmp.ne.s32.totalorder %s201, %s203
    %p210 = scmp.eq.s32.totalorder %s25, 1
    %p211 = por %p209, %p210
    %p212 = scmp.ne.s32.totalorder %s203, %s204
    %p213 = scmp.eq.s32.totalorder %s25, 0
    %p214 = por %p212, %p213
    %p215 = scmp.ne.s32.totalorder %s203, %s204
    %p216 = scmp.eq.s32.totalorder %s26, 1
    %p217 = por %p215, %p216
    %p219 = scmp.ne.s32.totalorder %s204, %s218
    %p220 = scmp.eq.s32.totalorder %s26, 0
    %p221 = por %p219, %p220
    %s223 = sadd.s32 %s222, 1
    %p226 = scmp.eq.s32.totalorder %s20, 1
    %p227 = scmp.ne.s32.totalorder %s222, %s224
    %p228 = scmp.eq.s32.totalorder %s20, 0
    %p229 = por %p227, %p228
    %p230 = scmp.ne.s32.totalorder %s222, %s224
    %p231 = scmp.eq.s32.totalorder %s25, 1
    %p232 = por %p230, %p231
    %p233 = scmp.ne.s32.totalorder %s224, %s225
    %p234 = scmp.eq.s32.totalorder %s25, 0
    %p235 = por %p233, %p234
    %p236 = scmp.ne.s32.totalorder %s224, %s225
    %p237 = scmp.eq.s32.totalorder %s26, 1
    %p238 = por %p236, %p237
    %p240 = scmp.ne.s32.totalorder %s225, %s239
    %p241 = scmp.eq.s32.totalorder %s26, 0
    %p242 = por %p240, %p241
    %s244 = sadd.s32 %s243, 1
    %p247 = scmp.eq.s32.totalorder %s20, 1
    %p248 = scmp.ne.s32.totalorder %s243, %s245
    %p249 = scmp.eq.s32.totalorder %s20, 0
    %p250 = por %p248, %p249
    %p251 = scmp.ne.s32.totalorder %s243, %s245
    %p252 = scmp.eq.s32.totalorder %s25, 1
    %p253 = por %p251, %p252
    %p254 = scmp.ne.s32.totalorder %s245, %s246
    %p255 = scmp.eq.s32.totalorder %s25, 0
    %p256 = por %p254, %p255
    %p257 = scmp.ne.s32.totalorder %s245, %s246
    %p258 = scmp.eq.s32.totalorder %s26, 1
    %p259 = por %p257, %p258
    %p261 = scmp.ne.s32.totalorder %s246, %s260
    %p262 = scmp.eq.s32.totalorder %s26, 0
    %p263 = por %p261, %p262
    %s265 = sadd.s32 %s264, 1
    %p268 = scmp.eq.s32.totalorder %s20, 1
    %p269 = scmp.ne.s32.totalorder %s264, %s266
    %p270 = scmp.eq.s32.totalorder %s20, 0
    %p271 = por %p269, %p270
    %p272 = scmp.ne.s32.totalorder %s264, %s266
    %p273 = scmp.eq.s32.totalorder %s25, 1
    %p274 = por %p272, %p273
    %p275 = scmp.ne.s32.totalorder %s266, %s267
    %p276 = scmp.eq.s32.totalorder %s25, 0
    %p277 = por %p275, %p276
    %p278 = scmp.ne.s32.totalorder %s266, %s267
    %p279 = scmp.eq.s32.totalorder %s26, 1
    %p280 = por %p278, %p279
    %p282 = scmp.ne.s32.totalorder %s267, %s281
    %p283 = scmp.eq.s32.totalorder %s26, 0
    %p284 = por %p282, %p283
    %s286 = sadd.s32 %s285, 1
    %p289 = scmp.eq.s32.totalorder %s20, 1
    %p290 = scmp.ne.s32.totalorder %s285, %s287
    %p291 = scmp.eq.s32.totalorder %s20, 0
    %p292 = por %p290, %p291
    %p293 = scmp.ne.s32.totalorder %s285, %s287
    %p294 = scmp.eq.s32.totalorder %s25, 1
    %p295 = por %p293, %p294
    %p296 = scmp.ne.s32.totalorder %s287, %s288
    %p297 = scmp.eq.s32.totalorder %s25, 0
    %p298 = por %p296, %p297
    %p299 = scmp.ne.s32.totalorder %s287, %s288
    %p300 = scmp.eq.s32.totalorder %s26, 1
    %p301 = por %p299, %p300
    %p303 = scmp.ne.s32.totalorder %s288, %s302
    %p304 = scmp.eq.s32.totalorder %s26, 0
    %p305 = por %p303, %p304
    %s307 = sadd.s32 %s306, 1
    %p310 = scmp.eq.s32.totalorder %s20, 1
    %p311 = scmp.ne.s32.totalorder %s306, %s308
    %p312 = scmp.eq.s32.totalorder %s20, 0
    %p313 = por %p311, %p312
    %p314 = scmp.ne.s32.totalorder %s306, %s308
    %p315 = scmp.eq.s32.totalorder %s25, 1
    %p316 = por %p314, %p315
    %p317 = scmp.ne.s32.totalorder %s308, %s309
    %p318 = scmp.eq.s32.totalorder %s25, 0
    %p319 = por %p317, %p318
    %p320 = scmp.ne.s32.totalorder %s308, %s309
    %p321 = scmp.eq.s32.totalorder %s26, 1
    %p322 = por %p320, %p321
    %p324 = scmp.ne.s32.totalorder %s309, %s323
    %p325 = scmp.eq.s32.totalorder %s26, 0
    %p326 = por %p324, %p325
    %s327 = ssub.s32 %s20, %s27
    %p328 = scmp.eq.s32.totalorder %s327, 0
    %s330 = sadd.s32 %s329, 1
    %s331 = scalar_select %p328, %s329, %s330
    %p334 = pneg %p328
    %p335 = scmp.eq.s32.totalorder %s20, 1
    %p336 = por %p334, %p335
    %p337 = scmp.ne.s32.totalorder %s329, %s332
    %p338 = scmp.eq.s32.totalorder %s20, 0
    %p339 = por %p337, %p338
    %p340 = scmp.ne.s32.totalorder %s329, %s332
    %p341 = scmp.eq.s32.totalorder %s25, 1
    %p342 = por %p340, %p341
    %p343 = scmp.ne.s32.totalorder %s332, %s333
    %p344 = scmp.eq.s32.totalorder %s25, 0
    %p345 = por %p343, %p344
    %p346 = scmp.ne.s32.totalorder %s332, %s333
    %p347 = scmp.eq.s32.totalorder %s26, 1
    %p348 = por %p346, %p347
    %p350 = scmp.ne.s32.totalorder %s333, %s349
    %p351 = scmp.eq.s32.totalorder %s26, 0
    %p352 = por %p350, %p351
    %p353 = scmp.le.s32.totalorder 1, %s20
    %p354 = scmp.lt.s32.totalorder %s20, 3
    %p355 = pnand %p353, %p354
    %p356 = pneg %p355
    // Predicated region
    $region9: #{forward.1} parent=5 // pred_check
      _
    $region10: #{forward.1} parent=5 // pred_check_branch
      %358 = sbr.rel (%p355) target = $region12
    $region11: #{forward.1} parent=5 // pred_region
      %s359 = ssub.s32 %s20, 1
      // Predicated region
      $region13: #{forward.1} parent=11 // pred_check
        %p360 = pneg %p67
      $region14: #{forward.1} parent=11 // pred_check_branch
        %362 = sbr.rel (%p360) target = $region16
      $region15: #{forward.1} parent=11 // pred_region
        _
      $region16: #{forward.1} parent=11 // pred_fallthru
        _
      // Predicated region
      $region17: #{forward.1} parent=11 // pred_check
        %p363 = pneg %p88
      $region18: #{forward.1} parent=11 // pred_check_branch
        %365 = sbr.rel (%p363) target = $region20
      $region19: #{forward.1} parent=11 // pred_region
        _
      $region20: #{forward.1} parent=11 // pred_fallthru
        _
      // Predicated region
      $region21: #{forward.1} parent=11 // pred_check
        %p366 = pneg %p109
      $region22: #{forward.1} parent=11 // pred_check_branch
        %368 = sbr.rel (%p366) target = $region24
      $region23: #{forward.1} parent=11 // pred_region
        _
      $region24: #{forward.1} parent=11 // pred_fallthru
        _
      // Predicated region
      $region25: #{forward.1} parent=11 // pred_check
        %p369 = pneg %p130
      $region26: #{forward.1} parent=11 // pred_check_branch
        %371 = sbr.rel (%p369) target = $region28
      $region27: #{forward.1} parent=11 // pred_region
        _
      $region28: #{forward.1} parent=11 // pred_fallthru
        _
      // Predicated region
      $region29: #{forward.1} parent=11 // pred_check
        %p372 = pneg %p151
      $region30: #{forward.1} parent=11 // pred_check_branch
        %374 = sbr.rel (%p372) target = $region32
      $region31: #{forward.1} parent=11 // pred_region
        _
      $region32: #{forward.1} parent=11 // pred_fallthru
        _
      // Predicated region
      $region33: #{forward.1} parent=11 // pred_check
        %p375 = pneg %p172
      $region34: #{forward.1} parent=11 // pred_check_branch
        %377 = sbr.rel (%p375) target = $region36
      $region35: #{forward.1} parent=11 // pred_region
        _
      $region36: #{forward.1} parent=11 // pred_fallthru
        _
      // Predicated region
      $region37: #{forward.1} parent=11 // pred_check
        %p378 = pneg %p193
      $region38: #{forward.1} parent=11 // pred_check_branch
        %380 = sbr.rel (%p378) target = $region40
      $region39: #{forward.1} parent=11 // pred_region
        _
      $region40: #{forward.1} parent=11 // pred_fallthru
        _
      // Predicated region
      $region41: #{forward.1} parent=11 // pred_check
        %p381 = pneg %p214
      $region42: #{forward.1} parent=11 // pred_check_branch
        %383 = sbr.rel (%p381) target = $region44
      $region43: #{forward.1} parent=11 // pred_region
        _
      $region44: #{forward.1} parent=11 // pred_fallthru
        _
      // Predicated region
      $region45: #{forward.1} parent=11 // pred_check
        %p384 = pneg %p235
      $region46: #{forward.1} parent=11 // pred_check_branch
        %386 = sbr.rel (%p384) target = $region48
      $region47: #{forward.1} parent=11 // pred_region
        _
      $region48: #{forward.1} parent=11 // pred_fallthru
        _
      // Predicated region
      $region49: #{forward.1} parent=11 // pred_check
        %p387 = pneg %p256
      $region50: #{forward.1} parent=11 // pred_check_branch
        %389 = sbr.rel (%p387) target = $region52
      $region51: #{forward.1} parent=11 // pred_region
        _
      $region52: #{forward.1} parent=11 // pred_fallthru
        _
      // Predicated region
      $region53: #{forward.1} parent=11 // pred_check
        %p390 = pneg %p277
      $region54: #{forward.1} parent=11 // pred_check_branch
        %392 = sbr.rel (%p390) target = $region56
      $region55: #{forward.1} parent=11 // pred_region
        _
      $region56: #{forward.1} parent=11 // pred_fallthru
        _
      // Predicated region
      $region57: #{forward.1} parent=11 // pred_check
        %p393 = pneg %p298
      $region58: #{forward.1} parent=11 // pred_check_branch
        %395 = sbr.rel (%p393) target = $region60
      $region59: #{forward.1} parent=11 // pred_region
        _
      $region60: #{forward.1} parent=11 // pred_fallthru
        _
      // Predicated region
      $region61: #{forward.1} parent=11 // pred_check
        %p396 = pneg %p319
      $region62: #{forward.1} parent=11 // pred_check_branch
        %398 = sbr.rel (%p396) target = $region64
      $region63: #{forward.1} parent=11 // pred_region
        _
      $region64: #{forward.1} parent=11 // pred_fallthru
        _
    $region12: #{forward.1} parent=5 // pred_fallthru
      _
    %p399 = scmp.lt.s32.totalorder %s20, 2
    // Predicated region
    $region65: #{forward.1} parent=5 // pred_check
      %p400 = pneg %p399
    $region66: #{forward.1} parent=5 // pred_check_branch
      %402 = sbr.rel (%p400) target = $region68
    $region67: #{forward.1} parent=5 // pred_region
      // Predicated region
      $region69: #{forward.1} parent=67 // pred_check
        %p403 = pneg %p40
      $region70: #{forward.1} parent=67 // pred_check_branch
        %405 = sbr.rel (%p403) target = $region72
      $region71: #{forward.1} parent=67 // pred_region
        %p406 = scmp.lt.s32.totalorder %s20, 1
        %s407 = scalar_select %p406, %s20, 1
        %s408 = smul.addr %s407, 15
        %s409 = smul.addr %s408, 4
        %s410 = scalar_lea.vmem %s0, %s409
      $region72: #{forward.1} parent=67 // pred_fallthru
        _
    $region68: #{forward.1} parent=5 // pred_fallthru
      _
    %p411 = scmp.le.s32.totalorder 1, %s20
    %p412 = scmp.lt.s32.totalorder %s20, 3
    %p413 = pnand %p411, %p412
    %p414 = pneg %p413
    // Predicated region
    $region73: #{forward.1} parent=5 // pred_check
      _
    $region74: #{forward.1} parent=5 // pred_check_branch
      %416 = sbr.rel (%p413) target = $region76
    $region75: #{forward.1} parent=5 // pred_region
      %s417 = ssub.s32 %s20, 1
      %p418 = scmp.lt.s32.totalorder %s25, 1
      %s419 = scalar_select %p418, %s25, 1
      %s420 = smul.addr %s419, 15
      %s421 = smul.addr %s420, 4
      %s422 = scalar_lea.vmem %s0, %s421
      %p423 = pneg %p46
      %p424 = pneg %p43
      %p425 = pneg %p67
      %p426 = pneg %p64
      %p427 = pneg %p88
      %p428 = pneg %p85
      %p429 = pneg %p109
      %p430 = pneg %p106
      %p431 = pneg %p130
      %p432 = pneg %p127
      %p433 = pneg %p151
      %p434 = pneg %p148
      %p435 = pneg %p172
      %p436 = pneg %p169
      %p437 = pneg %p193
      %p438 = pneg %p190
      %p439 = pneg %p214
      %p440 = pneg %p211
      %p441 = pneg %p235
      %p442 = pneg %p232
      %p443 = pneg %p256
      %p444 = pneg %p253
      %p445 = pneg %p277
      %p446 = pneg %p274
      %p447 = pneg %p298
      %p448 = pneg %p295
      %p449 = pneg %p319
      %p450 = pneg %p316
      %p451 = pneg %p345
      %p452 = pneg %p342
      %p453 = scmp.lt.s32.totalorder %s25, 1
      %s454 = scalar_select %p453, %s25, 1
      %s455 = smul.addr %s454, 3
      %s456 = smul.addr %s455, 4
      %s457 = scalar_lea.vmem %s14, %s456
      %p458 = scmp.lt.s32.totalorder %s25, 1
      %s459 = scalar_select %p458, %s25, 1
      %s460 = smul.addr %s459, 15
      %s461 = smul.addr %s460, 4
      %s462 = scalar_lea.vmem %s0, %s461
      %p463 = scmp.lt.s32.totalorder %s25, 1
      %s464 = scalar_select %p463, %s25, 1
      %s465 = smul.addr %s464, 3
      %s466 = smul.addr %s465, 4
      %s467 = scalar_lea.vmem %s14, %s466
      %468 = vst [vmem:[#allocation2] sm:$0xff] 0.0
      %469 = vst [vmem:[#allocation2 + $0x8] sm:$0xff] 0.0
      %470 = vst [vmem:[#allocation2 + $0x10] sm:$0xff] 0.0
      %vm471 = vcmask 818176
      %472 = vst.msk [vmem:[#allocation2 + $0x18] sm:$0xff] %vm471, 0.0
      %473 = vst [vmem:[#allocation3] sm:$0xff] 0.0
      %474 = vst [vmem:[#allocation3 + $0x8] sm:$0xff] 0.0
      %475 = vst [vmem:[#allocation3 + $0x10] sm:$0xff] 0.0
      %476 = vst.msk [vmem:[#allocation3 + $0x18] sm:$0xff] %vm471, 0.0
      %477 = vst [vmem:[#allocation4] sm:$0xff] 0.0
      %478 = vst [vmem:[#allocation4 + $0x8] sm:$0xff] 0.0
      %479 = vst [vmem:[#allocation4 + $0x10] sm:$0xff] 0.0
      %480 = vst.msk [vmem:[#allocation4 + $0x18] sm:$0xff] %vm471, 0.0
      %v481 = vld [vmem:[%s1] sm:$0x7]
      %v482 = vld [vmem:[%s462] sm:$0xff]
      %v483 = vld [vmem:[%s462 + $0x8] sm:$0xf]
      %v486 = vcombine.high %v482, %v482
      %487 = vrot.lane.b32.xlu0 %v482, 48
      %v488 = vpop.permute.xlu0 %487
      %489 = vrot.lane.b32.xlu0 %v486, 48
      %v490 = vpop.permute.xlu0 %489
      %491 = vrot.lane.b32.xlu0 %v483, 48
      %v492 = vpop.permute.xlu0 %491
      %vm493 = vcmask 392192
      %v494 = vsel %vm493, %v488, %v490
      %v495 = vsel %vm493, %v490, %v492
      %vm500 = vcmask 1043840
      %501 = vst.msk [vmem:[#allocation2] sm:$0xf] %vm500, %v488
      %502 = vst [vmem:[#allocation2 + $0x8] sm:$0xf] %v494
      %503 = vst [vmem:[#allocation2 + $0x10] sm:$0xf] %v495
      %vm504 = vcmask 388096
      %505 = vst.msk [vmem:[#allocation2 + $0x18] sm:$0xf] %vm504, %v492
      %v506 = vld [vmem:[#allocation2] sm:$0xf]
      %v507 = vld [vmem:[#allocation2 + $0x8] sm:$0xf]
      %v508 = vld [vmem:[#allocation2 + $0x10] sm:$0xf]
      %v509 = vld [vmem:[#allocation2 + $0x18] sm:$0xf]
      %v514 = vrot.slane %v506, 4
      %v515 = vrot.slane %v507, 4
      %v516 = vrot.slane %v508, 4
      %v517 = vrot.slane %v509, 4
      %518 = vrot.lane.b32.xlu0 %v514, 127
      %v519 = vpop.permute.xlu0 %518
      %520 = vrot.lane.b32.xlu0 %v515, 127
      %v521 = vpop.permute.xlu0 %520
      %522 = vrot.lane.b32.xlu0 %v516, 127
      %v523 = vpop.permute.xlu0 %522
      %524 = vrot.lane.b32.xlu0 %v517, 127
      %v525 = vpop.permute.xlu0 %524
      %vm526 = vcmask 1039360
      %v527 = vsel %vm526, %v519, %v521
      %v528 = vsel %vm526, %v521, %v523
      %v529 = vsel %vm526, %v523, %v525
      %534 = vrot.lane.b32.xlu0 %v506, 126
      %v535 = vpop.permute.xlu0 %534
      %536 = vrot.lane.b32.xlu0 %v507, 126
      %v537 = vpop.permute.xlu0 %536
      %538 = vrot.lane.b32.xlu0 %v508, 126
      %v539 = vpop.permute.xlu0 %538
      %540 = vrot.lane.b32.xlu0 %v509, 126
      %v541 = vpop.permute.xlu0 %540
      %vm542 = vcmask 1031168
      %v543 = vsel %vm542, %v535, %v537
      %v544 = vsel %vm542, %v537, %v539
      %v545 = vsel %vm542, %v539, %v541
      %550 = vrot.lane.b32.xlu0 %v514, 104
      %v551 = vpop.permute.xlu0 %550
      %552 = vrot.lane.b32.xlu0 %v515, 104
      %v553 = vpop.permute.xlu0 %552
      %554 = vrot.lane.b32.xlu0 %v516, 104
      %v555 = vpop.permute.xlu0 %554
      %556 = vrot.lane.b32.xlu0 %v517, 104
      %v557 = vpop.permute.xlu0 %556
      %vm558 = vcmask 850944
      %v559 = vsel %vm558, %v551, %v553
      %v560 = vsel %vm558, %v553, %v555
      %v561 = vsel %vm558, %v555, %v557
      %566 = vrot.lane.b32.xlu0 %v506, 103
      %v567 = vpop.permute.xlu0 %566
      %568 = vrot.lane.b32.xlu0 %v507, 103
      %v569 = vpop.permute.xlu0 %568
      %570 = vrot.lane.b32.xlu0 %v508, 103
      %v571 = vpop.permute.xlu0 %570
      %572 = vrot.lane.b32.xlu0 %v509, 103
      %v573 = vpop.permute.xlu0 %572
      %vm574 = vcmask 842752
      %v575 = vsel %vm574, %v567, %v569
      %v576 = vsel %vm574, %v569, %v571
      %v577 = vsel %vm574, %v571, %v573
      %582 = vrot.lane.b32.xlu0 %v514, 102
      %v583 = vpop.permute.xlu0 %582
      %584 = vrot.lane.b32.xlu0 %v515, 102
      %v585 = vpop.permute.xlu0 %584
      %586 = vrot.lane.b32.xlu0 %v516, 102
      %v587 = vpop.permute.xlu0 %586
      %588 = vrot.lane.b32.xlu0 %v517, 102
      %v589 = vpop.permute.xlu0 %588
      %vm590 = vcmask 834560
      %v591 = vsel %vm590, %v583, %v585
      %v592 = vsel %vm590, %v585, %v587
      %v593 = vsel %vm590, %v587, %v589
      %598 = vrot.lane.b32.xlu0 %v506, 80
      %v599 = vpop.permute.xlu0 %598
      %600 = vrot.lane.b32.xlu0 %v507, 80
      %v601 = vpop.permute.xlu0 %600
      %602 = vrot.lane.b32.xlu0 %v508, 80
      %v603 = vpop.permute.xlu0 %602
      %604 = vrot.lane.b32.xlu0 %v509, 80
      %v605 = vpop.permute.xlu0 %604
      %vm606 = vcmask 654336
      %v607 = vsel %vm606, %v599, %v601
      %v608 = vsel %vm606, %v601, %v603
      %v609 = vsel %vm606, %v603, %v605
      %614 = vrot.lane.b32.xlu0 %v514, 79
      %v615 = vpop.permute.xlu0 %614
      %616 = vrot.lane.b32.xlu0 %v515, 79
      %v617 = vpop.permute.xlu0 %616
      %618 = vrot.lane.b32.xlu0 %v516, 79
      %v619 = vpop.permute.xlu0 %618
      %620 = vrot.lane.b32.xlu0 %v517, 79
      %v621 = vpop.permute.xlu0 %620
      %vm622 = vcmask 646144
      %v623 = vsel %vm622, %v615, %v617
      %v624 = vsel %vm622, %v617, %v619
      %v625 = vsel %vm622, %v619, %v621
      %630 = vrot.lane.b32.xlu0 %v506, 78
      %v631 = vpop.permute.xlu0 %630
      %632 = vrot.lane.b32.xlu0 %v507, 78
      %v633 = vpop.permute.xlu0 %632
      %634 = vrot.lane.b32.xlu0 %v508, 78
      %v635 = vpop.permute.xlu0 %634
      %636 = vrot.lane.b32.xlu0 %v509, 78
      %v637 = vpop.permute.xlu0 %636
      %vm638 = vcmask 637952
      %v639 = vsel %vm638, %v631, %v633
      %v640 = vsel %vm638, %v633, %v635
      %v641 = vsel %vm638, %v635, %v637
      %vm642 = vcmask 1043456
      %v643 = vsel %vm642, %v506, %v527
      %v644 = vsel %vm642, %v507, %v528
      %v645 = vsel %vm642, %v508, %v529
      %v646 = vsel %vm642, %v509, %v525
      %v647 = vsel %vm642, %v543, %v559
      %v648 = vsel %vm642, %v544, %v560
      %v649 = vsel %vm642, %v545, %v561
      %v650 = vsel %vm642, %v541, %v557
      %v651 = vsel %vm642, %v575, %v591
      %v652 = vsel %vm642, %v576, %v592
      %v653 = vsel %vm642, %v577, %v593
      %v654 = vsel %vm642, %v573, %v589
      %v655 = vsel %vm642, %v607, %v623
      %v656 = vsel %vm642, %v608, %v624
      %v657 = vsel %vm642, %v609, %v625
      %v658 = vsel %vm642, %v605, %v621
      %v659 = vld [vmem:[%s2] sm:$0xff]
      %676 = vrot.lane.b32.xlu0 %v643, 103
      %v677 = vpop.permute.xlu0 %676
      %678 = vrot.lane.b32.xlu0 %v644, 103
      %v679 = vpop.permute.xlu0 %678
      %680 = vrot.lane.b32.xlu0 %v645, 103
      %v681 = vpop.permute.xlu0 %680
      %682 = vrot.lane.b32.xlu0 %v646, 103
      %v683 = vpop.permute.xlu0 %682
      %684 = vrot.lane.b32.xlu0 %v647, 103
      %v685 = vpop.permute.xlu0 %684
      %686 = vrot.lane.b32.xlu0 %v648, 103
      %v687 = vpop.permute.xlu0 %686
      %688 = vrot.lane.b32.xlu0 %v649, 103
      %v689 = vpop.permute.xlu0 %688
      %690 = vrot.lane.b32.xlu0 %v650, 103
      %v691 = vpop.permute.xlu0 %690
      %692 = vrot.lane.b32.xlu0 %v651, 103
      %v693 = vpop.permute.xlu0 %692
      %694 = vrot.lane.b32.xlu0 %v652, 103
      %v695 = vpop.permute.xlu0 %694
      %696 = vrot.lane.b32.xlu0 %v653, 103
      %v697 = vpop.permute.xlu0 %696
      %698 = vrot.lane.b32.xlu0 %v654, 103
      %v699 = vpop.permute.xlu0 %698
      %700 = vrot.lane.b32.xlu0 %v655, 103
      %v701 = vpop.permute.xlu0 %700
      %702 = vrot.lane.b32.xlu0 %v656, 103
      %v703 = vpop.permute.xlu0 %702
      %704 = vrot.lane.b32.xlu0 %v657, 103
      %v705 = vpop.permute.xlu0 %704
      %706 = vrot.lane.b32.xlu0 %v658, 103
      %v707 = vpop.permute.xlu0 %706
      %708 = vrot.lane.b32.xlu0 %v639, 103
      %v709 = vpop.permute.xlu0 %708
      %710 = vrot.lane.b32.xlu0 %v640, 103
      %v711 = vpop.permute.xlu0 %710
      %712 = vrot.lane.b32.xlu0 %v641, 103
      %v713 = vpop.permute.xlu0 %712
      %714 = vrot.lane.b32.xlu0 %v637, 103
      %v715 = vpop.permute.xlu0 %714
      %v716 = vsel %vm574, %v677, %v679
      %v717 = vsel %vm574, %v679, %v681
      %v718 = vsel %vm574, %v681, %v683
      %v719 = vsel %vm574, %v685, %v687
      %v720 = vsel %vm574, %v687, %v689
      %v721 = vsel %vm574, %v689, %v691
      %v722 = vsel %vm574, %v693, %v695
      %v723 = vsel %vm574, %v695, %v697
      %v724 = vsel %vm574, %v697, %v699
      %v725 = vsel %vm574, %v701, %v703
      %v726 = vsel %vm574, %v703, %v705
      %v727 = vsel %vm574, %v705, %v707
      %v728 = vsel %vm574, %v709, %v711
      %v729 = vsel %vm574, %v711, %v713
      %v730 = vsel %vm574, %v713, %v715
      %vm743 = vcmask 293888
      %v745 = vsel %vm743, %v659, 0
      %v747 = vsel %vm642, %v728, 0
      %v749 = vsel %vm642, %v729, 0
      %v751 = vsel %vm642, %v730, 0
      %753 = vmatprep.subr.mxu0 0.0
      %754 = vmatpush1.msra.mxu0 0.0
      %755 = vmatprep.subr.mxu0 0.0
      %756 = vmatpush1.msra.mxu0 0.0
      %757 = vmatprep.subr.mxu0 0.0
      %758 = vmatpush1.msra.mxu0 0.0
      %759 = vmatprep.subr.mxu0 0.0
      %760 = vmatpush1.msra.mxu0 0.0
      %761 = vmatprep.subr.mxu0 0.0
      %762 = vmatpush1.msra.mxu0 0.0
      %763 = vmatprep.subr.mxu0 0.0
      %764 = vmatpush1.msra.mxu0 0.0
      %765 = vmatprep.subr.mxu0 0.0
      %766 = vmatpush1.msra.mxu0 0.0
      %767 = vmatprep.subr.mxu0 0.0
      %768 = vmatpush1.msra.mxu0 0.0
      %769 = vmatprep.subr.mxu0 0.0
      %770 = vmatpush1.msra.mxu0 0.0
      %771 = vmatprep.subr.mxu0 0.0
      %772 = vmatpush1.msra.mxu0 0.0
      %773 = vmatprep.subr.mxu0 0.0
      %774 = vmatpush1.msra.mxu0 0.0
      %775 = vmatprep.subr.mxu0 %v749
      %776 = vmatpush1.msra.mxu0 %v747
      %777 = vmatprep.subr.mxu0 %v726
      %778 = vmatpush1.msra.mxu0 %v725
      %779 = vmatprep.subr.mxu0 %v723
      %780 = vmatpush1.msra.mxu0 %v722
      %781 = vmatprep.subr.mxu0 %v720
      %782 = vmatpush1.msra.mxu0 %v719
      %783 = vmatprep.subr.mxu0 %v717
      %784 = vmatpush1.msra.mxu0 %v716
      %785 = vmatprep.subr.mxu0 0.0
      %786 = vmatpush2.msra.mxu0 0.0
      %787 = vmatprep.subr.mxu0 0.0
      %788 = vmatpush2.msra.mxu0 0.0
      %789 = vmatprep.subr.mxu0 0.0
      %790 = vmatpush2.msra.mxu0 0.0
      %791 = vmatprep.subr.mxu0 0.0
      %792 = vmatpush2.msra.mxu0 0.0
      %793 = vmatprep.subr.mxu0 0.0
      %794 = vmatpush2.msra.mxu0 0.0
      %795 = vmatprep.subr.mxu0 0.0
      %796 = vmatpush2.msra.mxu0 0.0
      %797 = vmatprep.subr.mxu0 0.0
      %798 = vmatpush2.msra.mxu0 0.0
      %799 = vmatprep.subr.mxu0 0.0
      %800 = vmatpush2.msra.mxu0 0.0
      %801 = vmatprep.subr.mxu0 0.0
      %802 = vmatpush2.msra.mxu0 0.0
      %803 = vmatprep.subr.mxu0 0.0
      %804 = vmatpush2.msra.mxu0 0.0
      %805 = vmatprep.subr.mxu0 0.0
      %806 = vmatpush2.msra.mxu0 0.0
      %807 = vmatprep.subr.mxu0 0.0
      %808 = vmatpush2.msra.mxu0 0.0
      %809 = vmatprep.subr.mxu0 0.0
      %810 = vmatpush2.msra.mxu0 0.0
      %811 = vmatprep.subr.mxu0 0.0
      %812 = vmatpush2.msra.mxu0 0.0
      %813 = vmatprep.subr.mxu0 0.0
      %814 = vmatpush2.msra.mxu0 0.0
      %815 = vmatprep.subr.mxu0 0.0
      %816 = vmatpush2.msra.mxu0 0.0
      %817 = vmatprep.mubr.f32.mxu0 0.0
      %818 = vmatmul.mubr.f32.gmra.mxu0 %v745
      %v819 = vpop.f32.mrf.mxu0
      %v820 = vadd.f32 0.0, %v819
      %v821 = vpop.f32.mrf.mxu0
      %v822 = vadd.f32 0.0, %v821
      %823 = vdwg.mxu0
      %824 = vmatprep.subr.mxu0 0.0
      %825 = vmatpush1.msra.mxu0 0.0
      %826 = vmatprep.subr.mxu0 0.0
      %827 = vmatpush1.msra.mxu0 0.0
      %828 = vmatprep.subr.mxu0 0.0
      %829 = vmatpush1.msra.mxu0 0.0
      %830 = vmatprep.subr.mxu0 0.0
      %831 = vmatpush1.msra.mxu0 0.0
      %832 = vmatprep.subr.mxu0 0.0
      %833 = vmatpush1.msra.mxu0 0.0
      %834 = vmatprep.subr.mxu0 0.0
      %835 = vmatpush1.msra.mxu0 0.0
      %836 = vmatprep.subr.mxu0 0.0
      %837 = vmatpush1.msra.mxu0 0.0
      %838 = vmatprep.subr.mxu0 0.0
      %839 = vmatpush1.msra.mxu0 0.0
      %840 = vmatprep.subr.mxu0 0.0
      %841 = vmatpush1.msra.mxu0 0.0
      %842 = vmatprep.subr.mxu0 0.0
      %843 = vmatpush1.msra.mxu0 0.0
      %844 = vmatprep.subr.mxu0 0.0
      %845 = vmatpush1.msra.mxu0 0.0
      %846 = vmatprep.subr.mxu0 0.0
      %847 = vmatpush1.msra.mxu0 %v751
      %848 = vmatprep.subr.mxu0 0.0
      %849 = vmatpush1.msra.mxu0 %v727
      %850 = vmatprep.subr.mxu0 0.0
      %851 = vmatpush1.msra.mxu0 %v724
      %852 = vmatprep.subr.mxu0 0.0
      %853 = vmatpush1.msra.mxu0 %v721
      %854 = vmatprep.subr.mxu0 0.0
      %855 = vmatpush1.msra.mxu0 %v718
      %856 = vmatprep.subr.mxu0 0.0
      %857 = vmatpush2.msra.mxu0 0.0
      %858 = vmatprep.subr.mxu0 0.0
      %859 = vmatpush2.msra.mxu0 0.0
      %860 = vmatprep.subr.mxu0 0.0
      %861 = vmatpush2.msra.mxu0 0.0
      %862 = vmatprep.subr.mxu0 0.0
      %863 = vmatpush2.msra.mxu0 0.0
      %864 = vmatprep.subr.mxu0 0.0
      %865 = vmatpush2.msra.mxu0 0.0
      %866 = vmatprep.subr.mxu0 0.0
      %867 = vmatpush2.msra.mxu0 0.0
      %868 = vmatprep.subr.mxu0 0.0
      %869 = vmatpush2.msra.mxu0 0.0
      %870 = vmatprep.subr.mxu0 0.0
      %871 = vmatpush2.msra.mxu0 0.0
      %872 = vmatprep.subr.mxu0 0.0
      %873 = vmatpush2.msra.mxu0 0.0
      %874 = vmatprep.subr.mxu0 0.0
      %875 = vmatpush2.msra.mxu0 0.0
      %876 = vmatprep.subr.mxu0 0.0
      %877 = vmatpush2.msra.mxu0 0.0
      %878 = vmatprep.subr.mxu0 0.0
      %879 = vmatpush2.msra.mxu0 0.0
      %880 = vmatprep.subr.mxu0 0.0
      %881 = vmatpush2.msra.mxu0 0.0
      %882 = vmatprep.subr.mxu0 0.0
      %883 = vmatpush2.msra.mxu0 0.0
      %884 = vmatprep.subr.mxu0 0.0
      %885 = vmatpush2.msra.mxu0 0.0
      %886 = vmatprep.subr.mxu0 0.0
      %887 = vmatpush2.msra.mxu0 0.0
      %888 = vmatprep.mubr.f32.mxu0 0.0
      %889 = vmatmul.mubr.f32.gmra.mxu0 %v745
      %v890 = vpop.f32.mrf.mxu0
      %v891 = vadd.f32 0.0, %v890
      %v892 = vpop.f32.mrf.mxu0
      %893 = vdwg.mxu0
      %v894 = vmax.f32 %v820, 0.0
      %v895 = vmax.f32 %v822, 0.0
      %v896 = vmax.f32 %v891, 0.0
      %v898 = vlaneseq
      %v899 = vshrl.u32 %v898, 7
      %v900 = vsub.s32 0, %v899
      %v901 = vrot.slane %v481, %v900
      %v902 = vlaneseq
      %v903 = vshrl.u32 %v902, 7
      %v904 = vsub.s32 1, %v903
      %v905 = vrot.slane %v481, %v904
      %v906 = vlaneseq
      %v907 = vshrl.u32 %v906, 7
      %v908 = vsub.s32 2, %v907
      %v909 = vrot.slane %v481, %v908
      %v913 = vmul.f32 %v894, %v901
      %v914 = vmul.f32 %v895, %v905
      %v915 = vmul.f32 %v896, %v909
      %919 = vrot.lane.b32.xlu0 %v913, 50
      %v920 = vpop.permute.xlu0 %919
      %921 = vrot.lane.b32.xlu0 %v914, 50
      %v922 = vpop.permute.xlu0 %921
      %923 = vrot.lane.b32.xlu0 %v915, 50
      %v924 = vpop.permute.xlu0 %923
      %vm925 = vcmask 408576
      %v926 = vsel %vm925, %v920, %v922
      %v927 = vsel %vm925, %v922, %v924
      %vm932 = vcmask 1047952
      %933 = vst.msk [vmem:[#allocation3] sm:$0xff] %vm932, %v920
      %934 = vst [vmem:[#allocation3 + $0x8] sm:$0xff] %v926
      %935 = vst [vmem:[#allocation3 + $0x10] sm:$0xff] %v927
      %936 = vst.msk [vmem:[#allocation3 + $0x18] sm:$0xff] %vm925, %v924
      %v937 = vld [vmem:[#allocation3] sm:$0xff]
      %v938 = vld [vmem:[#allocation3 + $0x8] sm:$0xff]
      %v939 = vld [vmem:[#allocation3 + $0x10] sm:$0xff]
      %v940 = vld [vmem:[#allocation3 + $0x18] sm:$0xff]
      %945 = vrot.lane.b32.xlu0 %v937, 127
      %v946 = vpop.permute.xlu0 %945
      %947 = vrot.lane.b32.xlu0 %v938, 127
      %v948 = vpop.permute.xlu0 %947
      %949 = vrot.lane.b32.xlu0 %v939, 127
      %v950 = vpop.permute.xlu0 %949
      %951 = vrot.lane.b32.xlu0 %v940, 127
      %v952 = vpop.permute.xlu0 %951
      %v953 = vsel %vm526, %v946, %v948
      %v954 = vsel %vm526, %v948, %v950
      %v955 = vsel %vm526, %v950, %v952
      %956 = vrot.lane.b32.xlu0 %v937, 126
      %v957 = vpop.permute.xlu0 %956
      %958 = vrot.lane.b32.xlu0 %v938, 126
      %v959 = vpop.permute.xlu0 %958
      %960 = vrot.lane.b32.xlu0 %v939, 126
      %v961 = vpop.permute.xlu0 %960
      %962 = vrot.lane.b32.xlu0 %v940, 126
      %v963 = vpop.permute.xlu0 %962
      %v964 = vsel %vm542, %v957, %v959
      %v965 = vsel %vm542, %v959, %v961
      %v966 = vsel %vm542, %v961, %v963
      %967 = vrot.lane.b32.xlu0 %v937, 104
      %v968 = vpop.permute.xlu0 %967
      %969 = vrot.lane.b32.xlu0 %v938, 104
      %v970 = vpop.permute.xlu0 %969
      %971 = vrot.lane.b32.xlu0 %v939, 104
      %v972 = vpop.permute.xlu0 %971
      %973 = vrot.lane.b32.xlu0 %v940, 104
      %v974 = vpop.permute.xlu0 %973
      %v975 = vsel %vm558, %v968, %v970
      %v976 = vsel %vm558, %v970, %v972
      %v977 = vsel %vm558, %v972, %v974
      %978 = vrot.lane.b32.xlu0 %v937, 103
      %v979 = vpop.permute.xlu0 %978
      %980 = vrot.lane.b32.xlu0 %v938, 103
      %v981 = vpop.permute.xlu0 %980
      %982 = vrot.lane.b32.xlu0 %v939, 103
      %v983 = vpop.permute.xlu0 %982
      %984 = vrot.lane.b32.xlu0 %v940, 103
      %v985 = vpop.permute.xlu0 %984
      %v986 = vsel %vm574, %v979, %v981
      %v987 = vsel %vm574, %v981, %v983
      %v988 = vsel %vm574, %v983, %v985
      %989 = vrot.lane.b32.xlu0 %v937, 102
      %v990 = vpop.permute.xlu0 %989
      %991 = vrot.lane.b32.xlu0 %v938, 102
      %v992 = vpop.permute.xlu0 %991
      %993 = vrot.lane.b32.xlu0 %v939, 102
      %v994 = vpop.permute.xlu0 %993
      %995 = vrot.lane.b32.xlu0 %v940, 102
      %v996 = vpop.permute.xlu0 %995
      %v997 = vsel %vm590, %v990, %v992
      %v998 = vsel %vm590, %v992, %v994
      %v999 = vsel %vm590, %v994, %v996
      %1000 = vrot.lane.b32.xlu0 %v937, 80
      %v1001 = vpop.permute.xlu0 %1000
      %1002 = vrot.lane.b32.xlu0 %v938, 80
      %v1003 = vpop.permute.xlu0 %1002
      %1004 = vrot.lane.b32.xlu0 %v939, 80
      %v1005 = vpop.permute.xlu0 %1004
      %1006 = vrot.lane.b32.xlu0 %v940, 80
      %v1007 = vpop.permute.xlu0 %1006
      %v1008 = vsel %vm606, %v1001, %v1003
      %v1009 = vsel %vm606, %v1003, %v1005
      %v1010 = vsel %vm606, %v1005, %v1007
      %1011 = vrot.lane.b32.xlu0 %v937, 79
      %v1012 = vpop.permute.xlu0 %1011
      %1013 = vrot.lane.b32.xlu0 %v938, 79
      %v1014 = vpop.permute.xlu0 %1013
      %1015 = vrot.lane.b32.xlu0 %v939, 79
      %v1016 = vpop.permute.xlu0 %1015
      %1017 = vrot.lane.b32.xlu0 %v940, 79
      %v1018 = vpop.permute.xlu0 %1017
      %v1019 = vsel %vm622, %v1012, %v1014
      %v1020 = vsel %vm622, %v1014, %v1016
      %v1021 = vsel %vm622, %v1016, %v1018
      %1022 = vrot.lane.b32.xlu0 %v937, 78
      %v1023 = vpop.permute.xlu0 %1022
      %1024 = vrot.lane.b32.xlu0 %v938, 78
      %v1025 = vpop.permute.xlu0 %1024
      %1026 = vrot.lane.b32.xlu0 %v939, 78
      %v1027 = vpop.permute.xlu0 %1026
      %1028 = vrot.lane.b32.xlu0 %v940, 78
      %v1029 = vpop.permute.xlu0 %1028
      %v1030 = vsel %vm638, %v1023, %v1025
      %v1031 = vsel %vm638, %v1025, %v1027
      %v1032 = vsel %vm638, %v1027, %v1029
      %v1033 = vld [vmem:[%s7] sm:$0xff]
      %1034 = vrot.lane.b32.xlu0 %v953, 103
      %v1035 = vpop.permute.xlu0 %1034
      %1036 = vrot.lane.b32.xlu0 %v954, 103
      %v1037 = vpop.permute.xlu0 %1036
      %1038 = vrot.lane.b32.xlu0 %v955, 103
      %v1039 = vpop.permute.xlu0 %1038
      %1040 = vrot.lane.b32.xlu0 %v952, 103
      %v1041 = vpop.permute.xlu0 %1040
      %1042 = vrot.lane.b32.xlu0 %v964, 103
      %v1043 = vpop.permute.xlu0 %1042
      %1044 = vrot.lane.b32.xlu0 %v965, 103
      %v1045 = vpop.permute.xlu0 %1044
      %1046 = vrot.lane.b32.xlu0 %v966, 103
      %v1047 = vpop.permute.xlu0 %1046
      %1048 = vrot.lane.b32.xlu0 %v963, 103
      %v1049 = vpop.permute.xlu0 %1048
      %1050 = vrot.lane.b32.xlu0 %v975, 103
      %v1051 = vpop.permute.xlu0 %1050
      %1052 = vrot.lane.b32.xlu0 %v976, 103
      %v1053 = vpop.permute.xlu0 %1052
      %1054 = vrot.lane.b32.xlu0 %v977, 103
      %v1055 = vpop.permute.xlu0 %1054
      %1056 = vrot.lane.b32.xlu0 %v974, 103
      %v1057 = vpop.permute.xlu0 %1056
      %1058 = vrot.lane.b32.xlu0 %v986, 103
      %v1059 = vpop.permute.xlu0 %1058
      %1060 = vrot.lane.b32.xlu0 %v987, 103
      %v1061 = vpop.permute.xlu0 %1060
      %1062 = vrot.lane.b32.xlu0 %v988, 103
      %v1063 = vpop.permute.xlu0 %1062
      %1064 = vrot.lane.b32.xlu0 %v985, 103
      %v1065 = vpop.permute.xlu0 %1064
      %1066 = vrot.lane.b32.xlu0 %v997, 103
      %v1067 = vpop.permute.xlu0 %1066
      %1068 = vrot.lane.b32.xlu0 %v998, 103
      %v1069 = vpop.permute.xlu0 %1068
      %1070 = vrot.lane.b32.xlu0 %v999, 103
      %v1071 = vpop.permute.xlu0 %1070
      %1072 = vrot.lane.b32.xlu0 %v996, 103
      %v1073 = vpop.permute.xlu0 %1072
      %1074 = vrot.lane.b32.xlu0 %v1008, 103
      %v1075 = vpop.permute.xlu0 %1074
      %1076 = vrot.lane.b32.xlu0 %v1009, 103
      %v1077 = vpop.permute.xlu0 %1076
      %1078 = vrot.lane.b32.xlu0 %v1010, 103
      %v1079 = vpop.permute.xlu0 %1078
      %1080 = vrot.lane.b32.xlu0 %v1007, 103
      %v1081 = vpop.permute.xlu0 %1080
      %1082 = vrot.lane.b32.xlu0 %v1019, 103
      %v1083 = vpop.permute.xlu0 %1082
      %1084 = vrot.lane.b32.xlu0 %v1020, 103
      %v1085 = vpop.permute.xlu0 %1084
      %1086 = vrot.lane.b32.xlu0 %v1021, 103
      %v1087 = vpop.permute.xlu0 %1086
      %1088 = vrot.lane.b32.xlu0 %v1018, 103
      %v1089 = vpop.permute.xlu0 %1088
      %1090 = vrot.lane.b32.xlu0 %v1030, 103
      %v1091 = vpop.permute.xlu0 %1090
      %1092 = vrot.lane.b32.xlu0 %v1031, 103
      %v1093 = vpop.permute.xlu0 %1092
      %1094 = vrot.lane.b32.xlu0 %v1032, 103
      %v1095 = vpop.permute.xlu0 %1094
      %1096 = vrot.lane.b32.xlu0 %v1029, 103
      %v1097 = vpop.permute.xlu0 %1096
      %v1098 = vsel %vm574, %v1035, %v1037
      %v1099 = vsel %vm574, %v1037, %v1039
      %v1100 = vsel %vm574, %v1039, %v1041
      %v1101 = vsel %vm574, %v1043, %v1045
      %v1102 = vsel %vm574, %v1045, %v1047
      %v1103 = vsel %vm574, %v1047, %v1049
      %v1104 = vsel %vm574, %v1051, %v1053
      %v1105 = vsel %vm574, %v1053, %v1055
      %v1106 = vsel %vm574, %v1055, %v1057
      %v1107 = vsel %vm574, %v1059, %v1061
      %v1108 = vsel %vm574, %v1061, %v1063
      %v1109 = vsel %vm574, %v1063, %v1065
      %v1110 = vsel %vm574, %v1067, %v1069
      %v1111 = vsel %vm574, %v1069, %v1071
      %v1112 = vsel %vm574, %v1071, %v1073
      %v1113 = vsel %vm574, %v1075, %v1077
      %v1114 = vsel %vm574, %v1077, %v1079
      %v1115 = vsel %vm574, %v1079, %v1081
      %v1116 = vsel %vm574, %v1083, %v1085
      %v1117 = vsel %vm574, %v1085, %v1087
      %v1118 = vsel %vm574, %v1087, %v1089
      %v1119 = vsel %vm574, %v1091, %v1093
      %v1120 = vsel %vm574, %v1093, %v1095
      %v1121 = vsel %vm574, %v1095, %v1097
      %vm1149 = vcmask 588800
      %v1151 = vsel %vm1149, %v1033, 0
      %1153 = vmatprep.subr.mxu0 0.0
      %1154 = vmatpush1.msra.mxu0 0.0
      %1155 = vmatprep.subr.mxu0 0.0
      %1156 = vmatpush1.msra.mxu0 0.0
      %1157 = vmatprep.subr.mxu0 0.0
      %1158 = vmatpush1.msra.mxu0 0.0
      %1159 = vmatprep.subr.mxu0 0.0
      %1160 = vmatpush1.msra.mxu0 0.0
      %1161 = vmatprep.subr.mxu0 0.0
      %1162 = vmatpush1.msra.mxu0 0.0
      %1163 = vmatprep.subr.mxu0 0.0
      %1164 = vmatpush1.msra.mxu0 0.0
      %1165 = vmatprep.subr.mxu0 0.0
      %1166 = vmatpush1.msra.mxu0 0.0
      %1167 = vmatprep.subr.mxu0 %v1120
      %1168 = vmatpush1.msra.mxu0 %v1119
      %1169 = vmatprep.subr.mxu0 %v1117
      %1170 = vmatpush1.msra.mxu0 %v1116
      %1171 = vmatprep.subr.mxu0 %v1114
      %1172 = vmatpush1.msra.mxu0 %v1113
      %1173 = vmatprep.subr.mxu0 %v1111
      %1174 = vmatpush1.msra.mxu0 %v1110
      %1175 = vmatprep.subr.mxu0 %v1108
      %1176 = vmatpush1.msra.mxu0 %v1107
      %1177 = vmatprep.subr.mxu0 %v1105
      %1178 = vmatpush1.msra.mxu0 %v1104
      %1179 = vmatprep.subr.mxu0 %v1102
      %1180 = vmatpush1.msra.mxu0 %v1101
      %1181 = vmatprep.subr.mxu0 %v1099
      %1182 = vmatpush1.msra.mxu0 %v1098
      %1183 = vmatprep.subr.mxu0 %v987
      %1184 = vmatpush1.msra.mxu0 %v986
      %1185 = vmatprep.subr.mxu0 0.0
      %1186 = vmatpush2.msra.mxu0 0.0
      %1187 = vmatprep.subr.mxu0 0.0
      %1188 = vmatpush2.msra.mxu0 0.0
      %1189 = vmatprep.subr.mxu0 0.0
      %1190 = vmatpush2.msra.mxu0 0.0
      %1191 = vmatprep.subr.mxu0 0.0
      %1192 = vmatpush2.msra.mxu0 0.0
      %1193 = vmatprep.subr.mxu0 0.0
      %1194 = vmatpush2.msra.mxu0 0.0
      %1195 = vmatprep.subr.mxu0 0.0
      %1196 = vmatpush2.msra.mxu0 0.0
      %1197 = vmatprep.subr.mxu0 0.0
      %1198 = vmatpush2.msra.mxu0 0.0
      %1199 = vmatprep.subr.mxu0 0.0
      %1200 = vmatpush2.msra.mxu0 0.0
      %1201 = vmatprep.subr.mxu0 0.0
      %1202 = vmatpush2.msra.mxu0 0.0
      %1203 = vmatprep.subr.mxu0 0.0
      %1204 = vmatpush2.msra.mxu0 0.0
      %1205 = vmatprep.subr.mxu0 0.0
      %1206 = vmatpush2.msra.mxu0 0.0
      %1207 = vmatprep.subr.mxu0 0.0
      %1208 = vmatpush2.msra.mxu0 0.0
      %1209 = vmatprep.subr.mxu0 0.0
      %1210 = vmatpush2.msra.mxu0 0.0
      %1211 = vmatprep.subr.mxu0 0.0
      %1212 = vmatpush2.msra.mxu0 0.0
      %1213 = vmatprep.subr.mxu0 0.0
      %1214 = vmatpush2.msra.mxu0 0.0
      %1215 = vmatprep.subr.mxu0 0.0
      %1216 = vmatpush2.msra.mxu0 0.0
      %1217 = vmatprep.mubr.f32.mxu0 0.0
      %1218 = vmatmul.mubr.f32.gmra.mxu0 %v1151
      %v1219 = vpop.f32.mrf.mxu0
      %v1220 = vadd.f32 0.0, %v1219
      %v1221 = vpop.f32.mrf.mxu0
      %v1222 = vadd.f32 0.0, %v1221
      %1223 = vdwg.mxu0
      %1224 = vmatprep.subr.mxu0 0.0
      %1225 = vmatpush1.msra.mxu0 0.0
      %1226 = vmatprep.subr.mxu0 0.0
      %1227 = vmatpush1.msra.mxu0 0.0
      %1228 = vmatprep.subr.mxu0 0.0
      %1229 = vmatpush1.msra.mxu0 0.0
      %1230 = vmatprep.subr.mxu0 0.0
      %1231 = vmatpush1.msra.mxu0 0.0
      %1232 = vmatprep.subr.mxu0 0.0
      %1233 = vmatpush1.msra.mxu0 0.0
      %1234 = vmatprep.subr.mxu0 0.0
      %1235 = vmatpush1.msra.mxu0 0.0
      %1236 = vmatprep.subr.mxu0 0.0
      %1237 = vmatpush1.msra.mxu0 0.0
      %1238 = vmatprep.subr.mxu0 0.0
      %1239 = vmatpush1.msra.mxu0 %v1121
      %1240 = vmatprep.subr.mxu0 0.0
      %1241 = vmatpush1.msra.mxu0 %v1118
      %1242 = vmatprep.subr.mxu0 0.0
      %1243 = vmatpush1.msra.mxu0 %v1115
      %1244 = vmatprep.subr.mxu0 0.0
      %1245 = vmatpush1.msra.mxu0 %v1112
      %1246 = vmatprep.subr.mxu0 0.0
      %1247 = vmatpush1.msra.mxu0 %v1109
      %1248 = vmatprep.subr.mxu0 0.0
      %1249 = vmatpush1.msra.mxu0 %v1106
      %1250 = vmatprep.subr.mxu0 0.0
      %1251 = vmatpush1.msra.mxu0 %v1103
      %1252 = vmatprep.subr.mxu0 0.0
      %1253 = vmatpush1.msra.mxu0 %v1100
      %1254 = vmatprep.subr.mxu0 0.0
      %1255 = vmatpush1.msra.mxu0 %v988
      %1256 = vmatprep.subr.mxu0 0.0
      %1257 = vmatpush2.msra.mxu0 0.0
      %1258 = vmatprep.subr.mxu0 0.0
      %1259 = vmatpush2.msra.mxu0 0.0
      %1260 = vmatprep.subr.mxu0 0.0
      %1261 = vmatpush2.msra.mxu0 0.0
      %1262 = vmatprep.subr.mxu0 0.0
      %1263 = vmatpush2.msra.mxu0 0.0
      %1264 = vmatprep.subr.mxu0 0.0
      %1265 = vmatpush2.msra.mxu0 0.0
      %1266 = vmatprep.subr.mxu0 0.0
      %1267 = vmatpush2.msra.mxu0 0.0
      %1268 = vmatprep.subr.mxu0 0.0
      %1269 = vmatpush2.msra.mxu0 0.0
      %1270 = vmatprep.subr.mxu0 0.0
      %1271 = vmatpush2.msra.mxu0 0.0
      %1272 = vmatprep.subr.mxu0 0.0
      %1273 = vmatpush2.msra.mxu0 0.0
      %1274 = vmatprep.subr.mxu0 0.0
      %1275 = vmatpush2.msra.mxu0 0.0
      %1276 = vmatprep.subr.mxu0 0.0
      %1277 = vmatpush2.msra.mxu0 0.0
      %1278 = vmatprep.subr.mxu0 0.0
      %1279 = vmatpush2.msra.mxu0 0.0
      %1280 = vmatprep.subr.mxu0 0.0
      %1281 = vmatpush2.msra.mxu0 0.0
      %1282 = vmatprep.subr.mxu0 0.0
      %1283 = vmatpush2.msra.mxu0 0.0
      %1284 = vmatprep.subr.mxu0 0.0
      %1285 = vmatpush2.msra.mxu0 0.0
      %1286 = vmatprep.subr.mxu0 0.0
      %1287 = vmatpush2.msra.mxu0 0.0
      %1288 = vmatprep.mubr.f32.mxu0 0.0
      %1289 = vmatmul.mubr.f32.gmra.mxu0 %v1151
      %v1290 = vpop.f32.mrf.mxu0
      %v1291 = vadd.f32 0.0, %v1290
      %v1292 = vpop.f32.mrf.mxu0
      %1293 = vdwg.mxu0
      %v1294 = vmax.f32 %v1220, 0.0
      %v1295 = vmax.f32 %v1222, 0.0
      %v1296 = vmax.f32 %v1291, 0.0
      %v1297 = vmul.f32 %v1294, %v901
      %v1298 = vmul.f32 %v1295, %v905
      %v1299 = vmul.f32 %v1296, %v909
      %v1300 = vadd.f32 %v1297, 0.0
      %v1301 = vadd.f32 %v1298, 0.0
      %v1302 = vadd.f32 %v1299, 0.0
      %s1303 = scalar_lea.vmem %s462, 12
      %v1304 = vld [vmem:[%s1303] sm:$0xff]
      %v1305 = vld [vmem:[%s1303 + $0x8] sm:$0xf]
      %v1308 = vcombine.high %v1304, %v1304
      %1309 = vrot.lane.b32.xlu0 %v1304, 48
      %v1310 = vpop.permute.xlu0 %1309
      %1311 = vrot.lane.b32.xlu0 %v1308, 48
      %v1312 = vpop.permute.xlu0 %1311
      %1313 = vrot.lane.b32.xlu0 %v1305, 48
      %v1314 = vpop.permute.xlu0 %1313
      %v1315 = vsel %vm493, %v1310, %v1312
      %v1316 = vsel %vm493, %v1312, %v1314
      %1321 = vst.msk [vmem:[#allocation2] sm:$0xf] %vm500, %v1310
      %1322 = vst [vmem:[#allocation2 + $0x8] sm:$0xf] %v1315
      %1323 = vst [vmem:[#allocation2 + $0x10] sm:$0xf] %v1316
      %1324 = vst.msk [vmem:[#allocation2 + $0x18] sm:$0xf] %vm504, %v1314
      %v1325 = vld [vmem:[#allocation2] sm:$0xf]
      %v1326 = vld [vmem:[#allocation2 + $0x8] sm:$0xf]
      %v1327 = vld [vmem:[#allocation2 + $0x10] sm:$0xf]
      %v1328 = vld [vmem:[#allocation2 + $0x18] sm:$0xf]
      %v1333 = vrot.slane %v1325, 4
      %v1334 = vrot.slane %v1326, 4
      %v1335 = vrot.slane %v1327, 4
      %v1336 = vrot.slane %v1328, 4
      %1337 = vrot.lane.b32.xlu0 %v1333, 127
      %v1338 = vpop.permute.xlu0 %1337
      %1339 = vrot.lane.b32.xlu0 %v1334, 127
      %v1340 = vpop.permute.xlu0 %1339
      %1341 = vrot.lane.b32.xlu0 %v1335, 127
      %v1342 = vpop.permute.xlu0 %1341
      %1343 = vrot.lane.b32.xlu0 %v1336, 127
      %v1344 = vpop.permute.xlu0 %1343
      %v1345 = vsel %vm526, %v1338, %v1340
      %v1346 = vsel %vm526, %v1340, %v1342
      %v1347 = vsel %vm526, %v1342, %v1344
      %1352 = vrot.lane.b32.xlu0 %v1325, 126
      %v1353 = vpop.permute.xlu0 %1352
      %1354 = vrot.lane.b32.xlu0 %v1326, 126
      %v1355 = vpop.permute.xlu0 %1354
      %1356 = vrot.lane.b32.xlu0 %v1327, 126
      %v1357 = vpop.permute.xlu0 %1356
      %1358 = vrot.lane.b32.xlu0 %v1328, 126
      %v1359 = vpop.permute.xlu0 %1358
      %v1360 = vsel %vm542, %v1353, %v1355
      %v1361 = vsel %vm542, %v1355, %v1357
      %v1362 = vsel %vm542, %v1357, %v1359
      %1367 = vrot.lane.b32.xlu0 %v1333, 104
      %v1368 = vpop.permute.xlu0 %1367
      %1369 = vrot.lane.b32.xlu0 %v1334, 104
      %v1370 = vpop.permute.xlu0 %1369
      %1371 = vrot.lane.b32.xlu0 %v1335, 104
      %v1372 = vpop.permute.xlu0 %1371
      %1373 = vrot.lane.b32.xlu0 %v1336, 104
      %v1374 = vpop.permute.xlu0 %1373
      %v1375 = vsel %vm558, %v1368, %v1370
      %v1376 = vsel %vm558, %v1370, %v1372
      %v1377 = vsel %vm558, %v1372, %v1374
      %1382 = vrot.lane.b32.xlu0 %v1325, 103
      %v1383 = vpop.permute.xlu0 %1382
      %1384 = vrot.lane.b32.xlu0 %v1326, 103
      %v1385 = vpop.permute.xlu0 %1384
      %1386 = vrot.lane.b32.xlu0 %v1327, 103
      %v1387 = vpop.permute.xlu0 %1386
      %1388 = vrot.lane.b32.xlu0 %v1328, 103
      %v1389 = vpop.permute.xlu0 %1388
      %v1390 = vsel %vm574, %v1383, %v1385
      %v1391 = vsel %vm574, %v1385, %v1387
      %v1392 = vsel %vm574, %v1387, %v1389
      %1397 = vrot.lane.b32.xlu0 %v1333, 102
      %v1398 = vpop.permute.xlu0 %1397
      %1399 = vrot.lane.b32.xlu0 %v1334, 102
      %v1400 = vpop.permute.xlu0 %1399
      %1401 = vrot.lane.b32.xlu0 %v1335, 102
      %v1402 = vpop.permute.xlu0 %1401
      %1403 = vrot.lane.b32.xlu0 %v1336, 102
      %v1404 = vpop.permute.xlu0 %1403
      %v1405 = vsel %vm590, %v1398, %v1400
      %v1406 = vsel %vm590, %v1400, %v1402
      %v1407 = vsel %vm590, %v1402, %v1404
      %1412 = vrot.lane.b32.xlu0 %v1325, 80
      %v1413 = vpop.permute.xlu0 %1412
      %1414 = vrot.lane.b32.xlu0 %v1326, 80
      %v1415 = vpop.permute.xlu0 %1414
      %1416 = vrot.lane.b32.xlu0 %v1327, 80
      %v1417 = vpop.permute.xlu0 %1416
      %1418 = vrot.lane.b32.xlu0 %v1328, 80
      %v1419 = vpop.permute.xlu0 %1418
      %v1420 = vsel %vm606, %v1413, %v1415
      %v1421 = vsel %vm606, %v1415, %v1417
      %v1422 = vsel %vm606, %v1417, %v1419
      %1427 = vrot.lane.b32.xlu0 %v1333, 79
      %v1428 = vpop.permute.xlu0 %1427
      %1429 = vrot.lane.b32.xlu0 %v1334, 79
      %v1430 = vpop.permute.xlu0 %1429
      %1431 = vrot.lane.b32.xlu0 %v1335, 79
      %v1432 = vpop.permute.xlu0 %1431
      %1433 = vrot.lane.b32.xlu0 %v1336, 79
      %v1434 = vpop.permute.xlu0 %1433
      %v1435 = vsel %vm622, %v1428, %v1430
      %v1436 = vsel %vm622, %v1430, %v1432
      %v1437 = vsel %vm622, %v1432, %v1434
      %1442 = vrot.lane.b32.xlu0 %v1325, 78
      %v1443 = vpop.permute.xlu0 %1442
      %1444 = vrot.lane.b32.xlu0 %v1326, 78
      %v1445 = vpop.permute.xlu0 %1444
      %1446 = vrot.lane.b32.xlu0 %v1327, 78
      %v1447 = vpop.permute.xlu0 %1446
      %1448 = vrot.lane.b32.xlu0 %v1328, 78
      %v1449 = vpop.permute.xlu0 %1448
      %v1450 = vsel %vm638, %v1443, %v1445
      %v1451 = vsel %vm638, %v1445, %v1447
      %v1452 = vsel %vm638, %v1447, %v1449
      %v1453 = vsel %vm642, %v1325, %v1345
      %v1454 = vsel %vm642, %v1326, %v1346
      %v1455 = vsel %vm642, %v1327, %v1347
      %v1456 = vsel %vm642, %v1328, %v1344
      %v1457 = vsel %vm642, %v1360, %v1375
      %v1458 = vsel %vm642, %v1361, %v1376
      %v1459 = vsel %vm642, %v1362, %v1377
      %v1460 = vsel %vm642, %v1359, %v1374
      %v1461 = vsel %vm642, %v1390, %v1405
      %v1462 = vsel %vm642, %v1391, %v1406
      %v1463 = vsel %vm642, %v1392, %v1407
      %v1464 = vsel %vm642, %v1389, %v1404
      %v1465 = vsel %vm642, %v1420, %v1435
      %v1466 = vsel %vm642, %v1421, %v1436
      %v1467 = vsel %vm642, %v1422, %v1437
      %v1468 = vsel %vm642, %v1419, %v1434
      %v1469 = vld [vmem:[%s3] sm:$0xff]
      %1486 = vrot.lane.b32.xlu0 %v1453, 103
      %v1487 = vpop.permute.xlu0 %1486
      %1488 = vrot.lane.b32.xlu0 %v1454, 103
      %v1489 = vpop.permute.xlu0 %1488
      %1490 = vrot.lane.b32.xlu0 %v1455, 103
      %v1491 = vpop.permute.xlu0 %1490
      %1492 = vrot.lane.b32.xlu0 %v1456, 103
      %v1493 = vpop.permute.xlu0 %1492
      %1494 = vrot.lane.b32.xlu0 %v1457, 103
      %v1495 = vpop.permute.xlu0 %1494
      %1496 = vrot.lane.b32.xlu0 %v1458, 103
      %v1497 = vpop.permute.xlu0 %1496
      %1498 = vrot.lane.b32.xlu0 %v1459, 103
      %v1499 = vpop.permute.xlu0 %1498
      %1500 = vrot.lane.b32.xlu0 %v1460, 103
      %v1501 = vpop.permute.xlu0 %1500
      %1502 = vrot.lane.b32.xlu0 %v1461, 103
      %v1503 = vpop.permute.xlu0 %1502
      %1504 = vrot.lane.b32.xlu0 %v1462, 103
      %v1505 = vpop.permute.xlu0 %1504
      %1506 = vrot.lane.b32.xlu0 %v1463, 103
      %v1507 = vpop.permute.xlu0 %1506
      %1508 = vrot.lane.b32.xlu0 %v1464, 103
      %v1509 = vpop.permute.xlu0 %1508
      %1510 = vrot.lane.b32.xlu0 %v1465, 103
      %v1511 = vpop.permute.xlu0 %1510
      %1512 = vrot.lane.b32.xlu0 %v1466, 103
      %v1513 = vpop.permute.xlu0 %1512
      %1514 = vrot.lane.b32.xlu0 %v1467, 103
      %v1515 = vpop.permute.xlu0 %1514
      %1516 = vrot.lane.b32.xlu0 %v1468, 103
      %v1517 = vpop.permute.xlu0 %1516
      %1518 = vrot.lane.b32.xlu0 %v1450, 103
      %v1519 = vpop.permute.xlu0 %1518
      %1520 = vrot.lane.b32.xlu0 %v1451, 103
      %v1521 = vpop.permute.xlu0 %1520
      %1522 = vrot.lane.b32.xlu0 %v1452, 103
      %v1523 = vpop.permute.xlu0 %1522
      %1524 = vrot.lane.b32.xlu0 %v1449, 103
      %v1525 = vpop.permute.xlu0 %1524
      %v1526 = vsel %vm574, %v1487, %v1489
      %v1527 = vsel %vm574, %v1489, %v1491
      %v1528 = vsel %vm574, %v1491, %v1493
      %v1529 = vsel %vm574, %v1495, %v1497
      %v1530 = vsel %vm574, %v1497, %v1499
      %v1531 = vsel %vm574, %v1499, %v1501
      %v1532 = vsel %vm574, %v1503, %v1505
      %v1533 = vsel %vm574, %v1505, %v1507
      %v1534 = vsel %vm574, %v1507, %v1509
      %v1535 = vsel %vm574, %v1511, %v1513
      %v1536 = vsel %vm574, %v1513, %v1515
      %v1537 = vsel %vm574, %v1515, %v1517
      %v1538 = vsel %vm574, %v1519, %v1521
      %v1539 = vsel %vm574, %v1521, %v1523
      %v1540 = vsel %vm574, %v1523, %v1525
      %v1554 = vsel %vm743, %v1469, 0
      %v1556 = vsel %vm642, %v1538, 0
      %v1558 = vsel %vm642, %v1539, 0
      %v1560 = vsel %vm642, %v1540, 0
      %1562 = vmatprep.subr.mxu0 0.0
      %1563 = vmatpush1.msra.mxu0 0.0
      %1564 = vmatprep.subr.mxu0 0.0
      %1565 = vmatpush1.msra.mxu0 0.0
      %1566 = vmatprep.subr.mxu0 0.0
      %1567 = vmatpush1.msra.mxu0 0.0
      %1568 = vmatprep.subr.mxu0 0.0
      %1569 = vmatpush1.msra.mxu0 0.0
      %1570 = vmatprep.subr.mxu0 0.0
      %1571 = vmatpush1.msra.mxu0 0.0
      %1572 = vmatprep.subr.mxu0 0.0
      %1573 = vmatpush1.msra.mxu0 0.0
      %1574 = vmatprep.subr.mxu0 0.0
      %1575 = vmatpush1.msra.mxu0 0.0
      %1576 = vmatprep.subr.mxu0 0.0
      %1577 = vmatpush1.msra.mxu0 0.0
      %1578 = vmatprep.subr.mxu0 0.0
      %1579 = vmatpush1.msra.mxu0 0.0
      %1580 = vmatprep.subr.mxu0 0.0
      %1581 = vmatpush1.msra.mxu0 0.0
      %1582 = vmatprep.subr.mxu0 0.0
      %1583 = vmatpush1.msra.mxu0 0.0
      %1584 = vmatprep.subr.mxu0 %v1558
      %1585 = vmatpush1.msra.mxu0 %v1556
      %1586 = vmatprep.subr.mxu0 %v1536
      %1587 = vmatpush1.msra.mxu0 %v1535
      %1588 = vmatprep.subr.mxu0 %v1533
      %1589 = vmatpush1.msra.mxu0 %v1532
      %1590 = vmatprep.subr.mxu0 %v1530
      %1591 = vmatpush1.msra.mxu0 %v1529
      %1592 = vmatprep.subr.mxu0 %v1527
      %1593 = vmatpush1.msra.mxu0 %v1526
      %1594 = vmatprep.subr.mxu0 0.0
      %1595 = vmatpush2.msra.mxu0 0.0
      %1596 = vmatprep.subr.mxu0 0.0
      %1597 = vmatpush2.msra.mxu0 0.0
      %1598 = vmatprep.subr.mxu0 0.0
      %1599 = vmatpush2.msra.mxu0 0.0
      %1600 = vmatprep.subr.mxu0 0.0
      %1601 = vmatpush2.msra.mxu0 0.0
      %1602 = vmatprep.subr.mxu0 0.0
      %1603 = vmatpush2.msra.mxu0 0.0
      %1604 = vmatprep.subr.mxu0 0.0
      %1605 = vmatpush2.msra.mxu0 0.0
      %1606 = vmatprep.subr.mxu0 0.0
      %1607 = vmatpush2.msra.mxu0 0.0
      %1608 = vmatprep.subr.mxu0 0.0
      %1609 = vmatpush2.msra.mxu0 0.0
      %1610 = vmatprep.subr.mxu0 0.0
      %1611 = vmatpush2.msra.mxu0 0.0
      %1612 = vmatprep.subr.mxu0 0.0
      %1613 = vmatpush2.msra.mxu0 0.0
      %1614 = vmatprep.subr.mxu0 0.0
      %1615 = vmatpush2.msra.mxu0 0.0
      %1616 = vmatprep.subr.mxu0 0.0
      %1617 = vmatpush2.msra.mxu0 0.0
      %1618 = vmatprep.subr.mxu0 0.0
      %1619 = vmatpush2.msra.mxu0 0.0
      %1620 = vmatprep.subr.mxu0 0.0
      %1621 = vmatpush2.msra.mxu0 0.0
      %1622 = vmatprep.subr.mxu0 0.0
      %1623 = vmatpush2.msra.mxu0 0.0
      %1624 = vmatprep.subr.mxu0 0.0
      %1625 = vmatpush2.msra.mxu0 0.0
      %1626 = vmatprep.mubr.f32.mxu0 0.0
      %1627 = vmatmul.mubr.f32.gmra.mxu0 %v1554
      %v1628 = vpop.f32.mrf.mxu0
      %v1629 = vadd.f32 0.0, %v1628
      %v1630 = vpop.f32.mrf.mxu0
      %v1631 = vadd.f32 0.0, %v1630
      %1632 = vdwg.mxu0
      %1633 = vmatprep.subr.mxu0 0.0
      %1634 = vmatpush1.msra.mxu0 0.0
      %1635 = vmatprep.subr.mxu0 0.0
      %1636 = vmatpush1.msra.mxu0 0.0
      %1637 = vmatprep.subr.mxu0 0.0
      %1638 = vmatpush1.msra.mxu0 0.0
      %1639 = vmatprep.subr.mxu0 0.0
      %1640 = vmatpush1.msra.mxu0 0.0
      %1641 = vmatprep.subr.mxu0 0.0
      %1642 = vmatpush1.msra.mxu0 0.0
      %1643 = vmatprep.subr.mxu0 0.0
      %1644 = vmatpush1.msra.mxu0 0.0
      %1645 = vmatprep.subr.mxu0 0.0
      %1646 = vmatpush1.msra.mxu0 0.0
      %1647 = vmatprep.subr.mxu0 0.0
      %1648 = vmatpush1.msra.mxu0 0.0
      %1649 = vmatprep.subr.mxu0 0.0
      %1650 = vmatpush1.msra.mxu0 0.0
      %1651 = vmatprep.subr.mxu0 0.0
      %1652 = vmatpush1.msra.mxu0 0.0
      %1653 = vmatprep.subr.mxu0 0.0
      %1654 = vmatpush1.msra.mxu0 0.0
      %1655 = vmatprep.subr.mxu0 0.0
      %1656 = vmatpush1.msra.mxu0 %v1560
      %1657 = vmatprep.subr.mxu0 0.0
      %1658 = vmatpush1.msra.mxu0 %v1537
      %1659 = vmatprep.subr.mxu0 0.0
      %1660 = vmatpush1.msra.mxu0 %v1534
      %1661 = vmatprep.subr.mxu0 0.0
      %1662 = vmatpush1.msra.mxu0 %v1531
      %1663 = vmatprep.subr.mxu0 0.0
      %1664 = vmatpush1.msra.mxu0 %v1528
      %1665 = vmatprep.subr.mxu0 0.0
      %1666 = vmatpush2.msra.mxu0 0.0
      %1667 = vmatprep.subr.mxu0 0.0
      %1668 = vmatpush2.msra.mxu0 0.0
      %1669 = vmatprep.subr.mxu0 0.0
      %1670 = vmatpush2.msra.mxu0 0.0
      %1671 = vmatprep.subr.mxu0 0.0
      %1672 = vmatpush2.msra.mxu0 0.0
      %1673 = vmatprep.subr.mxu0 0.0
      %1674 = vmatpush2.msra.mxu0 0.0
      %1675 = vmatprep.subr.mxu0 0.0
      %1676 = vmatpush2.msra.mxu0 0.0
      %1677 = vmatprep.subr.mxu0 0.0
      %1678 = vmatpush2.msra.mxu0 0.0
      %1679 = vmatprep.subr.mxu0 0.0
      %1680 = vmatpush2.msra.mxu0 0.0
      %1681 = vmatprep.subr.mxu0 0.0
      %1682 = vmatpush2.msra.mxu0 0.0
      %1683 = vmatprep.subr.mxu0 0.0
      %1684 = vmatpush2.msra.mxu0 0.0
      %1685 = vmatprep.subr.mxu0 0.0
      %1686 = vmatpush2.msra.mxu0 0.0
      %1687 = vmatprep.subr.mxu0 0.0
      %1688 = vmatpush2.msra.mxu0 0.0
      %1689 = vmatprep.subr.mxu0 0.0
      %1690 = vmatpush2.msra.mxu0 0.0
      %1691 = vmatprep.subr.mxu0 0.0
      %1692 = vmatpush2.msra.mxu0 0.0
      %1693 = vmatprep.subr.mxu0 0.0
      %1694 = vmatpush2.msra.mxu0 0.0
      %1695 = vmatprep.subr.mxu0 0.0
      %1696 = vmatpush2.msra.mxu0 0.0
      %1697 = vmatprep.mubr.f32.mxu0 0.0
      %1698 = vmatmul.mubr.f32.gmra.mxu0 %v1554
      %v1699 = vpop.f32.mrf.mxu0
      %v1700 = vadd.f32 0.0, %v1699
      %v1701 = vpop.f32.mrf.mxu0
      %1702 = vdwg.mxu0
      %v1703 = vmax.f32 %v1629, 0.0
      %v1704 = vmax.f32 %v1631, 0.0
      %v1705 = vmax.f32 %v1700, 0.0
      %v1706 = vmul.f32 %v1703, %v901
      %v1707 = vmul.f32 %v1704, %v905
      %v1708 = vmul.f32 %v1705, %v909
      %1712 = vrot.lane.b32.xlu0 %v1706, 50
      %v1713 = vpop.permute.xlu0 %1712
      %1714 = vrot.lane.b32.xlu0 %v1707, 50
      %v1715 = vpop.permute.xlu0 %1714
      %1716 = vrot.lane.b32.xlu0 %v1708, 50
      %v1717 = vpop.permute.xlu0 %1716
      %v1718 = vsel %vm925, %v1713, %v1715
      %v1719 = vsel %vm925, %v1715, %v1717
      %1724 = vst.msk [vmem:[#allocation3] sm:$0xff] %vm932, %v1713
      %1725 = vst [vmem:[#allocation3 + $0x8] sm:$0xff] %v1718
      %1726 = vst [vmem:[#allocation3 + $0x10] sm:$0xff] %v1719
      %1727 = vst.msk [vmem:[#allocation3 + $0x18] sm:$0xff] %vm925, %v1717
      %v1728 = vld [vmem:[#allocation3] sm:$0xff]
      %v1729 = vld [vmem:[#allocation3 + $0x8] sm:$0xff]
      %v1730 = vld [vmem:[#allocation3 + $0x10] sm:$0xff]
      %v1731 = vld [vmem:[#allocation3 + $0x18] sm:$0xff]
      %1736 = vrot.lane.b32.xlu0 %v1728, 127
      %v1737 = vpop.permute.xlu0 %1736
      %1738 = vrot.lane.b32.xlu0 %v1729, 127
      %v1739 = vpop.permute.xlu0 %1738
      %1740 = vrot.lane.b32.xlu0 %v1730, 127
      %v1741 = vpop.permute.xlu0 %1740
      %1742 = vrot.lane.b32.xlu0 %v1731, 127
      %v1743 = vpop.permute.xlu0 %1742
      %v1744 = vsel %vm526, %v1737, %v1739
      %v1745 = vsel %vm526, %v1739, %v1741
      %v1746 = vsel %vm526, %v1741, %v1743
      %1747 = vrot.lane.b32.xlu0 %v1728, 126
      %v1748 = vpop.permute.xlu0 %1747
      %1749 = vrot.lane.b32.xlu0 %v1729, 126
      %v1750 = vpop.permute.xlu0 %1749
      %1751 = vrot.lane.b32.xlu0 %v1730, 126
      %v1752 = vpop.permute.xlu0 %1751
      %1753 = vrot.lane.b32.xlu0 %v1731, 126
      %v1754 = vpop.permute.xlu0 %1753
      %v1755 = vsel %vm542, %v1748, %v1750
      %v1756 = vsel %vm542, %v1750, %v1752
      %v1757 = vsel %vm542, %v1752, %v1754
      %1758 = vrot.lane.b32.xlu0 %v1728, 104
      %v1759 = vpop.permute.xlu0 %1758
      %1760 = vrot.lane.b32.xlu0 %v1729, 104
      %v1761 = vpop.permute.xlu0 %1760
      %1762 = vrot.lane.b32.xlu0 %v1730, 104
      %v1763 = vpop.permute.xlu0 %1762
      %1764 = vrot.lane.b32.xlu0 %v1731, 104
      %v1765 = vpop.permute.xlu0 %1764
      %v1766 = vsel %vm558, %v1759, %v1761
      %v1767 = vsel %vm558, %v1761, %v1763
      %v1768 = vsel %vm558, %v1763, %v1765
      %1769 = vrot.lane.b32.xlu0 %v1728, 103
      %v1770 = vpop.permute.xlu0 %1769
      %1771 = vrot.lane.b32.xlu0 %v1729, 103
      %v1772 = vpop.permute.xlu0 %1771
      %1773 = vrot.lane.b32.xlu0 %v1730, 103
      %v1774 = vpop.permute.xlu0 %1773
      %1775 = vrot.lane.b32.xlu0 %v1731, 103
      %v1776 = vpop.permute.xlu0 %1775
      %v1777 = vsel %vm574, %v1770, %v1772
      %v1778 = vsel %vm574, %v1772, %v1774
      %v1779 = vsel %vm574, %v1774, %v1776
      %1780 = vrot.lane.b32.xlu0 %v1728, 102
      %v1781 = vpop.permute.xlu0 %1780
      %1782 = vrot.lane.b32.xlu0 %v1729, 102
      %v1783 = vpop.permute.xlu0 %1782
      %1784 = vrot.lane.b32.xlu0 %v1730, 102
      %v1785 = vpop.permute.xlu0 %1784
      %1786 = vrot.lane.b32.xlu0 %v1731, 102
      %v1787 = vpop.permute.xlu0 %1786
      %v1788 = vsel %vm590, %v1781, %v1783
      %v1789 = vsel %vm590, %v1783, %v1785
      %v1790 = vsel %vm590, %v1785, %v1787
      %1791 = vrot.lane.b32.xlu0 %v1728, 80
      %v1792 = vpop.permute.xlu0 %1791
      %1793 = vrot.lane.b32.xlu0 %v1729, 80
      %v1794 = vpop.permute.xlu0 %1793
      %1795 = vrot.lane.b32.xlu0 %v1730, 80
      %v1796 = vpop.permute.xlu0 %1795
      %1797 = vrot.lane.b32.xlu0 %v1731, 80
      %v1798 = vpop.permute.xlu0 %1797
      %v1799 = vsel %vm606, %v1792, %v1794
      %v1800 = vsel %vm606, %v1794, %v1796
      %v1801 = vsel %vm606, %v1796, %v1798
      %1802 = vrot.lane.b32.xlu0 %v1728, 79
      %v1803 = vpop.permute.xlu0 %1802
      %1804 = vrot.lane.b32.xlu0 %v1729, 79
      %v1805 = vpop.permute.xlu0 %1804
      %1806 = vrot.lane.b32.xlu0 %v1730, 79
      %v1807 = vpop.permute.xlu0 %1806
      %1808 = vrot.lane.b32.xlu0 %v1731, 79
      %v1809 = vpop.permute.xlu0 %1808
      %v1810 = vsel %vm622, %v1803, %v1805
      %v1811 = vsel %vm622, %v1805, %v1807
      %v1812 = vsel %vm622, %v1807, %v1809
      %1813 = vrot.lane.b32.xlu0 %v1728, 78
      %v1814 = vpop.permute.xlu0 %1813
      %1815 = vrot.lane.b32.xlu0 %v1729, 78
      %v1816 = vpop.permute.xlu0 %1815
      %1817 = vrot.lane.b32.xlu0 %v1730, 78
      %v1818 = vpop.permute.xlu0 %1817
      %1819 = vrot.lane.b32.xlu0 %v1731, 78
      %v1820 = vpop.permute.xlu0 %1819
      %v1821 = vsel %vm638, %v1814, %v1816
      %v1822 = vsel %vm638, %v1816, %v1818
      %v1823 = vsel %vm638, %v1818, %v1820
      %v1824 = vld [vmem:[%s8] sm:$0xff]
      %1825 = vrot.lane.b32.xlu0 %v1744, 103
      %v1826 = vpop.permute.xlu0 %1825
      %1827 = vrot.lane.b32.xlu0 %v1745, 103
      %v1828 = vpop.permute.xlu0 %1827
      %1829 = vrot.lane.b32.xlu0 %v1746, 103
      %v1830 = vpop.permute.xlu0 %1829
      %1831 = vrot.lane.b32.xlu0 %v1743, 103
      %v1832 = vpop.permute.xlu0 %1831
      %1833 = vrot.lane.b32.xlu0 %v1755, 103
      %v1834 = vpop.permute.xlu0 %1833
      %1835 = vrot.lane.b32.xlu0 %v1756, 103
      %v1836 = vpop.permute.xlu0 %1835
      %1837 = vrot.lane.b32.xlu0 %v1757, 103
      %v1838 = vpop.permute.xlu0 %1837
      %1839 = vrot.lane.b32.xlu0 %v1754, 103
      %v1840 = vpop.permute.xlu0 %1839
      %1841 = vrot.lane.b32.xlu0 %v1766, 103
      %v1842 = vpop.permute.xlu0 %1841
      %1843 = vrot.lane.b32.xlu0 %v1767, 103
      %v1844 = vpop.permute.xlu0 %1843
      %1845 = vrot.lane.b32.xlu0 %v1768, 103
      %v1846 = vpop.permute.xlu0 %1845
      %1847 = vrot.lane.b32.xlu0 %v1765, 103
      %v1848 = vpop.permute.xlu0 %1847
      %1849 = vrot.lane.b32.xlu0 %v1777, 103
      %v1850 = vpop.permute.xlu0 %1849
      %1851 = vrot.lane.b32.xlu0 %v1778, 103
      %v1852 = vpop.permute.xlu0 %1851
      %1853 = vrot.lane.b32.xlu0 %v1779, 103
      %v1854 = vpop.permute.xlu0 %1853
      %1855 = vrot.lane.b32.xlu0 %v1776, 103
      %v1856 = vpop.permute.xlu0 %1855
      %1857 = vrot.lane.b32.xlu0 %v1788, 103
      %v1858 = vpop.permute.xlu0 %1857
      %1859 = vrot.lane.b32.xlu0 %v1789, 103
      %v1860 = vpop.permute.xlu0 %1859
      %1861 = vrot.lane.b32.xlu0 %v1790, 103
      %v1862 = vpop.permute.xlu0 %1861
      %1863 = vrot.lane.b32.xlu0 %v1787, 103
      %v1864 = vpop.permute.xlu0 %1863
      %1865 = vrot.lane.b32.xlu0 %v1799, 103
      %v1866 = vpop.permute.xlu0 %1865
      %1867 = vrot.lane.b32.xlu0 %v1800, 103
      %v1868 = vpop.permute.xlu0 %1867
      %1869 = vrot.lane.b32.xlu0 %v1801, 103
      %v1870 = vpop.permute.xlu0 %1869
      %1871 = vrot.lane.b32.xlu0 %v1798, 103
      %v1872 = vpop.permute.xlu0 %1871
      %1873 = vrot.lane.b32.xlu0 %v1810, 103
      %v1874 = vpop.permute.xlu0 %1873
      %1875 = vrot.lane.b32.xlu0 %v1811, 103
      %v1876 = vpop.permute.xlu0 %1875
      %1877 = vrot.lane.b32.xlu0 %v1812, 103
      %v1878 = vpop.permute.xlu0 %1877
      %1879 = vrot.lane.b32.xlu0 %v1809, 103
      %v1880 = vpop.permute.xlu0 %1879
      %1881 = vrot.lane.b32.xlu0 %v1821, 103
      %v1882 = vpop.permute.xlu0 %1881
      %1883 = vrot.lane.b32.xlu0 %v1822, 103
      %v1884 = vpop.permute.xlu0 %1883
      %1885 = vrot.lane.b32.xlu0 %v1823, 103
      %v1886 = vpop.permute.xlu0 %1885
      %1887 = vrot.lane.b32.xlu0 %v1820, 103
      %v1888 = vpop.permute.xlu0 %1887
      %v1889 = vsel %vm574, %v1826, %v1828
      %v1890 = vsel %vm574, %v1828, %v1830
      %v1891 = vsel %vm574, %v1830, %v1832
      %v1892 = vsel %vm574, %v1834, %v1836
      %v1893 = vsel %vm574, %v1836, %v1838
      %v1894 = vsel %vm574, %v1838, %v1840
      %v1895 = vsel %vm574, %v1842, %v1844
      %v1896 = vsel %vm574, %v1844, %v1846
      %v1897 = vsel %vm574, %v1846, %v1848
      %v1898 = vsel %vm574, %v1850, %v1852
      %v1899 = vsel %vm574, %v1852, %v1854
      %v1900 = vsel %vm574, %v1854, %v1856
      %v1901 = vsel %vm574, %v1858, %v1860
      %v1902 = vsel %vm574, %v1860, %v1862
      %v1903 = vsel %vm574, %v1862, %v1864
      %v1904 = vsel %vm574, %v1866, %v1868
      %v1905 = vsel %vm574, %v1868, %v1870
      %v1906 = vsel %vm574, %v1870, %v1872
      %v1907 = vsel %vm574, %v1874, %v1876
      %v1908 = vsel %vm574, %v1876, %v1878
      %v1909 = vsel %vm574, %v1878, %v1880
      %v1910 = vsel %vm574, %v1882, %v1884
      %v1911 = vsel %vm574, %v1884, %v1886
      %v1912 = vsel %vm574, %v1886, %v1888
      %v1941 = vsel %vm1149, %v1824, 0
      %1943 = vmatprep.subr.mxu0 0.0
      %1944 = vmatpush1.msra.mxu0 0.0
      %1945 = vmatprep.subr.mxu0 0.0
      %1946 = vmatpush1.msra.mxu0 0.0
      %1947 = vmatprep.subr.mxu0 0.0
      %1948 = vmatpush1.msra.mxu0 0.0
      %1949 = vmatprep.subr.mxu0 0.0
      %1950 = vmatpush1.msra.mxu0 0.0
      %1951 = vmatprep.subr.mxu0 0.0
      %1952 = vmatpush1.msra.mxu0 0.0
      %1953 = vmatprep.subr.mxu0 0.0
      %1954 = vmatpush1.msra.mxu0 0.0
      %1955 = vmatprep.subr.mxu0 0.0
      %1956 = vmatpush1.msra.mxu0 0.0
      %1957 = vmatprep.subr.mxu0 %v1911
      %1958 = vmatpush1.msra.mxu0 %v1910
      %1959 = vmatprep.subr.mxu0 %v1908
      %1960 = vmatpush1.msra.mxu0 %v1907
      %1961 = vmatprep.subr.mxu0 %v1905
      %1962 = vmatpush1.msra.mxu0 %v1904
      %1963 = vmatprep.subr.mxu0 %v1902
      %1964 = vmatpush1.msra.mxu0 %v1901
      %1965 = vmatprep.subr.mxu0 %v1899
      %1966 = vmatpush1.msra.mxu0 %v1898
      %1967 = vmatprep.subr.mxu0 %v1896
      %1968 = vmatpush1.msra.mxu0 %v1895
      %1969 = vmatprep.subr.mxu0 %v1893
      %1970 = vmatpush1.msra.mxu0 %v1892
      %1971 = vmatprep.subr.mxu0 %v1890
      %1972 = vmatpush1.msra.mxu0 %v1889
      %1973 = vmatprep.subr.mxu0 %v1778
      %1974 = vmatpush1.msra.mxu0 %v1777
      %1975 = vmatprep.subr.mxu0 0.0
      %1976 = vmatpush2.msra.mxu0 0.0
      %1977 = vmatprep.subr.mxu0 0.0
      %1978 = vmatpush2.msra.mxu0 0.0
      %1979 = vmatprep.subr.mxu0 0.0
      %1980 = vmatpush2.msra.mxu0 0.0
      %1981 = vmatprep.subr.mxu0 0.0
      %1982 = vmatpush2.msra.mxu0 0.0
      %1983 = vmatprep.subr.mxu0 0.0
      %1984 = vmatpush2.msra.mxu0 0.0
      %1985 = vmatprep.subr.mxu0 0.0
      %1986 = vmatpush2.msra.mxu0 0.0
      %1987 = vmatprep.subr.mxu0 0.0
      %1988 = vmatpush2.msra.mxu0 0.0
      %1989 = vmatprep.subr.mxu0 0.0
      %1990 = vmatpush2.msra.mxu0 0.0
      %1991 = vmatprep.subr.mxu0 0.0
      %1992 = vmatpush2.msra.mxu0 0.0
      %1993 = vmatprep.subr.mxu0 0.0
      %1994 = vmatpush2.msra.mxu0 0.0
      %1995 = vmatprep.subr.mxu0 0.0
      %1996 = vmatpush2.msra.mxu0 0.0
      %1997 = vmatprep.subr.mxu0 0.0
      %1998 = vmatpush2.msra.mxu0 0.0
      %1999 = vmatprep.subr.mxu0 0.0
      %2000 = vmatpush2.msra.mxu0 0.0
      %2001 = vmatprep.subr.mxu0 0.0
      %2002 = vmatpush2.msra.mxu0 0.0
      %2003 = vmatprep.subr.mxu0 0.0
      %2004 = vmatpush2.msra.mxu0 0.0
      %2005 = vmatprep.subr.mxu0 0.0
      %2006 = vmatpush2.msra.mxu0 0.0
      %2007 = vmatprep.mubr.f32.mxu0 0.0
      %2008 = vmatmul.mubr.f32.gmra.mxu0 %v1941
      %v2009 = vpop.f32.mrf.mxu0
      %v2010 = vadd.f32 0.0, %v2009
      %v2011 = vpop.f32.mrf.mxu0
      %v2012 = vadd.f32 0.0, %v2011
      %2013 = vdwg.mxu0
      %2014 = vmatprep.subr.mxu0 0.0
      %2015 = vmatpush1.msra.mxu0 0.0
      %2016 = vmatprep.subr.mxu0 0.0
      %2017 = vmatpush1.msra.mxu0 0.0
      %2018 = vmatprep.subr.mxu0 0.0
      %2019 = vmatpush1.msra.mxu0 0.0
      %2020 = vmatprep.subr.mxu0 0.0
      %2021 = vmatpush1.msra.mxu0 0.0
      %2022 = vmatprep.subr.mxu0 0.0
      %2023 = vmatpush1.msra.mxu0 0.0
      %2024 = vmatprep.subr.mxu0 0.0
      %2025 = vmatpush1.msra.mxu0 0.0
      %2026 = vmatprep.subr.mxu0 0.0
      %2027 = vmatpush1.msra.mxu0 0.0
      %2028 = vmatprep.subr.mxu0 0.0
      %2029 = vmatpush1.msra.mxu0 %v1912
      %2030 = vmatprep.subr.mxu0 0.0
      %2031 = vmatpush1.msra.mxu0 %v1909
      %2032 = vmatprep.subr.mxu0 0.0
      %2033 = vmatpush1.msra.mxu0 %v1906
      %2034 = vmatprep.subr.mxu0 0.0
      %2035 = vmatpush1.msra.mxu0 %v1903
      %2036 = vmatprep.subr.mxu0 0.0
      %2037 = vmatpush1.msra.mxu0 %v1900
      %2038 = vmatprep.subr.mxu0 0.0
      %2039 = vmatpush1.msra.mxu0 %v1897
      %2040 = vmatprep.subr.mxu0 0.0
      %2041 = vmatpush1.msra.mxu0 %v1894
      %2042 = vmatprep.subr.mxu0 0.0
      %2043 = vmatpush1.msra.mxu0 %v1891
      %2044 = vmatprep.subr.mxu0 0.0
      %2045 = vmatpush1.msra.mxu0 %v1779
      %2046 = vmatprep.subr.mxu0 0.0
      %2047 = vmatpush2.msra.mxu0 0.0
      %2048 = vmatprep.subr.mxu0 0.0
      %2049 = vmatpush2.msra.mxu0 0.0
      %2050 = vmatprep.subr.mxu0 0.0
      %2051 = vmatpush2.msra.mxu0 0.0
      %2052 = vmatprep.subr.mxu0 0.0
      %2053 = vmatpush2.msra.mxu0 0.0
      %2054 = vmatprep.subr.mxu0 0.0
      %2055 = vmatpush2.msra.mxu0 0.0
      %2056 = vmatprep.subr.mxu0 0.0
      %2057 = vmatpush2.msra.mxu0 0.0
      %2058 = vmatprep.subr.mxu0 0.0
      %2059 = vmatpush2.msra.mxu0 0.0
      %2060 = vmatprep.subr.mxu0 0.0
      %2061 = vmatpush2.msra.mxu0 0.0
      %2062 = vmatprep.subr.mxu0 0.0
      %2063 = vmatpush2.msra.mxu0 0.0
      %2064 = vmatprep.subr.mxu0 0.0
      %2065 = vmatpush2.msra.mxu0 0.0
      %2066 = vmatprep.subr.mxu0 0.0
      %2067 = vmatpush2.msra.mxu0 0.0
      %2068 = vmatprep.subr.mxu0 0.0
      %2069 = vmatpush2.msra.mxu0 0.0
      %2070 = vmatprep.subr.mxu0 0.0
      %2071 = vmatpush2.msra.mxu0 0.0
      %2072 = vmatprep.subr.mxu0 0.0
      %2073 = vmatpush2.msra.mxu0 0.0
      %2074 = vmatprep.subr.mxu0 0.0
      %2075 = vmatpush2.msra.mxu0 0.0
      %2076 = vmatprep.subr.mxu0 0.0
      %2077 = vmatpush2.msra.mxu0 0.0
      %2078 = vmatprep.mubr.f32.mxu0 0.0
      %2079 = vmatmul.mubr.f32.gmra.mxu0 %v1941
      %v2080 = vpop.f32.mrf.mxu0
      %v2081 = vadd.f32 0.0, %v2080
      %v2082 = vpop.f32.mrf.mxu0
      %2083 = vdwg.mxu0
      %v2084 = vmax.f32 %v2010, 0.0
      %v2085 = vmax.f32 %v2012, 0.0
      %v2086 = vmax.f32 %v2081, 0.0
      %v2087 = vmul.f32 %v2084, %v901
      %v2088 = vmul.f32 %v2085, %v905
      %v2089 = vmul.f32 %v2086, %v909
      %v2090 = vadd.f32 %v1300, %v2087
      %v2091 = vadd.f32 %v1301, %v2088
      %v2092 = vadd.f32 %v1302, %v2089
      %s2093 = scalar_lea.vmem %s462, 24
      %v2094 = vld [vmem:[%s2093] sm:$0xff]
      %v2095 = vld [vmem:[%s2093 + $0x8] sm:$0xf]
      %v2098 = vcombine.high %v2094, %v2094
      %2099 = vrot.lane.b32.xlu0 %v2094, 48
      %v2100 = vpop.permute.xlu0 %2099
      %2101 = vrot.lane.b32.xlu0 %v2098, 48
      %v2102 = vpop.permute.xlu0 %2101
      %2103 = vrot.lane.b32.xlu0 %v2095, 48
      %v2104 = vpop.permute.xlu0 %2103
      %v2105 = vsel %vm493, %v2100, %v2102
      %v2106 = vsel %vm493, %v2102, %v2104
      %2111 = vst.msk [vmem:[#allocation2] sm:$0xf] %vm500, %v2100
      %2112 = vst [vmem:[#allocation2 + $0x8] sm:$0xf] %v2105
      %2113 = vst [vmem:[#allocation2 + $0x10] sm:$0xf] %v2106
      %2114 = vst.msk [vmem:[#allocation2 + $0x18] sm:$0xf] %vm504, %v2104
      %v2115 = vld [vmem:[#allocation2] sm:$0xf]
      %v2116 = vld [vmem:[#allocation2 + $0x8] sm:$0xf]
      %v2117 = vld [vmem:[#allocation2 + $0x10] sm:$0xf]
      %v2118 = vld [vmem:[#allocation2 + $0x18] sm:$0xf]
      %v2123 = vrot.slane %v2115, 4
      %v2124 = vrot.slane %v2116, 4
      %v2125 = vrot.slane %v2117, 4
      %v2126 = vrot.slane %v2118, 4
      %2127 = vrot.lane.b32.xlu0 %v2123, 127
      %v2128 = vpop.permute.xlu0 %2127
      %2129 = vrot.lane.b32.xlu0 %v2124, 127
      %v2130 = vpop.permute.xlu0 %2129
      %2131 = vrot.lane.b32.xlu0 %v2125, 127
      %v2132 = vpop.permute.xlu0 %2131
      %2133 = vrot.lane.b32.xlu0 %v2126, 127
      %v2134 = vpop.permute.xlu0 %2133
      %v2135 = vsel %vm526, %v2128, %v2130
      %v2136 = vsel %vm526, %v2130, %v2132
      %v2137 = vsel %vm526, %v2132, %v2134
      %2142 = vrot.lane.b32.xlu0 %v2115, 126
      %v2143 = vpop.permute.xlu0 %2142
      %2144 = vrot.lane.b32.xlu0 %v2116, 126
      %v2145 = vpop.permute.xlu0 %2144
      %2146 = vrot.lane.b32.xlu0 %v2117, 126
      %v2147 = vpop.permute.xlu0 %2146
      %2148 = vrot.lane.b32.xlu0 %v2118, 126
      %v2149 = vpop.permute.xlu0 %2148
      %v2150 = vsel %vm542, %v2143, %v2145
      %v2151 = vsel %vm542, %v2145, %v2147
      %v2152 = vsel %vm542, %v2147, %v2149
      %2157 = vrot.lane.b32.xlu0 %v2123, 104
      %v2158 = vpop.permute.xlu0 %2157
      %2159 = vrot.lane.b32.xlu0 %v2124, 104
      %v2160 = vpop.permute.xlu0 %2159
      %2161 = vrot.lane.b32.xlu0 %v2125, 104
      %v2162 = vpop.permute.xlu0 %2161
      %2163 = vrot.lane.b32.xlu0 %v2126, 104
      %v2164 = vpop.permute.xlu0 %2163
      %v2165 = vsel %vm558, %v2158, %v2160
      %v2166 = vsel %vm558, %v2160, %v2162
      %v2167 = vsel %vm558, %v2162, %v2164
      %2172 = vrot.lane.b32.xlu0 %v2115, 103
      %v2173 = vpop.permute.xlu0 %2172
      %2174 = vrot.lane.b32.xlu0 %v2116, 103
      %v2175 = vpop.permute.xlu0 %2174
      %2176 = vrot.lane.b32.xlu0 %v2117, 103
      %v2177 = vpop.permute.xlu0 %2176
      %2178 = vrot.lane.b32.xlu0 %v2118, 103
      %v2179 = vpop.permute.xlu0 %2178
      %v2180 = vsel %vm574, %v2173, %v2175
      %v2181 = vsel %vm574, %v2175, %v2177
      %v2182 = vsel %vm574, %v2177, %v2179
      %2187 = vrot.lane.b32.xlu0 %v2123, 102
      %v2188 = vpop.permute.xlu0 %2187
      %2189 = vrot.lane.b32.xlu0 %v2124, 102
      %v2190 = vpop.permute.xlu0 %2189
      %2191 = vrot.lane.b32.xlu0 %v2125, 102
      %v2192 = vpop.permute.xlu0 %2191
      %2193 = vrot.lane.b32.xlu0 %v2126, 102
      %v2194 = vpop.permute.xlu0 %2193
      %v2195 = vsel %vm590, %v2188, %v2190
      %v2196 = vsel %vm590, %v2190, %v2192
      %v2197 = vsel %vm590, %v2192, %v2194
      %2202 = vrot.lane.b32.xlu0 %v2115, 80
      %v2203 = vpop.permute.xlu0 %2202
      %2204 = vrot.lane.b32.xlu0 %v2116, 80
      %v2205 = vpop.permute.xlu0 %2204
      %2206 = vrot.lane.b32.xlu0 %v2117, 80
      %v2207 = vpop.permute.xlu0 %2206
      %2208 = vrot.lane.b32.xlu0 %v2118, 80
      %v2209 = vpop.permute.xlu0 %2208
      %v2210 = vsel %vm606, %v2203, %v2205
      %v2211 = vsel %vm606, %v2205, %v2207
      %v2212 = vsel %vm606, %v2207, %v2209
      %2217 = vrot.lane.b32.xlu0 %v2123, 79
      %v2218 = vpop.permute.xlu0 %2217
      %2219 = vrot.lane.b32.xlu0 %v2124, 79
      %v2220 = vpop.permute.xlu0 %2219
      %2221 = vrot.lane.b32.xlu0 %v2125, 79
      %v2222 = vpop.permute.xlu0 %2221
      %2223 = vrot.lane.b32.xlu0 %v2126, 79
      %v2224 = vpop.permute.xlu0 %2223
      %v2225 = vsel %vm622, %v2218, %v2220
      %v2226 = vsel %vm622, %v2220, %v2222
      %v2227 = vsel %vm622, %v2222, %v2224
      %2232 = vrot.lane.b32.xlu0 %v2115, 78
      %v2233 = vpop.permute.xlu0 %2232
      %2234 = vrot.lane.b32.xlu0 %v2116, 78
      %v2235 = vpop.permute.xlu0 %2234
      %2236 = vrot.lane.b32.xlu0 %v2117, 78
      %v2237 = vpop.permute.xlu0 %2236
      %2238 = vrot.lane.b32.xlu0 %v2118, 78
      %v2239 = vpop.permute.xlu0 %2238
      %v2240 = vsel %vm638, %v2233, %v2235
      %v2241 = vsel %vm638, %v2235, %v2237
      %v2242 = vsel %vm638, %v2237, %v2239
      %v2243 = vsel %vm642, %v2115, %v2135
      %v2244 = vsel %vm642, %v2116, %v2136
      %v2245 = vsel %vm642, %v2117, %v2137
      %v2246 = vsel %vm642, %v2118, %v2134
      %v2247 = vsel %vm642, %v2150, %v2165
      %v2248 = vsel %vm642, %v2151, %v2166
      %v2249 = vsel %vm642, %v2152, %v2167
      %v2250 = vsel %vm642, %v2149, %v2164
      %v2251 = vsel %vm642, %v2180, %v2195
      %v2252 = vsel %vm642, %v2181, %v2196
      %v2253 = vsel %vm642, %v2182, %v2197
      %v2254 = vsel %vm642, %v2179, %v2194
      %v2255 = vsel %vm642, %v2210, %v2225
      %v2256 = vsel %vm642, %v2211, %v2226
      %v2257 = vsel %vm642, %v2212, %v2227
      %v2258 = vsel %vm642, %v2209, %v2224
      %v2259 = vld [vmem:[%s4] sm:$0xff]
      %2276 = vrot.lane.b32.xlu0 %v2243, 103
      %v2277 = vpop.permute.xlu0 %2276
      %2278 = vrot.lane.b32.xlu0 %v2244, 103
      %v2279 = vpop.permute.xlu0 %2278
      %2280 = vrot.lane.b32.xlu0 %v2245, 103
      %v2281 = vpop.permute.xlu0 %2280
      %2282 = vrot.lane.b32.xlu0 %v2246, 103
      %v2283 = vpop.permute.xlu0 %2282
      %2284 = vrot.lane.b32.xlu0 %v2247, 103
      %v2285 = vpop.permute.xlu0 %2284
      %2286 = vrot.lane.b32.xlu0 %v2248, 103
      %v2287 = vpop.permute.xlu0 %2286
      %2288 = vrot.lane.b32.xlu0 %v2249, 103
      %v2289 = vpop.permute.xlu0 %2288
      %2290 = vrot.lane.b32.xlu0 %v2250, 103
      %v2291 = vpop.permute.xlu0 %2290
      %2292 = vrot.lane.b32.xlu0 %v2251, 103
      %v2293 = vpop.permute.xlu0 %2292
      %2294 = vrot.lane.b32.xlu0 %v2252, 103
      %v2295 = vpop.permute.xlu0 %2294
      %2296 = vrot.lane.b32.xlu0 %v2253, 103
      %v2297 = vpop.permute.xlu0 %2296
      %2298 = vrot.lane.b32.xlu0 %v2254, 103
      %v2299 = vpop.permute.xlu0 %2298
      %2300 = vrot.lane.b32.xlu0 %v2255, 103
      %v2301 = vpop.permute.xlu0 %2300
      %2302 = vrot.lane.b32.xlu0 %v2256, 103
      %v2303 = vpop.permute.xlu0 %2302
      %2304 = vrot.lane.b32.xlu0 %v2257, 103
      %v2305 = vpop.permute.xlu0 %2304
      %2306 = vrot.lane.b32.xlu0 %v2258, 103
      %v2307 = vpop.permute.xlu0 %2306
      %2308 = vrot.lane.b32.xlu0 %v2240, 103
      %v2309 = vpop.permute.xlu0 %2308
      %2310 = vrot.lane.b32.xlu0 %v2241, 103
      %v2311 = vpop.permute.xlu0 %2310
      %2312 = vrot.lane.b32.xlu0 %v2242, 103
      %v2313 = vpop.permute.xlu0 %2312
      %2314 = vrot.lane.b32.xlu0 %v2239, 103
      %v2315 = vpop.permute.xlu0 %2314
      %v2316 = vsel %vm574, %v2277, %v2279
      %v2317 = vsel %vm574, %v2279, %v2281
      %v2318 = vsel %vm574, %v2281, %v2283
      %v2319 = vsel %vm574, %v2285, %v2287
      %v2320 = vsel %vm574, %v2287, %v2289
      %v2321 = vsel %vm574, %v2289, %v2291
      %v2322 = vsel %vm574, %v2293, %v2295
      %v2323 = vsel %vm574, %v2295, %v2297
      %v2324 = vsel %vm574, %v2297, %v2299
      %v2325 = vsel %vm574, %v2301, %v2303
      %v2326 = vsel %vm574, %v2303, %v2305
      %v2327 = vsel %vm574, %v2305, %v2307
      %v2328 = vsel %vm574, %v2309, %v2311
      %v2329 = vsel %vm574, %v2311, %v2313
      %v2330 = vsel %vm574, %v2313, %v2315
      %v2344 = vsel %vm743, %v2259, 0
      %v2346 = vsel %vm642, %v2328, 0
      %v2348 = vsel %vm642, %v2329, 0
      %v2350 = vsel %vm642, %v2330, 0
      %2352 = vmatprep.subr.mxu0 0.0
      %2353 = vmatpush1.msra.mxu0 0.0
      %2354 = vmatprep.subr.mxu0 0.0
      %2355 = vmatpush1.msra.mxu0 0.0
      %2356 = vmatprep.subr.mxu0 0.0
      %2357 = vmatpush1.msra.mxu0 0.0
      %2358 = vmatprep.subr.mxu0 0.0
      %2359 = vmatpush1.msra.mxu0 0.0
      %2360 = vmatprep.subr.mxu0 0.0
      %2361 = vmatpush1.msra.mxu0 0.0
      %2362 = vmatprep.subr.mxu0 0.0
      %2363 = vmatpush1.msra.mxu0 0.0
      %2364 = vmatprep.subr.mxu0 0.0
      %2365 = vmatpush1.msra.mxu0 0.0
      %2366 = vmatprep.subr.mxu0 0.0
      %2367 = vmatpush1.msra.mxu0 0.0
      %2368 = vmatprep.subr.mxu0 0.0
      %2369 = vmatpush1.msra.mxu0 0.0
      %2370 = vmatprep.subr.mxu0 0.0
      %2371 = vmatpush1.msra.mxu0 0.0
      %2372 = vmatprep.subr.mxu0 0.0
      %2373 = vmatpush1.msra.mxu0 0.0
      %2374 = vmatprep.subr.mxu0 %v2348
      %2375 = vmatpush1.msra.mxu0 %v2346
      %2376 = vmatprep.subr.mxu0 %v2326
      %2377 = vmatpush1.msra.mxu0 %v2325
      %2378 = vmatprep.subr.mxu0 %v2323
      %2379 = vmatpush1.msra.mxu0 %v2322
      %2380 = vmatprep.subr.mxu0 %v2320
      %2381 = vmatpush1.msra.mxu0 %v2319
      %2382 = vmatprep.subr.mxu0 %v2317
      %2383 = vmatpush1.msra.mxu0 %v2316
      %2384 = vmatprep.subr.mxu0 0.0
      %2385 = vmatpush2.msra.mxu0 0.0
      %2386 = vmatprep.subr.mxu0 0.0
      %2387 = vmatpush2.msra.mxu0 0.0
      %2388 = vmatprep.subr.mxu0 0.0
      %2389 = vmatpush2.msra.mxu0 0.0
      %2390 = vmatprep.subr.mxu0 0.0
      %2391 = vmatpush2.msra.mxu0 0.0
      %2392 = vmatprep.subr.mxu0 0.0
      %2393 = vmatpush2.msra.mxu0 0.0
      %2394 = vmatprep.subr.mxu0 0.0
      %2395 = vmatpush2.msra.mxu0 0.0
      %2396 = vmatprep.subr.mxu0 0.0
      %2397 = vmatpush2.msra.mxu0 0.0
      %2398 = vmatprep.subr.mxu0 0.0
      %2399 = vmatpush2.msra.mxu0 0.0
      %2400 = vmatprep.subr.mxu0 0.0
      %2401 = vmatpush2.msra.mxu0 0.0
      %2402 = vmatprep.subr.mxu0 0.0
      %2403 = vmatpush2.msra.mxu0 0.0
      %2404 = vmatprep.subr.mxu0 0.0
      %2405 = vmatpush2.msra.mxu0 0.0
      %2406 = vmatprep.subr.mxu0 0.0
      %2407 = vmatpush2.msra.mxu0 0.0
      %2408 = vmatprep.subr.mxu0 0.0
      %2409 = vmatpush2.msra.mxu0 0.0
      %2410 = vmatprep.subr.mxu0 0.0
      %2411 = vmatpush2.msra.mxu0 0.0
      %2412 = vmatprep.subr.mxu0 0.0
      %2413 = vmatpush2.msra.mxu0 0.0
      %2414 = vmatprep.subr.mxu0 0.0
      %2415 = vmatpush2.msra.mxu0 0.0
      %2416 = vmatprep.mubr.f32.mxu0 0.0
      %2417 = vmatmul.mubr.f32.gmra.mxu0 %v2344
      %v2418 = vpop.f32.mrf.mxu0
      %v2419 = vadd.f32 0.0, %v2418
      %v2420 = vpop.f32.mrf.mxu0
      %v2421 = vadd.f32 0.0, %v2420
      %2422 = vdwg.mxu0
      %2423 = vmatprep.subr.mxu0 0.0
      %2424 = vmatpush1.msra.mxu0 0.0
      %2425 = vmatprep.subr.mxu0 0.0
      %2426 = vmatpush1.msra.mxu0 0.0
      %2427 = vmatprep.subr.mxu0 0.0
      %2428 = vmatpush1.msra.mxu0 0.0
      %2429 = vmatprep.subr.mxu0 0.0
      %2430 = vmatpush1.msra.mxu0 0.0
      %2431 = vmatprep.subr.mxu0 0.0
      %2432 = vmatpush1.msra.mxu0 0.0
      %2433 = vmatprep.subr.mxu0 0.0
      %2434 = vmatpush1.msra.mxu0 0.0
      %2435 = vmatprep.subr.mxu0 0.0
      %2436 = vmatpush1.msra.mxu0 0.0
      %2437 = vmatprep.subr.mxu0 0.0
      %2438 = vmatpush1.msra.mxu0 0.0
      %2439 = vmatprep.subr.mxu0 0.0
      %2440 = vmatpush1.msra.mxu0 0.0
      %2441 = vmatprep.subr.mxu0 0.0
      %2442 = vmatpush1.msra.mxu0 0.0
      %2443 = vmatprep.subr.mxu0 0.0
      %2444 = vmatpush1.msra.mxu0 0.0
      %2445 = vmatprep.subr.mxu0 0.0
      %2446 = vmatpush1.msra.mxu0 %v2350
      %2447 = vmatprep.subr.mxu0 0.0
      %2448 = vmatpush1.msra.mxu0 %v2327
      %2449 = vmatprep.subr.mxu0 0.0
      %2450 = vmatpush1.msra.mxu0 %v2324
      %2451 = vmatprep.subr.mxu0 0.0
      %2452 = vmatpush1.msra.mxu0 %v2321
      %2453 = vmatprep.subr.mxu0 0.0
      %2454 = vmatpush1.msra.mxu0 %v2318
      %2455 = vmatprep.subr.mxu0 0.0
      %2456 = vmatpush2.msra.mxu0 0.0
      %2457 = vmatprep.subr.mxu0 0.0
      %2458 = vmatpush2.msra.mxu0 0.0
      %2459 = vmatprep.subr.mxu0 0.0
      %2460 = vmatpush2.msra.mxu0 0.0
      %2461 = vmatprep.subr.mxu0 0.0
      %2462 = vmatpush2.msra.mxu0 0.0
      %2463 = vmatprep.subr.mxu0 0.0
      %2464 = vmatpush2.msra.mxu0 0.0
      %2465 = vmatprep.subr.mxu0 0.0
      %2466 = vmatpush2.msra.mxu0 0.0
      %2467 = vmatprep.subr.mxu0 0.0
      %2468 = vmatpush2.msra.mxu0 0.0
      %2469 = vmatprep.subr.mxu0 0.0
      %2470 = vmatpush2.msra.mxu0 0.0
      %2471 = vmatprep.subr.mxu0 0.0
      %2472 = vmatpush2.msra.mxu0 0.0
      %2473 = vmatprep.subr.mxu0 0.0
      %2474 = vmatpush2.msra.mxu0 0.0
      %2475 = vmatprep.subr.mxu0 0.0
      %2476 = vmatpush2.msra.mxu0 0.0
      %2477 = vmatprep.subr.mxu0 0.0
      %2478 = vmatpush2.msra.mxu0 0.0
      %2479 = vmatprep.subr.mxu0 0.0
      %2480 = vmatpush2.msra.mxu0 0.0
      %2481 = vmatprep.subr.mxu0 0.0
      %2482 = vmatpush2.msra.mxu0 0.0
      %2483 = vmatprep.subr.mxu0 0.0
      %2484 = vmatpush2.msra.mxu0 0.0
      %2485 = vmatprep.subr.mxu0 0.0
      %2486 = vmatpush2.msra.mxu0 0.0
      %2487 = vmatprep.mubr.f32.mxu0 0.0
      %2488 = vmatmul.mubr.f32.gmra.mxu0 %v2344
      %v2489 = vpop.f32.mrf.mxu0
      %v2490 = vadd.f32 0.0, %v2489
      %v2491 = vpop.f32.mrf.mxu0
      %2492 = vdwg.mxu0
      %v2493 = vmax.f32 %v2419, 0.0
      %v2494 = vmax.f32 %v2421, 0.0
      %v2495 = vmax.f32 %v2490, 0.0
      %v2496 = vmul.f32 %v2493, %v901
      %v2497 = vmul.f32 %v2494, %v905
      %v2498 = vmul.f32 %v2495, %v909
      %2502 = vrot.lane.b32.xlu0 %v2496, 50
      %v2503 = vpop.permute.xlu0 %2502
      %2504 = vrot.lane.b32.xlu0 %v2497, 50
      %v2505 = vpop.permute.xlu0 %2504
      %2506 = vrot.lane.b32.xlu0 %v2498, 50
      %v2507 = vpop.permute.xlu0 %2506
      %v2508 = vsel %vm925, %v2503, %v2505
      %v2509 = vsel %vm925, %v2505, %v2507
      %2514 = vst.msk [vmem:[#allocation3] sm:$0xff] %vm932, %v2503
      %2515 = vst [vmem:[#allocation3 + $0x8] sm:$0xff] %v2508
      %2516 = vst [vmem:[#allocation3 + $0x10] sm:$0xff] %v2509
      %2517 = vst.msk [vmem:[#allocation3 + $0x18] sm:$0xff] %vm925, %v2507
      %v2518 = vld [vmem:[#allocation3] sm:$0xff]
      %v2519 = vld [vmem:[#allocation3 + $0x8] sm:$0xff]
      %v2520 = vld [vmem:[#allocation3 + $0x10] sm:$0xff]
      %v2521 = vld [vmem:[#allocation3 + $0x18] sm:$0xff]
      %2526 = vrot.lane.b32.xlu0 %v2518, 127
      %v2527 = vpop.permute.xlu0 %2526
      %2528 = vrot.lane.b32.xlu0 %v2519, 127
      %v2529 = vpop.permute.xlu0 %2528
      %2530 = vrot.lane.b32.xlu0 %v2520, 127
      %v2531 = vpop.permute.xlu0 %2530
      %2532 = vrot.lane.b32.xlu0 %v2521, 127
      %v2533 = vpop.permute.xlu0 %2532
      %v2534 = vsel %vm526, %v2527, %v2529
      %v2535 = vsel %vm526, %v2529, %v2531
      %v2536 = vsel %vm526, %v2531, %v2533
      %2537 = vrot.lane.b32.xlu0 %v2518, 126
      %v2538 = vpop.permute.xlu0 %2537
      %2539 = vrot.lane.b32.xlu0 %v2519, 126
      %v2540 = vpop.permute.xlu0 %2539
      %2541 = vrot.lane.b32.xlu0 %v2520, 126
      %v2542 = vpop.permute.xlu0 %2541
      %2543 = vrot.lane.b32.xlu0 %v2521, 126
      %v2544 = vpop.permute.xlu0 %2543
      %v2545 = vsel %vm542, %v2538, %v2540
      %v2546 = vsel %vm542, %v2540, %v2542
      %v2547 = vsel %vm542, %v2542, %v2544
      %2548 = vrot.lane.b32.xlu0 %v2518, 104
      %v2549 = vpop.permute.xlu0 %2548
      %2550 = vrot.lane.b32.xlu0 %v2519, 104
      %v2551 = vpop.permute.xlu0 %2550
      %2552 = vrot.lane.b32.xlu0 %v2520, 104
      %v2553 = vpop.permute.xlu0 %2552
      %2554 = vrot.lane.b32.xlu0 %v2521, 104
      %v2555 = vpop.permute.xlu0 %2554
      %v2556 = vsel %vm558, %v2549, %v2551
      %v2557 = vsel %vm558, %v2551, %v2553
      %v2558 = vsel %vm558, %v2553, %v2555
      %2559 = vrot.lane.b32.xlu0 %v2518, 103
      %v2560 = vpop.permute.xlu0 %2559
      %2561 = vrot.lane.b32.xlu0 %v2519, 103
      %v2562 = vpop.permute.xlu0 %2561
      %2563 = vrot.lane.b32.xlu0 %v2520, 103
      %v2564 = vpop.permute.xlu0 %2563
      %2565 = vrot.lane.b32.xlu0 %v2521, 103
      %v2566 = vpop.permute.xlu0 %2565
      %v2567 = vsel %vm574, %v2560, %v2562
      %v2568 = vsel %vm574, %v2562, %v2564
      %v2569 = vsel %vm574, %v2564, %v2566
      %2570 = vrot.lane.b32.xlu0 %v2518, 102
      %v2571 = vpop.permute.xlu0 %2570
      %2572 = vrot.lane.b32.xlu0 %v2519, 102
      %v2573 = vpop.permute.xlu0 %2572
      %2574 = vrot.lane.b32.xlu0 %v2520, 102
      %v2575 = vpop.permute.xlu0 %2574
      %2576 = vrot.lane.b32.xlu0 %v2521, 102
      %v2577 = vpop.permute.xlu0 %2576
      %v2578 = vsel %vm590, %v2571, %v2573
      %v2579 = vsel %vm590, %v2573, %v2575
      %v2580 = vsel %vm590, %v2575, %v2577
      %2581 = vrot.lane.b32.xlu0 %v2518, 80
      %v2582 = vpop.permute.xlu0 %2581
      %2583 = vrot.lane.b32.xlu0 %v2519, 80
      %v2584 = vpop.permute.xlu0 %2583
      %2585 = vrot.lane.b32.xlu0 %v2520, 80
      %v2586 = vpop.permute.xlu0 %2585
      %2587 = vrot.lane.b32.xlu0 %v2521, 80
      %v2588 = vpop.permute.xlu0 %2587
      %v2589 = vsel %vm606, %v2582, %v2584
      %v2590 = vsel %vm606, %v2584, %v2586
      %v2591 = vsel %vm606, %v2586, %v2588
      %2592 = vrot.lane.b32.xlu0 %v2518, 79
      %v2593 = vpop.permute.xlu0 %2592
      %2594 = vrot.lane.b32.xlu0 %v2519, 79
      %v2595 = vpop.permute.xlu0 %2594
      %2596 = vrot.lane.b32.xlu0 %v2520, 79
      %v2597 = vpop.permute.xlu0 %2596
      %2598 = vrot.lane.b32.xlu0 %v2521, 79
      %v2599 = vpop.permute.xlu0 %2598
      %v2600 = vsel %vm622, %v2593, %v2595
      %v2601 = vsel %vm622, %v2595, %v2597
      %v2602 = vsel %vm622, %v2597, %v2599
      %2603 = vrot.lane.b32.xlu0 %v2518, 78
      %v2604 = vpop.permute.xlu0 %2603
      %2605 = vrot.lane.b32.xlu0 %v2519, 78
      %v2606 = vpop.permute.xlu0 %2605
      %2607 = vrot.lane.b32.xlu0 %v2520, 78
      %v2608 = vpop.permute.xlu0 %2607
      %2609 = vrot.lane.b32.xlu0 %v2521, 78
      %v2610 = vpop.permute.xlu0 %2609
      %v2611 = vsel %vm638, %v2604, %v2606
      %v2612 = vsel %vm638, %v2606, %v2608
      %v2613 = vsel %vm638, %v2608, %v2610
      %v2614 = vld [vmem:[%s9] sm:$0xff]
      %2615 = vrot.lane.b32.xlu0 %v2534, 103
      %v2616 = vpop.permute.xlu0 %2615
      %2617 = vrot.lane.b32.xlu0 %v2535, 103
      %v2618 = vpop.permute.xlu0 %2617
      %2619 = vrot.lane.b32.xlu0 %v2536, 103
      %v2620 = vpop.permute.xlu0 %2619
      %2621 = vrot.lane.b32.xlu0 %v2533, 103
      %v2622 = vpop.permute.xlu0 %2621
      %2623 = vrot.lane.b32.xlu0 %v2545, 103
      %v2624 = vpop.permute.xlu0 %2623
      %2625 = vrot.lane.b32.xlu0 %v2546, 103
      %v2626 = vpop.permute.xlu0 %2625
      %2627 = vrot.lane.b32.xlu0 %v2547, 103
      %v2628 = vpop.permute.xlu0 %2627
      %2629 = vrot.lane.b32.xlu0 %v2544, 103
      %v2630 = vpop.permute.xlu0 %2629
      %2631 = vrot.lane.b32.xlu0 %v2556, 103
      %v2632 = vpop.permute.xlu0 %2631
      %2633 = vrot.lane.b32.xlu0 %v2557, 103
      %v2634 = vpop.permute.xlu0 %2633
      %2635 = vrot.lane.b32.xlu0 %v2558, 103
      %v2636 = vpop.permute.xlu0 %2635
      %2637 = vrot.lane.b32.xlu0 %v2555, 103
      %v2638 = vpop.permute.xlu0 %2637
      %2639 = vrot.lane.b32.xlu0 %v2567, 103
      %v2640 = vpop.permute.xlu0 %2639
      %2641 = vrot.lane.b32.xlu0 %v2568, 103
      %v2642 = vpop.permute.xlu0 %2641
      %2643 = vrot.lane.b32.xlu0 %v2569, 103
      %v2644 = vpop.permute.xlu0 %2643
      %2645 = vrot.lane.b32.xlu0 %v2566, 103
      %v2646 = vpop.permute.xlu0 %2645
      %2647 = vrot.lane.b32.xlu0 %v2578, 103
      %v2648 = vpop.permute.xlu0 %2647
      %2649 = vrot.lane.b32.xlu0 %v2579, 103
      %v2650 = vpop.permute.xlu0 %2649
      %2651 = vrot.lane.b32.xlu0 %v2580, 103
      %v2652 = vpop.permute.xlu0 %2651
      %2653 = vrot.lane.b32.xlu0 %v2577, 103
      %v2654 = vpop.permute.xlu0 %2653
      %2655 = vrot.lane.b32.xlu0 %v2589, 103
      %v2656 = vpop.permute.xlu0 %2655
      %2657 = vrot.lane.b32.xlu0 %v2590, 103
      %v2658 = vpop.permute.xlu0 %2657
      %2659 = vrot.lane.b32.xlu0 %v2591, 103
      %v2660 = vpop.permute.xlu0 %2659
      %2661 = vrot.lane.b32.xlu0 %v2588, 103
      %v2662 = vpop.permute.xlu0 %2661
      %2663 = vrot.lane.b32.xlu0 %v2600, 103
      %v2664 = vpop.permute.xlu0 %2663
      %2665 = vrot.lane.b32.xlu0 %v2601, 103
      %v2666 = vpop.permute.xlu0 %2665
      %2667 = vrot.lane.b32.xlu0 %v2602, 103
      %v2668 = vpop.permute.xlu0 %2667
      %2669 = vrot.lane.b32.xlu0 %v2599, 103
      %v2670 = vpop.permute.xlu0 %2669
      %2671 = vrot.lane.b32.xlu0 %v2611, 103
      %v2672 = vpop.permute.xlu0 %2671
      %2673 = vrot.lane.b32.xlu0 %v2612, 103
      %v2674 = vpop.permute.xlu0 %2673
      %2675 = vrot.lane.b32.xlu0 %v2613, 103
      %v2676 = vpop.permute.xlu0 %2675
      %2677 = vrot.lane.b32.xlu0 %v2610, 103
      %v2678 = vpop.permute.xlu0 %2677
      %v2679 = vsel %vm574, %v2616, %v2618
      %v2680 = vsel %vm574, %v2618, %v2620
      %v2681 = vsel %vm574, %v2620, %v2622
      %v2682 = vsel %vm574, %v2624, %v2626
      %v2683 = vsel %vm574, %v2626, %v2628
      %v2684 = vsel %vm574, %v2628, %v2630
      %v2685 = vsel %vm574, %v2632, %v2634
      %v2686 = vsel %vm574, %v2634, %v2636
      %v2687 = vsel %vm574, %v2636, %v2638
      %v2688 = vsel %vm574, %v2640, %v2642
      %v2689 = vsel %vm574, %v2642, %v2644
      %v2690 = vsel %vm574, %v2644, %v2646
      %v2691 = vsel %vm574, %v2648, %v2650
      %v2692 = vsel %vm574, %v2650, %v2652
      %v2693 = vsel %vm574, %v2652, %v2654
      %v2694 = vsel %vm574, %v2656, %v2658
      %v2695 = vsel %vm574, %v2658, %v2660
      %v2696 = vsel %vm574, %v2660, %v2662
      %v2697 = vsel %vm574, %v2664, %v2666
      %v2698 = vsel %vm574, %v2666, %v2668
      %v2699 = vsel %vm574, %v2668, %v2670
      %v2700 = vsel %vm574, %v2672, %v2674
      %v2701 = vsel %vm574, %v2674, %v2676
      %v2702 = vsel %vm574, %v2676, %v2678
      %v2731 = vsel %vm1149, %v2614, 0
      %2733 = vmatprep.subr.mxu0 0.0
      %2734 = vmatpush1.msra.mxu0 0.0
      %2735 = vmatprep.subr.mxu0 0.0
      %2736 = vmatpush1.msra.mxu0 0.0
      %2737 = vmatprep.subr.mxu0 0.0
      %2738 = vmatpush1.msra.mxu0 0.0
      %2739 = vmatprep.subr.mxu0 0.0
      %2740 = vmatpush1.msra.mxu0 0.0
      %2741 = vmatprep.subr.mxu0 0.0
      %2742 = vmatpush1.msra.mxu0 0.0
      %2743 = vmatprep.subr.mxu0 0.0
      %2744 = vmatpush1.msra.mxu0 0.0
      %2745 = vmatprep.subr.mxu0 0.0
      %2746 = vmatpush1.msra.mxu0 0.0
      %2747 = vmatprep.subr.mxu0 %v2701
      %2748 = vmatpush1.msra.mxu0 %v2700
      %2749 = vmatprep.subr.mxu0 %v2698
      %2750 = vmatpush1.msra.mxu0 %v2697
      %2751 = vmatprep.subr.mxu0 %v2695
      %2752 = vmatpush1.msra.mxu0 %v2694
      %2753 = vmatprep.subr.mxu0 %v2692
      %2754 = vmatpush1.msra.mxu0 %v2691
      %2755 = vmatprep.subr.mxu0 %v2689
      %2756 = vmatpush1.msra.mxu0 %v2688
      %2757 = vmatprep.subr.mxu0 %v2686
      %2758 = vmatpush1.msra.mxu0 %v2685
      %2759 = vmatprep.subr.mxu0 %v2683
      %2760 = vmatpush1.msra.mxu0 %v2682
      %2761 = vmatprep.subr.mxu0 %v2680
      %2762 = vmatpush1.msra.mxu0 %v2679
      %2763 = vmatprep.subr.mxu0 %v2568
      %2764 = vmatpush1.msra.mxu0 %v2567
      %2765 = vmatprep.subr.mxu0 0.0
      %2766 = vmatpush2.msra.mxu0 0.0
      %2767 = vmatprep.subr.mxu0 0.0
      %2768 = vmatpush2.msra.mxu0 0.0
      %2769 = vmatprep.subr.mxu0 0.0
      %2770 = vmatpush2.msra.mxu0 0.0
      %2771 = vmatprep.subr.mxu0 0.0
      %2772 = vmatpush2.msra.mxu0 0.0
      %2773 = vmatprep.subr.mxu0 0.0
      %2774 = vmatpush2.msra.mxu0 0.0
      %2775 = vmatprep.subr.mxu0 0.0
      %2776 = vmatpush2.msra.mxu0 0.0
      %2777 = vmatprep.subr.mxu0 0.0
      %2778 = vmatpush2.msra.mxu0 0.0
      %2779 = vmatprep.subr.mxu0 0.0
      %2780 = vmatpush2.msra.mxu0 0.0
      %2781 = vmatprep.subr.mxu0 0.0
      %2782 = vmatpush2.msra.mxu0 0.0
      %2783 = vmatprep.subr.mxu0 0.0
      %2784 = vmatpush2.msra.mxu0 0.0
      %2785 = vmatprep.subr.mxu0 0.0
      %2786 = vmatpush2.msra.mxu0 0.0
      %2787 = vmatprep.subr.mxu0 0.0
      %2788 = vmatpush2.msra.mxu0 0.0
      %2789 = vmatprep.subr.mxu0 0.0
      %2790 = vmatpush2.msra.mxu0 0.0
      %2791 = vmatprep.subr.mxu0 0.0
      %2792 = vmatpush2.msra.mxu0 0.0
      %2793 = vmatprep.subr.mxu0 0.0
      %2794 = vmatpush2.msra.mxu0 0.0
      %2795 = vmatprep.subr.mxu0 0.0
      %2796 = vmatpush2.msra.mxu0 0.0
      %2797 = vmatprep.mubr.f32.mxu0 0.0
      %2798 = vmatmul.mubr.f32.gmra.mxu0 %v2731
      %v2799 = vpop.f32.mrf.mxu0
      %v2800 = vadd.f32 0.0, %v2799
      %v2801 = vpop.f32.mrf.mxu0
      %v2802 = vadd.f32 0.0, %v2801
      %2803 = vdwg.mxu0
      %2804 = vmatprep.subr.mxu0 0.0
      %2805 = vmatpush1.msra.mxu0 0.0
      %2806 = vmatprep.subr.mxu0 0.0
      %2807 = vmatpush1.msra.mxu0 0.0
      %2808 = vmatprep.subr.mxu0 0.0
      %2809 = vmatpush1.msra.mxu0 0.0
      %2810 = vmatprep.subr.mxu0 0.0
      %2811 = vmatpush1.msra.mxu0 0.0
      %2812 = vmatprep.subr.mxu0 0.0
      %2813 = vmatpush1.msra.mxu0 0.0
      %2814 = vmatprep.subr.mxu0 0.0
      %2815 = vmatpush1.msra.mxu0 0.0
      %2816 = vmatprep.subr.mxu0 0.0
      %2817 = vmatpush1.msra.mxu0 0.0
      %2818 = vmatprep.subr.mxu0 0.0
      %2819 = vmatpush1.msra.mxu0 %v2702
      %2820 = vmatprep.subr.mxu0 0.0
      %2821 = vmatpush1.msra.mxu0 %v2699
      %2822 = vmatprep.subr.mxu0 0.0
      %2823 = vmatpush1.msra.mxu0 %v2696
      %2824 = vmatprep.subr.mxu0 0.0
      %2825 = vmatpush1.msra.mxu0 %v2693
      %2826 = vmatprep.subr.mxu0 0.0
      %2827 = vmatpush1.msra.mxu0 %v2690
      %2828 = vmatprep.subr.mxu0 0.0
      %2829 = vmatpush1.msra.mxu0 %v2687
      %2830 = vmatprep.subr.mxu0 0.0
      %2831 = vmatpush1.msra.mxu0 %v2684
      %2832 = vmatprep.subr.mxu0 0.0
      %2833 = vmatpush1.msra.mxu0 %v2681
      %2834 = vmatprep.subr.mxu0 0.0
      %2835 = vmatpush1.msra.mxu0 %v2569
      %2836 = vmatprep.subr.mxu0 0.0
      %2837 = vmatpush2.msra.mxu0 0.0
      %2838 = vmatprep.subr.mxu0 0.0
      %2839 = vmatpush2.msra.mxu0 0.0
      %2840 = vmatprep.subr.mxu0 0.0
      %2841 = vmatpush2.msra.mxu0 0.0
      %2842 = vmatprep.subr.mxu0 0.0
      %2843 = vmatpush2.msra.mxu0 0.0
      %2844 = vmatprep.subr.mxu0 0.0
      %2845 = vmatpush2.msra.mxu0 0.0
      %2846 = vmatprep.subr.mxu0 0.0
      %2847 = vmatpush2.msra.mxu0 0.0
      %2848 = vmatprep.subr.mxu0 0.0
      %2849 = vmatpush2.msra.mxu0 0.0
      %2850 = vmatprep.subr.mxu0 0.0
      %2851 = vmatpush2.msra.mxu0 0.0
      %2852 = vmatprep.subr.mxu0 0.0
      %2853 = vmatpush2.msra.mxu0 0.0
      %2854 = vmatprep.subr.mxu0 0.0
      %2855 = vmatpush2.msra.mxu0 0.0
      %2856 = vmatprep.subr.mxu0 0.0
      %2857 = vmatpush2.msra.mxu0 0.0
      %2858 = vmatprep.subr.mxu0 0.0
      %2859 = vmatpush2.msra.mxu0 0.0
      %2860 = vmatprep.subr.mxu0 0.0
      %2861 = vmatpush2.msra.mxu0 0.0
      %2862 = vmatprep.subr.mxu0 0.0
      %2863 = vmatpush2.msra.mxu0 0.0
      %2864 = vmatprep.subr.mxu0 0.0
      %2865 = vmatpush2.msra.mxu0 0.0
      %2866 = vmatprep.subr.mxu0 0.0
      %2867 = vmatpush2.msra.mxu0 0.0
      %2868 = vmatprep.mubr.f32.mxu0 0.0
      %2869 = vmatmul.mubr.f32.gmra.mxu0 %v2731
      %v2870 = vpop.f32.mrf.mxu0
      %v2871 = vadd.f32 0.0, %v2870
      %v2872 = vpop.f32.mrf.mxu0
      %2873 = vdwg.mxu0
      %v2874 = vmax.f32 %v2800, 0.0
      %v2875 = vmax.f32 %v2802, 0.0
      %v2876 = vmax.f32 %v2871, 0.0
      %v2877 = vmul.f32 %v2874, %v901
      %v2878 = vmul.f32 %v2875, %v905
      %v2879 = vmul.f32 %v2876, %v909
      %v2880 = vadd.f32 %v2090, %v2877
      %v2881 = vadd.f32 %v2091, %v2878
      %v2882 = vadd.f32 %v2092, %v2879
      %s2883 = scalar_lea.vmem %s462, 36
      %v2884 = vld [vmem:[%s2883] sm:$0xff]
      %v2885 = vld [vmem:[%s2883 + $0x8] sm:$0xf]
      %v2888 = vcombine.high %v2884, %v2884
      %2889 = vrot.lane.b32.xlu0 %v2884, 48
      %v2890 = vpop.permute.xlu0 %2889
      %2891 = vrot.lane.b32.xlu0 %v2888, 48
      %v2892 = vpop.permute.xlu0 %2891
      %2893 = vrot.lane.b32.xlu0 %v2885, 48
      %v2894 = vpop.permute.xlu0 %2893
      %v2895 = vsel %vm493, %v2890, %v2892
      %v2896 = vsel %vm493, %v2892, %v2894
      %2901 = vst.msk [vmem:[#allocation2] sm:$0xf] %vm500, %v2890
      %2902 = vst [vmem:[#allocation2 + $0x8] sm:$0xf] %v2895
      %2903 = vst [vmem:[#allocation2 + $0x10] sm:$0xf] %v2896
      %2904 = vst.msk [vmem:[#allocation2 + $0x18] sm:$0xf] %vm504, %v2894
      %v2905 = vld [vmem:[#allocation2] sm:$0xf]
      %v2906 = vld [vmem:[#allocation2 + $0x8] sm:$0xf]
      %v2907 = vld [vmem:[#allocation2 + $0x10] sm:$0xf]
      %v2908 = vld [vmem:[#allocation2 + $0x18] sm:$0xf]
      %v2913 = vrot.slane %v2905, 4
      %v2914 = vrot.slane %v2906, 4
      %v2915 = vrot.slane %v2907, 4
      %v2916 = vrot.slane %v2908, 4
      %2917 = vrot.lane.b32.xlu0 %v2913, 127
      %v2918 = vpop.permute.xlu0 %2917
      %2919 = vrot.lane.b32.xlu0 %v2914, 127
      %v2920 = vpop.permute.xlu0 %2919
      %2921 = vrot.lane.b32.xlu0 %v2915, 127
      %v2922 = vpop.permute.xlu0 %2921
      %2923 = vrot.lane.b32.xlu0 %v2916, 127
      %v2924 = vpop.permute.xlu0 %2923
      %v2925 = vsel %vm526, %v2918, %v2920
      %v2926 = vsel %vm526, %v2920, %v2922
      %v2927 = vsel %vm526, %v2922, %v2924
      %2931 = vrot.lane.b32.xlu0 %v2905, 126
      %v2932 = vpop.permute.xlu0 %2931
      %2933 = vrot.lane.b32.xlu0 %v2906, 126
      %v2934 = vpop.permute.xlu0 %2933
      %2935 = vrot.lane.b32.xlu0 %v2907, 126
      %v2936 = vpop.permute.xlu0 %2935
      %2937 = vrot.lane.b32.xlu0 %v2908, 126
      %v2938 = vpop.permute.xlu0 %2937
      %v2939 = vsel %vm542, %v2932, %v2934
      %v2940 = vsel %vm542, %v2934, %v2936
      %v2941 = vsel %vm542, %v2936, %v2938
      %2945 = vrot.lane.b32.xlu0 %v2913, 125
      %v2946 = vpop.permute.xlu0 %2945
      %2947 = vrot.lane.b32.xlu0 %v2914, 125
      %v2948 = vpop.permute.xlu0 %2947
      %2949 = vrot.lane.b32.xlu0 %v2915, 125
      %v2950 = vpop.permute.xlu0 %2949
      %2951 = vrot.lane.b32.xlu0 %v2916, 125
      %v2952 = vpop.permute.xlu0 %2951
      %vm2953 = vcmask 1022976
      %v2954 = vsel %vm2953, %v2946, %v2948
      %v2955 = vsel %vm2953, %v2948, %v2950
      %v2956 = vsel %vm2953, %v2950, %v2952
      %2960 = vrot.lane.b32.xlu0 %v2905, 124
      %v2961 = vpop.permute.xlu0 %2960
      %2962 = vrot.lane.b32.xlu0 %v2906, 124
      %v2963 = vpop.permute.xlu0 %2962
      %2964 = vrot.lane.b32.xlu0 %v2907, 124
      %v2965 = vpop.permute.xlu0 %2964
      %2966 = vrot.lane.b32.xlu0 %v2908, 124
      %v2967 = vpop.permute.xlu0 %2966
      %vm2968 = vcmask 1014784
      %v2969 = vsel %vm2968, %v2961, %v2963
      %v2970 = vsel %vm2968, %v2963, %v2965
      %v2971 = vsel %vm2968, %v2965, %v2967
      %2975 = vrot.lane.b32.xlu0 %v2913, 104
      %v2976 = vpop.permute.xlu0 %2975
      %2977 = vrot.lane.b32.xlu0 %v2914, 104
      %v2978 = vpop.permute.xlu0 %2977
      %2979 = vrot.lane.b32.xlu0 %v2915, 104
      %v2980 = vpop.permute.xlu0 %2979
      %2981 = vrot.lane.b32.xlu0 %v2916, 104
      %v2982 = vpop.permute.xlu0 %2981
      %v2983 = vsel %vm558, %v2976, %v2978
      %v2984 = vsel %vm558, %v2978, %v2980
      %v2985 = vsel %vm558, %v2980, %v2982
      %2989 = vrot.lane.b32.xlu0 %v2905, 103
      %v2990 = vpop.permute.xlu0 %2989
      %2991 = vrot.lane.b32.xlu0 %v2906, 103
      %v2992 = vpop.permute.xlu0 %2991
      %2993 = vrot.lane.b32.xlu0 %v2907, 103
      %v2994 = vpop.permute.xlu0 %2993
      %2995 = vrot.lane.b32.xlu0 %v2908, 103
      %v2996 = vpop.permute.xlu0 %2995
      %v2997 = vsel %vm574, %v2990, %v2992
      %v2998 = vsel %vm574, %v2992, %v2994
      %v2999 = vsel %vm574, %v2994, %v2996
      %3003 = vrot.lane.b32.xlu0 %v2913, 102
      %v3004 = vpop.permute.xlu0 %3003
      %3005 = vrot.lane.b32.xlu0 %v2914, 102
      %v3006 = vpop.permute.xlu0 %3005
      %3007 = vrot.lane.b32.xlu0 %v2915, 102
      %v3008 = vpop.permute.xlu0 %3007
      %3009 = vrot.lane.b32.xlu0 %v2916, 102
      %v3010 = vpop.permute.xlu0 %3009
      %v3011 = vsel %vm590, %v3004, %v3006
      %v3012 = vsel %vm590, %v3006, %v3008
      %v3013 = vsel %vm590, %v3008, %v3010
      %3017 = vrot.lane.b32.xlu0 %v2905, 101
      %v3018 = vpop.permute.xlu0 %3017
      %3019 = vrot.lane.b32.xlu0 %v2906, 101
      %v3020 = vpop.permute.xlu0 %3019
      %3021 = vrot.lane.b32.xlu0 %v2907, 101
      %v3022 = vpop.permute.xlu0 %3021
      %3023 = vrot.lane.b32.xlu0 %v2908, 101
      %v3024 = vpop.permute.xlu0 %3023
      %vm3025 = vcmask 826368
      %v3026 = vsel %vm3025, %v3018, %v3020
      %v3027 = vsel %vm3025, %v3020, %v3022
      %v3028 = vsel %vm3025, %v3022, %v3024
      %3032 = vrot.lane.b32.xlu0 %v2913, 100
      %v3033 = vpop.permute.xlu0 %3032
      %3034 = vrot.lane.b32.xlu0 %v2914, 100
      %v3035 = vpop.permute.xlu0 %3034
      %3036 = vrot.lane.b32.xlu0 %v2915, 100
      %v3037 = vpop.permute.xlu0 %3036
      %3038 = vrot.lane.b32.xlu0 %v2916, 100
      %v3039 = vpop.permute.xlu0 %3038
      %v3040 = vsel %vm471, %v3033, %v3035
      %v3041 = vsel %vm471, %v3035, %v3037
      %v3042 = vsel %vm471, %v3037, %v3039
      %3046 = vrot.lane.b32.xlu0 %v2905, 80
      %v3047 = vpop.permute.xlu0 %3046
      %3048 = vrot.lane.b32.xlu0 %v2906, 80
      %v3049 = vpop.permute.xlu0 %3048
      %3050 = vrot.lane.b32.xlu0 %v2907, 80
      %v3051 = vpop.permute.xlu0 %3050
      %3052 = vrot.lane.b32.xlu0 %v2908, 80
      %v3053 = vpop.permute.xlu0 %3052
      %v3054 = vsel %vm606, %v3047, %v3049
      %v3055 = vsel %vm606, %v3049, %v3051
      %v3056 = vsel %vm606, %v3051, %v3053
      %3060 = vrot.lane.b32.xlu0 %v2913, 79
      %v3061 = vpop.permute.xlu0 %3060
      %3062 = vrot.lane.b32.xlu0 %v2914, 79
      %v3063 = vpop.permute.xlu0 %3062
      %3064 = vrot.lane.b32.xlu0 %v2915, 79
      %v3065 = vpop.permute.xlu0 %3064
      %3066 = vrot.lane.b32.xlu0 %v2916, 79
      %v3067 = vpop.permute.xlu0 %3066
      %v3068 = vsel %vm622, %v3061, %v3063
      %v3069 = vsel %vm622, %v3063, %v3065
      %v3070 = vsel %vm622, %v3065, %v3067
      %3074 = vrot.lane.b32.xlu0 %v2905, 78
      %v3075 = vpop.permute.xlu0 %3074
      %3076 = vrot.lane.b32.xlu0 %v2906, 78
      %v3077 = vpop.permute.xlu0 %3076
      %3078 = vrot.lane.b32.xlu0 %v2907, 78
      %v3079 = vpop.permute.xlu0 %3078
      %3080 = vrot.lane.b32.xlu0 %v2908, 78
      %v3081 = vpop.permute.xlu0 %3080
      %v3082 = vsel %vm638, %v3075, %v3077
      %v3083 = vsel %vm638, %v3077, %v3079
      %v3084 = vsel %vm638, %v3079, %v3081
      %3088 = vrot.lane.b32.xlu0 %v2913, 77
      %v3089 = vpop.permute.xlu0 %3088
      %3090 = vrot.lane.b32.xlu0 %v2914, 77
      %v3091 = vpop.permute.xlu0 %3090
      %3092 = vrot.lane.b32.xlu0 %v2915, 77
      %v3093 = vpop.permute.xlu0 %3092
      %3094 = vrot.lane.b32.xlu0 %v2916, 77
      %v3095 = vpop.permute.xlu0 %3094
      %vm3096 = vcmask 629760
      %v3097 = vsel %vm3096, %v3089, %v3091
      %v3098 = vsel %vm3096, %v3091, %v3093
      %v3099 = vsel %vm3096, %v3093, %v3095
      %3103 = vrot.lane.b32.xlu0 %v2905, 76
      %v3104 = vpop.permute.xlu0 %3103
      %3105 = vrot.lane.b32.xlu0 %v2906, 76
      %v3106 = vpop.permute.xlu0 %3105
      %3107 = vrot.lane.b32.xlu0 %v2907, 76
      %v3108 = vpop.permute.xlu0 %3107
      %3109 = vrot.lane.b32.xlu0 %v2908, 76
      %v3110 = vpop.permute.xlu0 %3109
      %vm3111 = vcmask 621568
      %v3112 = vsel %vm3111, %v3104, %v3106
      %v3113 = vsel %vm3111, %v3106, %v3108
      %v3114 = vsel %vm3111, %v3108, %v3110
      %3118 = vrot.lane.b32.xlu0 %v2913, 56
      %v3119 = vpop.permute.xlu0 %3118
      %3120 = vrot.lane.b32.xlu0 %v2914, 56
      %v3121 = vpop.permute.xlu0 %3120
      %3122 = vrot.lane.b32.xlu0 %v2915, 56
      %v3123 = vpop.permute.xlu0 %3122
      %3124 = vrot.lane.b32.xlu0 %v2916, 56
      %v3125 = vpop.permute.xlu0 %3124
      %vm3126 = vcmask 457728
      %v3127 = vsel %vm3126, %v3119, %v3121
      %v3128 = vsel %vm3126, %v3121, %v3123
      %v3129 = vsel %vm3126, %v3123, %v3125
      %v3133 = vsel %vm642, %v2905, %v2925
      %v3134 = vsel %vm642, %v2906, %v2926
      %v3135 = vsel %vm642, %v2907, %v2927
      %v3136 = vsel %vm642, %v2939, %v2954
      %v3137 = vsel %vm642, %v2940, %v2955
      %v3138 = vsel %vm642, %v2941, %v2956
      %v3139 = vsel %vm642, %v2969, %v2983
      %v3140 = vsel %vm642, %v2970, %v2984
      %v3141 = vsel %vm642, %v2971, %v2985
      %v3142 = vsel %vm642, %v2997, %v3011
      %v3143 = vsel %vm642, %v2998, %v3012
      %v3144 = vsel %vm642, %v2999, %v3013
      %v3145 = vsel %vm642, %v3026, %v3040
      %v3146 = vsel %vm642, %v3027, %v3041
      %v3147 = vsel %vm642, %v3028, %v3042
      %v3148 = vsel %vm642, %v3054, %v3068
      %v3149 = vsel %vm642, %v3055, %v3069
      %v3150 = vsel %vm642, %v3056, %v3070
      %v3151 = vsel %vm642, %v3082, %v3097
      %v3152 = vsel %vm642, %v3083, %v3098
      %v3153 = vsel %vm642, %v3084, %v3099
      %v3154 = vsel %vm642, %v3112, %v3127
      %v3155 = vsel %vm642, %v3113, %v3128
      %v3156 = vsel %vm642, %v3114, %v3129
      %3160 = vrot.lane.b32.xlu0 %v2905, 105
      %v3161 = vpop.permute.xlu0 %3160
      %3162 = vrot.lane.b32.xlu0 %v2906, 105
      %v3163 = vpop.permute.xlu0 %3162
      %3164 = vrot.lane.b32.xlu0 %v2907, 105
      %v3165 = vpop.permute.xlu0 %3164
      %3166 = vrot.lane.b32.xlu0 %v2908, 105
      %v3167 = vpop.permute.xlu0 %3166
      %vm3168 = vcmask 859136
      %v3169 = vsel %vm3168, %v3161, %v3163
      %v3170 = vsel %vm3168, %v3163, %v3165
      %v3171 = vsel %vm3168, %v3165, %v3167
      %v3179 = vsel %vm642, %v2908, %v2924
      %v3180 = vsel %vm642, %v2938, %v2952
      %v3181 = vsel %vm642, %v3169, %v2983
      %v3182 = vsel %vm642, %v3170, %v2984
      %v3183 = vsel %vm642, %v3171, %v2985
      %v3184 = vsel %vm642, %v3167, %v2982
      %v3185 = vsel %vm642, %v2996, %v3010
      %3202 = vrot.lane.b32.xlu0 %v3133, 55
      %v3203 = vpop.permute.xlu0 %3202
      %3204 = vrot.lane.b32.xlu0 %v3134, 55
      %v3205 = vpop.permute.xlu0 %3204
      %3206 = vrot.lane.b32.xlu0 %v3135, 55
      %v3207 = vpop.permute.xlu0 %3206
      %3208 = vrot.lane.b32.xlu0 %v3179, 55
      %v3209 = vpop.permute.xlu0 %3208
      %3210 = vrot.lane.b32.xlu0 %v3136, 55
      %v3211 = vpop.permute.xlu0 %3210
      %3212 = vrot.lane.b32.xlu0 %v3137, 55
      %v3213 = vpop.permute.xlu0 %3212
      %3214 = vrot.lane.b32.xlu0 %v3138, 55
      %v3215 = vpop.permute.xlu0 %3214
      %3216 = vrot.lane.b32.xlu0 %v3180, 55
      %v3217 = vpop.permute.xlu0 %3216
      %3218 = vrot.lane.b32.xlu0 %v3181, 55
      %v3219 = vpop.permute.xlu0 %3218
      %3220 = vrot.lane.b32.xlu0 %v3182, 55
      %v3221 = vpop.permute.xlu0 %3220
      %3222 = vrot.lane.b32.xlu0 %v3183, 55
      %v3223 = vpop.permute.xlu0 %3222
      %3224 = vrot.lane.b32.xlu0 %v3184, 55
      %v3225 = vpop.permute.xlu0 %3224
      %3226 = vrot.lane.b32.xlu0 %v3142, 55
      %v3227 = vpop.permute.xlu0 %3226
      %3228 = vrot.lane.b32.xlu0 %v3143, 55
      %v3229 = vpop.permute.xlu0 %3228
      %3230 = vrot.lane.b32.xlu0 %v3144, 55
      %v3231 = vpop.permute.xlu0 %3230
      %3232 = vrot.lane.b32.xlu0 %v3185, 55
      %v3233 = vpop.permute.xlu0 %3232
      %3234 = vrot.lane.b32.xlu0 %v3026, 55
      %v3235 = vpop.permute.xlu0 %3234
      %3236 = vrot.lane.b32.xlu0 %v3027, 55
      %v3237 = vpop.permute.xlu0 %3236
      %3238 = vrot.lane.b32.xlu0 %v3028, 55
      %v3239 = vpop.permute.xlu0 %3238
      %3240 = vrot.lane.b32.xlu0 %v3024, 55
      %v3241 = vpop.permute.xlu0 %3240
      %vm3242 = vcmask 449536
      %v3243 = vsel %vm3242, %v3203, %v3205
      %v3244 = vsel %vm3242, %v3205, %v3207
      %v3245 = vsel %vm3242, %v3207, %v3209
      %v3246 = vsel %vm3242, %v3211, %v3213
      %v3247 = vsel %vm3242, %v3213, %v3215
      %v3248 = vsel %vm3242, %v3215, %v3217
      %v3249 = vsel %vm3242, %v3219, %v3221
      %v3250 = vsel %vm3242, %v3221, %v3223
      %v3251 = vsel %vm3242, %v3223, %v3225
      %v3252 = vsel %vm3242, %v3227, %v3229
      %v3253 = vsel %vm3242, %v3229, %v3231
      %v3254 = vsel %vm3242, %v3231, %v3233
      %v3255 = vsel %vm3242, %v3235, %v3237
      %v3256 = vsel %vm3242, %v3237, %v3239
      %v3257 = vsel %vm3242, %v3239, %v3241
      %v3270 = vld [vmem:[%s5] sm:$0xff]
      %v3272 = vsel %vm471, %v3270, 0
      %v3274 = vsel %vm642, %v3255, 0
      %v3276 = vsel %vm642, %v3256, 0
      %v3278 = vsel %vm642, %v3257, 0
      %3280 = vmatprep.subr.mxu0 0.0
      %3281 = vmatpush1.msra.mxu0 0.0
      %3282 = vmatprep.subr.mxu0 0.0
      %3283 = vmatpush1.msra.mxu0 0.0
      %3284 = vmatprep.subr.mxu0 0.0
      %3285 = vmatpush1.msra.mxu0 0.0
      %3286 = vmatprep.subr.mxu0 %v3276
      %3287 = vmatpush1.msra.mxu0 %v3274
      %3288 = vmatprep.subr.mxu0 %v3253
      %3289 = vmatpush1.msra.mxu0 %v3252
      %3290 = vmatprep.subr.mxu0 %v3250
      %3291 = vmatpush1.msra.mxu0 %v3249
      %3292 = vmatprep.subr.mxu0 %v3247
      %3293 = vmatpush1.msra.mxu0 %v3246
      %3294 = vmatprep.subr.mxu0 %v3244
      %3295 = vmatpush1.msra.mxu0 %v3243
      %3296 = vmatprep.subr.mxu0 %v3155
      %3297 = vmatpush1.msra.mxu0 %v3154
      %3298 = vmatprep.subr.mxu0 %v3152
      %3299 = vmatpush1.msra.mxu0 %v3151
      %3300 = vmatprep.subr.mxu0 %v3149
      %3301 = vmatpush1.msra.mxu0 %v3148
      %3302 = vmatprep.subr.mxu0 %v3146
      %3303 = vmatpush1.msra.mxu0 %v3145
      %3304 = vmatprep.subr.mxu0 %v3143
      %3305 = vmatpush1.msra.mxu0 %v3142
      %3306 = vmatprep.subr.mxu0 %v3140
      %3307 = vmatpush1.msra.mxu0 %v3139
      %3308 = vmatprep.subr.mxu0 %v3137
      %3309 = vmatpush1.msra.mxu0 %v3136
      %3310 = vmatprep.subr.mxu0 %v3134
      %3311 = vmatpush1.msra.mxu0 %v3133
      %3312 = vmatprep.subr.mxu0 0.0
      %3313 = vmatpush2.msra.mxu0 0.0
      %3314 = vmatprep.subr.mxu0 0.0
      %3315 = vmatpush2.msra.mxu0 0.0
      %3316 = vmatprep.subr.mxu0 0.0
      %3317 = vmatpush2.msra.mxu0 0.0
      %3318 = vmatprep.subr.mxu0 0.0
      %3319 = vmatpush2.msra.mxu0 0.0
      %3320 = vmatprep.subr.mxu0 0.0
      %3321 = vmatpush2.msra.mxu0 0.0
      %3322 = vmatprep.subr.mxu0 0.0
      %3323 = vmatpush2.msra.mxu0 0.0
      %3324 = vmatprep.subr.mxu0 0.0
      %3325 = vmatpush2.msra.mxu0 0.0
      %3326 = vmatprep.subr.mxu0 0.0
      %3327 = vmatpush2.msra.mxu0 0.0
      %3328 = vmatprep.subr.mxu0 0.0
      %3329 = vmatpush2.msra.mxu0 0.0
      %3330 = vmatprep.subr.mxu0 0.0
      %3331 = vmatpush2.msra.mxu0 0.0
      %3332 = vmatprep.subr.mxu0 0.0
      %3333 = vmatpush2.msra.mxu0 0.0
      %3334 = vmatprep.subr.mxu0 0.0
      %3335 = vmatpush2.msra.mxu0 0.0
      %3336 = vmatprep.subr.mxu0 0.0
      %3337 = vmatpush2.msra.mxu0 0.0
      %3338 = vmatprep.subr.mxu0 0.0
      %3339 = vmatpush2.msra.mxu0 0.0
      %3340 = vmatprep.subr.mxu0 0.0
      %3341 = vmatpush2.msra.mxu0 0.0
      %3342 = vmatprep.subr.mxu0 0.0
      %3343 = vmatpush2.msra.mxu0 0.0
      %3344 = vmatprep.mubr.f32.mxu0 0.0
      %3345 = vmatmul.mubr.f32.gmra.mxu0 %v3272
      %v3346 = vpop.f32.mrf.mxu0
      %v3347 = vadd.f32 0.0, %v3346
      %v3348 = vpop.f32.mrf.mxu0
      %v3349 = vadd.f32 0.0, %v3348
      %3350 = vdwg.mxu0
      %3351 = vmatprep.subr.mxu0 0.0
      %3352 = vmatpush1.msra.mxu0 0.0
      %3353 = vmatprep.subr.mxu0 0.0
      %3354 = vmatpush1.msra.mxu0 0.0
      %3355 = vmatprep.subr.mxu0 0.0
      %3356 = vmatpush1.msra.mxu0 0.0
      %3357 = vmatprep.subr.mxu0 0.0
      %3358 = vmatpush1.msra.mxu0 %v3278
      %3359 = vmatprep.subr.mxu0 0.0
      %3360 = vmatpush1.msra.mxu0 %v3254
      %3361 = vmatprep.subr.mxu0 0.0
      %3362 = vmatpush1.msra.mxu0 %v3251
      %3363 = vmatprep.subr.mxu0 0.0
      %3364 = vmatpush1.msra.mxu0 %v3248
      %3365 = vmatprep.subr.mxu0 0.0
      %3366 = vmatpush1.msra.mxu0 %v3245
      %3367 = vmatprep.subr.mxu0 0.0
      %3368 = vmatpush1.msra.mxu0 %v3156
      %3369 = vmatprep.subr.mxu0 0.0
      %3370 = vmatpush1.msra.mxu0 %v3153
      %3371 = vmatprep.subr.mxu0 0.0
      %3372 = vmatpush1.msra.mxu0 %v3150
      %3373 = vmatprep.subr.mxu0 0.0
      %3374 = vmatpush1.msra.mxu0 %v3147
      %3375 = vmatprep.subr.mxu0 0.0
      %3376 = vmatpush1.msra.mxu0 %v3144
      %3377 = vmatprep.subr.mxu0 0.0
      %3378 = vmatpush1.msra.mxu0 %v3141
      %3379 = vmatprep.subr.mxu0 0.0
      %3380 = vmatpush1.msra.mxu0 %v3138
      %3381 = vmatprep.subr.mxu0 0.0
      %3382 = vmatpush1.msra.mxu0 %v3135
      %3383 = vmatprep.subr.mxu0 0.0
      %3384 = vmatpush2.msra.mxu0 0.0
      %3385 = vmatprep.subr.mxu0 0.0
      %3386 = vmatpush2.msra.mxu0 0.0
      %3387 = vmatprep.subr.mxu0 0.0
      %3388 = vmatpush2.msra.mxu0 0.0
      %3389 = vmatprep.subr.mxu0 0.0
      %3390 = vmatpush2.msra.mxu0 0.0
      %3391 = vmatprep.subr.mxu0 0.0
      %3392 = vmatpush2.msra.mxu0 0.0
      %3393 = vmatprep.subr.mxu0 0.0
      %3394 = vmatpush2.msra.mxu0 0.0
      %3395 = vmatprep.subr.mxu0 0.0
      %3396 = vmatpush2.msra.mxu0 0.0
      %3397 = vmatprep.subr.mxu0 0.0
      %3398 = vmatpush2.msra.mxu0 0.0
      %3399 = vmatprep.subr.mxu0 0.0
      %3400 = vmatpush2.msra.mxu0 0.0
      %3401 = vmatprep.subr.mxu0 0.0
      %3402 = vmatpush2.msra.mxu0 0.0
      %3403 = vmatprep.subr.mxu0 0.0
      %3404 = vmatpush2.msra.mxu0 0.0
      %3405 = vmatprep.subr.mxu0 0.0
      %3406 = vmatpush2.msra.mxu0 0.0
      %3407 = vmatprep.subr.mxu0 0.0
      %3408 = vmatpush2.msra.mxu0 0.0
      %3409 = vmatprep.subr.mxu0 0.0
      %3410 = vmatpush2.msra.mxu0 0.0
      %3411 = vmatprep.subr.mxu0 0.0
      %3412 = vmatpush2.msra.mxu0 0.0
      %3413 = vmatprep.subr.mxu0 0.0
      %3414 = vmatpush2.msra.mxu0 0.0
      %3415 = vmatprep.mubr.f32.mxu0 0.0
      %3416 = vmatmul.mubr.f32.gmra.mxu0 %v3272
      %v3417 = vpop.f32.mrf.mxu0
      %v3418 = vadd.f32 0.0, %v3417
      %v3419 = vpop.f32.mrf.mxu0
      %3420 = vdwg.mxu0
      %v3421 = vmax.f32 %v3347, 0.0
      %v3422 = vmax.f32 %v3349, 0.0
      %v3423 = vmax.f32 %v3418, 0.0
      %v3424 = vmul.f32 %v3421, %v901
      %v3425 = vmul.f32 %v3422, %v905
      %v3426 = vmul.f32 %v3423, %v909
      %3430 = vrot.lane.b32.xlu0 %v3424, 50
      %v3431 = vpop.permute.xlu0 %3430
      %3432 = vrot.lane.b32.xlu0 %v3425, 50
      %v3433 = vpop.permute.xlu0 %3432
      %3434 = vrot.lane.b32.xlu0 %v3426, 50
      %v3435 = vpop.permute.xlu0 %3434
      %v3436 = vsel %vm925, %v3431, %v3433
      %v3437 = vsel %vm925, %v3433, %v3435
      %3442 = vst.msk [vmem:[#allocation3] sm:$0xff] %vm932, %v3431
      %3443 = vst [vmem:[#allocation3 + $0x8] sm:$0xff] %v3436
      %3444 = vst [vmem:[#allocation3 + $0x10] sm:$0xff] %v3437
      %3445 = vst.msk [vmem:[#allocation3 + $0x18] sm:$0xff] %vm925, %v3435
      %v3446 = vld [vmem:[#allocation3] sm:$0xff]
      %v3447 = vld [vmem:[#allocation3 + $0x8] sm:$0xff]
      %v3448 = vld [vmem:[#allocation3 + $0x10] sm:$0xff]
      %v3449 = vld [vmem:[#allocation3 + $0x18] sm:$0xff]
      %3454 = vrot.lane.b32.xlu0 %v3446, 127
      %v3455 = vpop.permute.xlu0 %3454
      %3456 = vrot.lane.b32.xlu0 %v3447, 127
      %v3457 = vpop.permute.xlu0 %3456
      %3458 = vrot.lane.b32.xlu0 %v3448, 127
      %v3459 = vpop.permute.xlu0 %3458
      %3460 = vrot.lane.b32.xlu0 %v3449, 127
      %v3461 = vpop.permute.xlu0 %3460
      %v3462 = vsel %vm526, %v3455, %v3457
      %v3463 = vsel %vm526, %v3457, %v3459
      %v3464 = vsel %vm526, %v3459, %v3461
      %3468 = vrot.lane.b32.xlu0 %v3446, 126
      %v3469 = vpop.permute.xlu0 %3468
      %3470 = vrot.lane.b32.xlu0 %v3447, 126
      %v3471 = vpop.permute.xlu0 %3470
      %3472 = vrot.lane.b32.xlu0 %v3448, 126
      %v3473 = vpop.permute.xlu0 %3472
      %3474 = vrot.lane.b32.xlu0 %v3449, 126
      %v3475 = vpop.permute.xlu0 %3474
      %v3476 = vsel %vm542, %v3469, %v3471
      %v3477 = vsel %vm542, %v3471, %v3473
      %v3478 = vsel %vm542, %v3473, %v3475
      %3482 = vrot.lane.b32.xlu0 %v3446, 125
      %v3483 = vpop.permute.xlu0 %3482
      %3484 = vrot.lane.b32.xlu0 %v3447, 125
      %v3485 = vpop.permute.xlu0 %3484
      %3486 = vrot.lane.b32.xlu0 %v3448, 125
      %v3487 = vpop.permute.xlu0 %3486
      %3488 = vrot.lane.b32.xlu0 %v3449, 125
      %v3489 = vpop.permute.xlu0 %3488
      %v3490 = vsel %vm2953, %v3483, %v3485
      %v3491 = vsel %vm2953, %v3485, %v3487
      %v3492 = vsel %vm2953, %v3487, %v3489
      %3496 = vrot.lane.b32.xlu0 %v3446, 124
      %v3497 = vpop.permute.xlu0 %3496
      %3498 = vrot.lane.b32.xlu0 %v3447, 124
      %v3499 = vpop.permute.xlu0 %3498
      %3500 = vrot.lane.b32.xlu0 %v3448, 124
      %v3501 = vpop.permute.xlu0 %3500
      %3502 = vrot.lane.b32.xlu0 %v3449, 124
      %v3503 = vpop.permute.xlu0 %3502
      %v3504 = vsel %vm2968, %v3497, %v3499
      %v3505 = vsel %vm2968, %v3499, %v3501
      %v3506 = vsel %vm2968, %v3501, %v3503
      %3510 = vrot.lane.b32.xlu0 %v3446, 104
      %v3511 = vpop.permute.xlu0 %3510
      %3512 = vrot.lane.b32.xlu0 %v3447, 104
      %v3513 = vpop.permute.xlu0 %3512
      %3514 = vrot.lane.b32.xlu0 %v3448, 104
      %v3515 = vpop.permute.xlu0 %3514
      %3516 = vrot.lane.b32.xlu0 %v3449, 104
      %v3517 = vpop.permute.xlu0 %3516
      %v3518 = vsel %vm558, %v3511, %v3513
      %v3519 = vsel %vm558, %v3513, %v3515
      %v3520 = vsel %vm558, %v3515, %v3517
      %3524 = vrot.lane.b32.xlu0 %v3446, 103
      %v3525 = vpop.permute.xlu0 %3524
      %3526 = vrot.lane.b32.xlu0 %v3447, 103
      %v3527 = vpop.permute.xlu0 %3526
      %3528 = vrot.lane.b32.xlu0 %v3448, 103
      %v3529 = vpop.permute.xlu0 %3528
      %3530 = vrot.lane.b32.xlu0 %v3449, 103
      %v3531 = vpop.permute.xlu0 %3530
      %v3532 = vsel %vm574, %v3525, %v3527
      %v3533 = vsel %vm574, %v3527, %v3529
      %v3534 = vsel %vm574, %v3529, %v3531
      %3538 = vrot.lane.b32.xlu0 %v3446, 102
      %v3539 = vpop.permute.xlu0 %3538
      %3540 = vrot.lane.b32.xlu0 %v3447, 102
      %v3541 = vpop.permute.xlu0 %3540
      %3542 = vrot.lane.b32.xlu0 %v3448, 102
      %v3543 = vpop.permute.xlu0 %3542
      %3544 = vrot.lane.b32.xlu0 %v3449, 102
      %v3545 = vpop.permute.xlu0 %3544
      %v3546 = vsel %vm590, %v3539, %v3541
      %v3547 = vsel %vm590, %v3541, %v3543
      %v3548 = vsel %vm590, %v3543, %v3545
      %3552 = vrot.lane.b32.xlu0 %v3446, 101
      %v3553 = vpop.permute.xlu0 %3552
      %3554 = vrot.lane.b32.xlu0 %v3447, 101
      %v3555 = vpop.permute.xlu0 %3554
      %3556 = vrot.lane.b32.xlu0 %v3448, 101
      %v3557 = vpop.permute.xlu0 %3556
      %3558 = vrot.lane.b32.xlu0 %v3449, 101
      %v3559 = vpop.permute.xlu0 %3558
      %v3560 = vsel %vm3025, %v3553, %v3555
      %v3561 = vsel %vm3025, %v3555, %v3557
      %v3562 = vsel %vm3025, %v3557, %v3559
      %3566 = vrot.lane.b32.xlu0 %v3446, 100
      %v3567 = vpop.permute.xlu0 %3566
      %3568 = vrot.lane.b32.xlu0 %v3447, 100
      %v3569 = vpop.permute.xlu0 %3568
      %3570 = vrot.lane.b32.xlu0 %v3448, 100
      %v3571 = vpop.permute.xlu0 %3570
      %3572 = vrot.lane.b32.xlu0 %v3449, 100
      %v3573 = vpop.permute.xlu0 %3572
      %v3574 = vsel %vm471, %v3567, %v3569
      %v3575 = vsel %vm471, %v3569, %v3571
      %v3576 = vsel %vm471, %v3571, %v3573
      %3580 = vrot.lane.b32.xlu0 %v3446, 80
      %v3581 = vpop.permute.xlu0 %3580
      %3582 = vrot.lane.b32.xlu0 %v3447, 80
      %v3583 = vpop.permute.xlu0 %3582
      %3584 = vrot.lane.b32.xlu0 %v3448, 80
      %v3585 = vpop.permute.xlu0 %3584
      %3586 = vrot.lane.b32.xlu0 %v3449, 80
      %v3587 = vpop.permute.xlu0 %3586
      %v3588 = vsel %vm606, %v3581, %v3583
      %v3589 = vsel %vm606, %v3583, %v3585
      %v3590 = vsel %vm606, %v3585, %v3587
      %3594 = vrot.lane.b32.xlu0 %v3446, 79
      %v3595 = vpop.permute.xlu0 %3594
      %3596 = vrot.lane.b32.xlu0 %v3447, 79
      %v3597 = vpop.permute.xlu0 %3596
      %3598 = vrot.lane.b32.xlu0 %v3448, 79
      %v3599 = vpop.permute.xlu0 %3598
      %3600 = vrot.lane.b32.xlu0 %v3449, 79
      %v3601 = vpop.permute.xlu0 %3600
      %v3602 = vsel %vm622, %v3595, %v3597
      %v3603 = vsel %vm622, %v3597, %v3599
      %v3604 = vsel %vm622, %v3599, %v3601
      %3608 = vrot.lane.b32.xlu0 %v3446, 78
      %v3609 = vpop.permute.xlu0 %3608
      %3610 = vrot.lane.b32.xlu0 %v3447, 78
      %v3611 = vpop.permute.xlu0 %3610
      %3612 = vrot.lane.b32.xlu0 %v3448, 78
      %v3613 = vpop.permute.xlu0 %3612
      %3614 = vrot.lane.b32.xlu0 %v3449, 78
      %v3615 = vpop.permute.xlu0 %3614
      %v3616 = vsel %vm638, %v3609, %v3611
      %v3617 = vsel %vm638, %v3611, %v3613
      %v3618 = vsel %vm638, %v3613, %v3615
      %3622 = vrot.lane.b32.xlu0 %v3446, 77
      %v3623 = vpop.permute.xlu0 %3622
      %3624 = vrot.lane.b32.xlu0 %v3447, 77
      %v3625 = vpop.permute.xlu0 %3624
      %3626 = vrot.lane.b32.xlu0 %v3448, 77
      %v3627 = vpop.permute.xlu0 %3626
      %3628 = vrot.lane.b32.xlu0 %v3449, 77
      %v3629 = vpop.permute.xlu0 %3628
      %v3630 = vsel %vm3096, %v3623, %v3625
      %v3631 = vsel %vm3096, %v3625, %v3627
      %v3632 = vsel %vm3096, %v3627, %v3629
      %3636 = vrot.lane.b32.xlu0 %v3446, 76
      %v3637 = vpop.permute.xlu0 %3636
      %3638 = vrot.lane.b32.xlu0 %v3447, 76
      %v3639 = vpop.permute.xlu0 %3638
      %3640 = vrot.lane.b32.xlu0 %v3448, 76
      %v3641 = vpop.permute.xlu0 %3640
      %3642 = vrot.lane.b32.xlu0 %v3449, 76
      %v3643 = vpop.permute.xlu0 %3642
      %v3644 = vsel %vm3111, %v3637, %v3639
      %v3645 = vsel %vm3111, %v3639, %v3641
      %v3646 = vsel %vm3111, %v3641, %v3643
      %3650 = vrot.lane.b32.xlu0 %v3446, 56
      %v3651 = vpop.permute.xlu0 %3650
      %3652 = vrot.lane.b32.xlu0 %v3447, 56
      %v3653 = vpop.permute.xlu0 %3652
      %3654 = vrot.lane.b32.xlu0 %v3448, 56
      %v3655 = vpop.permute.xlu0 %3654
      %3656 = vrot.lane.b32.xlu0 %v3449, 56
      %v3657 = vpop.permute.xlu0 %3656
      %v3658 = vsel %vm3126, %v3651, %v3653
      %v3659 = vsel %vm3126, %v3653, %v3655
      %v3660 = vsel %vm3126, %v3655, %v3657
      %3664 = vrot.lane.b32.xlu0 %v3446, 105
      %v3665 = vpop.permute.xlu0 %3664
      %3666 = vrot.lane.b32.xlu0 %v3447, 105
      %v3667 = vpop.permute.xlu0 %3666
      %3668 = vrot.lane.b32.xlu0 %v3448, 105
      %v3669 = vpop.permute.xlu0 %3668
      %3670 = vrot.lane.b32.xlu0 %v3449, 105
      %v3671 = vpop.permute.xlu0 %3670
      %v3672 = vsel %vm3168, %v3665, %v3667
      %v3673 = vsel %vm3168, %v3667, %v3669
      %v3674 = vsel %vm3168, %v3669, %v3671
      %3675 = vrot.lane.b32.xlu0 %v3446, 55
      %v3676 = vpop.permute.xlu0 %3675
      %3677 = vrot.lane.b32.xlu0 %v3447, 55
      %v3678 = vpop.permute.xlu0 %3677
      %3679 = vrot.lane.b32.xlu0 %v3448, 55
      %v3680 = vpop.permute.xlu0 %3679
      %3681 = vrot.lane.b32.xlu0 %v3449, 55
      %v3682 = vpop.permute.xlu0 %3681
      %3683 = vrot.lane.b32.xlu0 %v3462, 55
      %v3684 = vpop.permute.xlu0 %3683
      %3685 = vrot.lane.b32.xlu0 %v3463, 55
      %v3686 = vpop.permute.xlu0 %3685
      %3687 = vrot.lane.b32.xlu0 %v3464, 55
      %v3688 = vpop.permute.xlu0 %3687
      %3689 = vrot.lane.b32.xlu0 %v3461, 55
      %v3690 = vpop.permute.xlu0 %3689
      %3691 = vrot.lane.b32.xlu0 %v3476, 55
      %v3692 = vpop.permute.xlu0 %3691
      %3693 = vrot.lane.b32.xlu0 %v3477, 55
      %v3694 = vpop.permute.xlu0 %3693
      %3695 = vrot.lane.b32.xlu0 %v3478, 55
      %v3696 = vpop.permute.xlu0 %3695
      %3697 = vrot.lane.b32.xlu0 %v3475, 55
      %v3698 = vpop.permute.xlu0 %3697
      %3699 = vrot.lane.b32.xlu0 %v3490, 55
      %v3700 = vpop.permute.xlu0 %3699
      %3701 = vrot.lane.b32.xlu0 %v3491, 55
      %v3702 = vpop.permute.xlu0 %3701
      %3703 = vrot.lane.b32.xlu0 %v3492, 55
      %v3704 = vpop.permute.xlu0 %3703
      %3705 = vrot.lane.b32.xlu0 %v3489, 55
      %v3706 = vpop.permute.xlu0 %3705
      %3707 = vrot.lane.b32.xlu0 %v3672, 55
      %v3708 = vpop.permute.xlu0 %3707
      %3709 = vrot.lane.b32.xlu0 %v3673, 55
      %v3710 = vpop.permute.xlu0 %3709
      %3711 = vrot.lane.b32.xlu0 %v3674, 55
      %v3712 = vpop.permute.xlu0 %3711
      %3713 = vrot.lane.b32.xlu0 %v3671, 55
      %v3714 = vpop.permute.xlu0 %3713
      %3715 = vrot.lane.b32.xlu0 %v3518, 55
      %v3716 = vpop.permute.xlu0 %3715
      %3717 = vrot.lane.b32.xlu0 %v3519, 55
      %v3718 = vpop.permute.xlu0 %3717
      %3719 = vrot.lane.b32.xlu0 %v3520, 55
      %v3720 = vpop.permute.xlu0 %3719
      %3721 = vrot.lane.b32.xlu0 %v3517, 55
      %v3722 = vpop.permute.xlu0 %3721
      %3723 = vrot.lane.b32.xlu0 %v3532, 55
      %v3724 = vpop.permute.xlu0 %3723
      %3725 = vrot.lane.b32.xlu0 %v3533, 55
      %v3726 = vpop.permute.xlu0 %3725
      %3727 = vrot.lane.b32.xlu0 %v3534, 55
      %v3728 = vpop.permute.xlu0 %3727
      %3729 = vrot.lane.b32.xlu0 %v3531, 55
      %v3730 = vpop.permute.xlu0 %3729
      %3731 = vrot.lane.b32.xlu0 %v3546, 55
      %v3732 = vpop.permute.xlu0 %3731
      %3733 = vrot.lane.b32.xlu0 %v3547, 55
      %v3734 = vpop.permute.xlu0 %3733
      %3735 = vrot.lane.b32.xlu0 %v3548, 55
      %v3736 = vpop.permute.xlu0 %3735
      %3737 = vrot.lane.b32.xlu0 %v3545, 55
      %v3738 = vpop.permute.xlu0 %3737
      %3739 = vrot.lane.b32.xlu0 %v3560, 55
      %v3740 = vpop.permute.xlu0 %3739
      %3741 = vrot.lane.b32.xlu0 %v3561, 55
      %v3742 = vpop.permute.xlu0 %3741
      %3743 = vrot.lane.b32.xlu0 %v3562, 55
      %v3744 = vpop.permute.xlu0 %3743
      %3745 = vrot.lane.b32.xlu0 %v3559, 55
      %v3746 = vpop.permute.xlu0 %3745
      %v3747 = vsel %vm3242, %v3676, %v3678
      %v3748 = vsel %vm3242, %v3678, %v3680
      %v3749 = vsel %vm3242, %v3680, %v3682
      %v3750 = vsel %vm3242, %v3684, %v3686
      %v3751 = vsel %vm3242, %v3686, %v3688
      %v3752 = vsel %vm3242, %v3688, %v3690
      %v3753 = vsel %vm3242, %v3692, %v3694
      %v3754 = vsel %vm3242, %v3694, %v3696
      %v3755 = vsel %vm3242, %v3696, %v3698
      %v3756 = vsel %vm3242, %v3700, %v3702
      %v3757 = vsel %vm3242, %v3702, %v3704
      %v3758 = vsel %vm3242, %v3704, %v3706
      %v3759 = vsel %vm3242, %v3708, %v3710
      %v3760 = vsel %vm3242, %v3710, %v3712
      %v3761 = vsel %vm3242, %v3712, %v3714
      %v3762 = vsel %vm3242, %v3716, %v3718
      %v3763 = vsel %vm3242, %v3718, %v3720
      %v3764 = vsel %vm3242, %v3720, %v3722
      %v3765 = vsel %vm3242, %v3724, %v3726
      %v3766 = vsel %vm3242, %v3726, %v3728
      %v3767 = vsel %vm3242, %v3728, %v3730
      %v3768 = vsel %vm3242, %v3732, %v3734
      %v3769 = vsel %vm3242, %v3734, %v3736
      %v3770 = vsel %vm3242, %v3736, %v3738
      %v3771 = vsel %vm3242, %v3740, %v3742
      %v3772 = vsel %vm3242, %v3742, %v3744
      %v3773 = vsel %vm3242, %v3744, %v3746
      %v3801 = vld [vmem:[%s10] sm:$0xff]
      %v3802 = vld [vmem:[%s10 + $0x8] sm:$0xff]
      %v3804 = vsel %vm1149, %v3802, 0
      %3806 = vmatprep.subr.mxu0 %v3659
      %3807 = vmatpush1.msra.mxu0 %v3658
      %3808 = vmatprep.subr.mxu0 %v3645
      %3809 = vmatpush1.msra.mxu0 %v3644
      %3810 = vmatprep.subr.mxu0 %v3631
      %3811 = vmatpush1.msra.mxu0 %v3630
      %3812 = vmatprep.subr.mxu0 %v3617
      %3813 = vmatpush1.msra.mxu0 %v3616
      %3814 = vmatprep.subr.mxu0 %v3603
      %3815 = vmatpush1.msra.mxu0 %v3602
      %3816 = vmatprep.subr.mxu0 %v3589
      %3817 = vmatpush1.msra.mxu0 %v3588
      %3818 = vmatprep.subr.mxu0 %v3575
      %3819 = vmatpush1.msra.mxu0 %v3574
      %3820 = vmatprep.subr.mxu0 %v3561
      %3821 = vmatpush1.msra.mxu0 %v3560
      %3822 = vmatprep.subr.mxu0 %v3547
      %3823 = vmatpush1.msra.mxu0 %v3546
      %3824 = vmatprep.subr.mxu0 %v3533
      %3825 = vmatpush1.msra.mxu0 %v3532
      %3826 = vmatprep.subr.mxu0 %v3519
      %3827 = vmatpush1.msra.mxu0 %v3518
      %3828 = vmatprep.subr.mxu0 %v3505
      %3829 = vmatpush1.msra.mxu0 %v3504
      %3830 = vmatprep.subr.mxu0 %v3491
      %3831 = vmatpush1.msra.mxu0 %v3490
      %3832 = vmatprep.subr.mxu0 %v3477
      %3833 = vmatpush1.msra.mxu0 %v3476
      %3834 = vmatprep.subr.mxu0 %v3463
      %3835 = vmatpush1.msra.mxu0 %v3462
      %3836 = vmatprep.subr.mxu0 %v3447
      %3837 = vmatpush1.msra.mxu0 %v3446
      %3838 = vmatprep.subr.mxu0 0.0
      %3839 = vmatpush2.msra.mxu0 0.0
      %3840 = vmatprep.subr.mxu0 0.0
      %3841 = vmatpush2.msra.mxu0 0.0
      %3842 = vmatprep.subr.mxu0 0.0
      %3843 = vmatpush2.msra.mxu0 0.0
      %3844 = vmatprep.subr.mxu0 0.0
      %3845 = vmatpush2.msra.mxu0 0.0
      %3846 = vmatprep.subr.mxu0 0.0
      %3847 = vmatpush2.msra.mxu0 0.0
      %3848 = vmatprep.subr.mxu0 0.0
      %3849 = vmatpush2.msra.mxu0 0.0
      %3850 = vmatprep.subr.mxu0 0.0
      %3851 = vmatpush2.msra.mxu0 0.0
      %3852 = vmatprep.subr.mxu0 %v3772
      %3853 = vmatpush2.msra.mxu0 %v3771
      %3854 = vmatprep.subr.mxu0 %v3769
      %3855 = vmatpush2.msra.mxu0 %v3768
      %3856 = vmatprep.subr.mxu0 %v3766
      %3857 = vmatpush2.msra.mxu0 %v3765
      %3858 = vmatprep.subr.mxu0 %v3763
      %3859 = vmatpush2.msra.mxu0 %v3762
      %3860 = vmatprep.subr.mxu0 %v3760
      %3861 = vmatpush2.msra.mxu0 %v3759
      %3862 = vmatprep.subr.mxu0 %v3757
      %3863 = vmatpush2.msra.mxu0 %v3756
      %3864 = vmatprep.subr.mxu0 %v3754
      %3865 = vmatpush2.msra.mxu0 %v3753
      %3866 = vmatprep.subr.mxu0 %v3751
      %3867 = vmatpush2.msra.mxu0 %v3750
      %3868 = vmatprep.subr.mxu0 %v3748
      %3869 = vmatpush2.msra.mxu0 %v3747
      %3870 = vmatprep.mubr.f32.mxu0 %v3804
      %3871 = vmatmul.mubr.f32.gmra.mxu0 %v3801
      %v3872 = vpop.f32.mrf.mxu0
      %v3873 = vadd.f32 0.0, %v3872
      %v3874 = vpop.f32.mrf.mxu0
      %v3875 = vadd.f32 0.0, %v3874
      %3876 = vdwg.mxu0
      %3877 = vmatprep.subr.mxu0 0.0
      %3878 = vmatpush1.msra.mxu0 %v3660
      %3879 = vmatprep.subr.mxu0 0.0
      %3880 = vmatpush1.msra.mxu0 %v3646
      %3881 = vmatprep.subr.mxu0 0.0
      %3882 = vmatpush1.msra.mxu0 %v3632
      %3883 = vmatprep.subr.mxu0 0.0
      %3884 = vmatpush1.msra.mxu0 %v3618
      %3885 = vmatprep.subr.mxu0 0.0
      %3886 = vmatpush1.msra.mxu0 %v3604
      %3887 = vmatprep.subr.mxu0 0.0
      %3888 = vmatpush1.msra.mxu0 %v3590
      %3889 = vmatprep.subr.mxu0 0.0
      %3890 = vmatpush1.msra.mxu0 %v3576
      %3891 = vmatprep.subr.mxu0 0.0
      %3892 = vmatpush1.msra.mxu0 %v3562
      %3893 = vmatprep.subr.mxu0 0.0
      %3894 = vmatpush1.msra.mxu0 %v3548
      %3895 = vmatprep.subr.mxu0 0.0
      %3896 = vmatpush1.msra.mxu0 %v3534
      %3897 = vmatprep.subr.mxu0 0.0
      %3898 = vmatpush1.msra.mxu0 %v3520
      %3899 = vmatprep.subr.mxu0 0.0
      %3900 = vmatpush1.msra.mxu0 %v3506
      %3901 = vmatprep.subr.mxu0 0.0
      %3902 = vmatpush1.msra.mxu0 %v3492
      %3903 = vmatprep.subr.mxu0 0.0
      %3904 = vmatpush1.msra.mxu0 %v3478
      %3905 = vmatprep.subr.mxu0 0.0
      %3906 = vmatpush1.msra.mxu0 %v3464
      %3907 = vmatprep.subr.mxu0 0.0
      %3908 = vmatpush1.msra.mxu0 %v3448
      %3909 = vmatprep.subr.mxu0 0.0
      %3910 = vmatpush2.msra.mxu0 0.0
      %3911 = vmatprep.subr.mxu0 0.0
      %3912 = vmatpush2.msra.mxu0 0.0
      %3913 = vmatprep.subr.mxu0 0.0
      %3914 = vmatpush2.msra.mxu0 0.0
      %3915 = vmatprep.subr.mxu0 0.0
      %3916 = vmatpush2.msra.mxu0 0.0
      %3917 = vmatprep.subr.mxu0 0.0
      %3918 = vmatpush2.msra.mxu0 0.0
      %3919 = vmatprep.subr.mxu0 0.0
      %3920 = vmatpush2.msra.mxu0 0.0
      %3921 = vmatprep.subr.mxu0 0.0
      %3922 = vmatpush2.msra.mxu0 0.0
      %3923 = vmatprep.subr.mxu0 0.0
      %3924 = vmatpush2.msra.mxu0 %v3773
      %3925 = vmatprep.subr.mxu0 0.0
      %3926 = vmatpush2.msra.mxu0 %v3770
      %3927 = vmatprep.subr.mxu0 0.0
      %3928 = vmatpush2.msra.mxu0 %v3767
      %3929 = vmatprep.subr.mxu0 0.0
      %3930 = vmatpush2.msra.mxu0 %v3764
      %3931 = vmatprep.subr.mxu0 0.0
      %3932 = vmatpush2.msra.mxu0 %v3761
      %3933 = vmatprep.subr.mxu0 0.0
      %3934 = vmatpush2.msra.mxu0 %v3758
      %3935 = vmatprep.subr.mxu0 0.0
      %3936 = vmatpush2.msra.mxu0 %v3755
      %3937 = vmatprep.subr.mxu0 0.0
      %3938 = vmatpush2.msra.mxu0 %v3752
      %3939 = vmatprep.subr.mxu0 0.0
      %3940 = vmatpush2.msra.mxu0 %v3749
      %3941 = vmatprep.mubr.f32.mxu0 %v3804
      %3942 = vmatmul.mubr.f32.gmra.mxu0 %v3801
      %v3943 = vpop.f32.mrf.mxu0
      %v3944 = vadd.f32 0.0, %v3943
      %v3945 = vpop.f32.mrf.mxu0
      %3946 = vdwg.mxu0
      %v3947 = vmax.f32 %v3873, 0.0
      %v3948 = vmax.f32 %v3875, 0.0
      %v3949 = vmax.f32 %v3944, 0.0
      %v3950 = vmul.f32 %v3947, %v901
      %v3951 = vmul.f32 %v3948, %v905
      %v3952 = vmul.f32 %v3949, %v909
      %v3953 = vadd.f32 %v2880, %v3950
      %v3954 = vadd.f32 %v2881, %v3951
      %v3955 = vadd.f32 %v2882, %v3952
      %s3956 = scalar_lea.vmem %s462, 48
      %v3957 = vld [vmem:[%s3956] sm:$0xff]
      %v3958 = vld [vmem:[%s3956 + $0x8] sm:$0xf]
      %v3961 = vcombine.high %v3957, %v3957
      %3962 = vrot.lane.b32.xlu0 %v3957, 48
      %v3963 = vpop.permute.xlu0 %3962
      %3964 = vrot.lane.b32.xlu0 %v3961, 48
      %v3965 = vpop.permute.xlu0 %3964
      %3966 = vrot.lane.b32.xlu0 %v3958, 48
      %v3967 = vpop.permute.xlu0 %3966
      %v3968 = vsel %vm493, %v3963, %v3965
      %v3969 = vsel %vm493, %v3965, %v3967
      %3974 = vst.msk [vmem:[#allocation2] sm:$0xf] %vm500, %v3963
      %3975 = vst [vmem:[#allocation2 + $0x8] sm:$0xf] %v3968
      %3976 = vst [vmem:[#allocation2 + $0x10] sm:$0xf] %v3969
      %3977 = vst.msk [vmem:[#allocation2 + $0x18] sm:$0xf] %vm504, %v3967
      %v3978 = vld [vmem:[#allocation2] sm:$0xf]
      %v3979 = vld [vmem:[#allocation2 + $0x8] sm:$0xf]
      %v3980 = vld [vmem:[#allocation2 + $0x10] sm:$0xf]
      %v3981 = vld [vmem:[#allocation2 + $0x18] sm:$0xf]
      %v3986 = vrot.slane %v3978, 4
      %v3987 = vrot.slane %v3979, 4
      %v3988 = vrot.slane %v3980, 4
      %v3989 = vrot.slane %v3981, 4
      %3990 = vrot.lane.b32.xlu0 %v3986, 127
      %v3991 = vpop.permute.xlu0 %3990
      %3992 = vrot.lane.b32.xlu0 %v3987, 127
      %v3993 = vpop.permute.xlu0 %3992
      %3994 = vrot.lane.b32.xlu0 %v3988, 127
      %v3995 = vpop.permute.xlu0 %3994
      %3996 = vrot.lane.b32.xlu0 %v3989, 127
      %v3997 = vpop.permute.xlu0 %3996
      %v3998 = vsel %vm526, %v3991, %v3993
      %v3999 = vsel %vm526, %v3993, %v3995
      %v4000 = vsel %vm526, %v3995, %v3997
      %4004 = vrot.lane.b32.xlu0 %v3978, 126
      %v4005 = vpop.permute.xlu0 %4004
      %4006 = vrot.lane.b32.xlu0 %v3979, 126
      %v4007 = vpop.permute.xlu0 %4006
      %4008 = vrot.lane.b32.xlu0 %v3980, 126
      %v4009 = vpop.permute.xlu0 %4008
      %4010 = vrot.lane.b32.xlu0 %v3981, 126
      %v4011 = vpop.permute.xlu0 %4010
      %v4012 = vsel %vm542, %v4005, %v4007
      %v4013 = vsel %vm542, %v4007, %v4009
      %v4014 = vsel %vm542, %v4009, %v4011
      %4018 = vrot.lane.b32.xlu0 %v3986, 125
      %v4019 = vpop.permute.xlu0 %4018
      %4020 = vrot.lane.b32.xlu0 %v3987, 125
      %v4021 = vpop.permute.xlu0 %4020
      %4022 = vrot.lane.b32.xlu0 %v3988, 125
      %v4023 = vpop.permute.xlu0 %4022
      %4024 = vrot.lane.b32.xlu0 %v3989, 125
      %v4025 = vpop.permute.xlu0 %4024
      %v4026 = vsel %vm2953, %v4019, %v4021
      %v4027 = vsel %vm2953, %v4021, %v4023
      %v4028 = vsel %vm2953, %v4023, %v4025
      %4032 = vrot.lane.b32.xlu0 %v3978, 124
      %v4033 = vpop.permute.xlu0 %4032
      %4034 = vrot.lane.b32.xlu0 %v3979, 124
      %v4035 = vpop.permute.xlu0 %4034
      %4036 = vrot.lane.b32.xlu0 %v3980, 124
      %v4037 = vpop.permute.xlu0 %4036
      %4038 = vrot.lane.b32.xlu0 %v3981, 124
      %v4039 = vpop.permute.xlu0 %4038
      %v4040 = vsel %vm2968, %v4033, %v4035
      %v4041 = vsel %vm2968, %v4035, %v4037
      %v4042 = vsel %vm2968, %v4037, %v4039
      %4046 = vrot.lane.b32.xlu0 %v3986, 104
      %v4047 = vpop.permute.xlu0 %4046
      %4048 = vrot.lane.b32.xlu0 %v3987, 104
      %v4049 = vpop.permute.xlu0 %4048
      %4050 = vrot.lane.b32.xlu0 %v3988, 104
      %v4051 = vpop.permute.xlu0 %4050
      %4052 = vrot.lane.b32.xlu0 %v3989, 104
      %v4053 = vpop.permute.xlu0 %4052
      %v4054 = vsel %vm558, %v4047, %v4049
      %v4055 = vsel %vm558, %v4049, %v4051
      %v4056 = vsel %vm558, %v4051, %v4053
      %4060 = vrot.lane.b32.xlu0 %v3978, 103
      %v4061 = vpop.permute.xlu0 %4060
      %4062 = vrot.lane.b32.xlu0 %v3979, 103
      %v4063 = vpop.permute.xlu0 %4062
      %4064 = vrot.lane.b32.xlu0 %v3980, 103
      %v4065 = vpop.permute.xlu0 %4064
      %4066 = vrot.lane.b32.xlu0 %v3981, 103
      %v4067 = vpop.permute.xlu0 %4066
      %v4068 = vsel %vm574, %v4061, %v4063
      %v4069 = vsel %vm574, %v4063, %v4065
      %v4070 = vsel %vm574, %v4065, %v4067
      %4074 = vrot.lane.b32.xlu0 %v3986, 102
      %v4075 = vpop.permute.xlu0 %4074
      %4076 = vrot.lane.b32.xlu0 %v3987, 102
      %v4077 = vpop.permute.xlu0 %4076
      %4078 = vrot.lane.b32.xlu0 %v3988, 102
      %v4079 = vpop.permute.xlu0 %4078
      %4080 = vrot.lane.b32.xlu0 %v3989, 102
      %v4081 = vpop.permute.xlu0 %4080
      %v4082 = vsel %vm590, %v4075, %v4077
      %v4083 = vsel %vm590, %v4077, %v4079
      %v4084 = vsel %vm590, %v4079, %v4081
      %4088 = vrot.lane.b32.xlu0 %v3978, 101
      %v4089 = vpop.permute.xlu0 %4088
      %4090 = vrot.lane.b32.xlu0 %v3979, 101
      %v4091 = vpop.permute.xlu0 %4090
      %4092 = vrot.lane.b32.xlu0 %v3980, 101
      %v4093 = vpop.permute.xlu0 %4092
      %4094 = vrot.lane.b32.xlu0 %v3981, 101
      %v4095 = vpop.permute.xlu0 %4094
      %v4096 = vsel %vm3025, %v4089, %v4091
      %v4097 = vsel %vm3025, %v4091, %v4093
      %v4098 = vsel %vm3025, %v4093, %v4095
      %4102 = vrot.lane.b32.xlu0 %v3986, 100
      %v4103 = vpop.permute.xlu0 %4102
      %4104 = vrot.lane.b32.xlu0 %v3987, 100
      %v4105 = vpop.permute.xlu0 %4104
      %4106 = vrot.lane.b32.xlu0 %v3988, 100
      %v4107 = vpop.permute.xlu0 %4106
      %4108 = vrot.lane.b32.xlu0 %v3989, 100
      %v4109 = vpop.permute.xlu0 %4108
      %v4110 = vsel %vm471, %v4103, %v4105
      %v4111 = vsel %vm471, %v4105, %v4107
      %v4112 = vsel %vm471, %v4107, %v4109
      %4116 = vrot.lane.b32.xlu0 %v3978, 80
      %v4117 = vpop.permute.xlu0 %4116
      %4118 = vrot.lane.b32.xlu0 %v3979, 80
      %v4119 = vpop.permute.xlu0 %4118
      %4120 = vrot.lane.b32.xlu0 %v3980, 80
      %v4121 = vpop.permute.xlu0 %4120
      %4122 = vrot.lane.b32.xlu0 %v3981, 80
      %v4123 = vpop.permute.xlu0 %4122
      %v4124 = vsel %vm606, %v4117, %v4119
      %v4125 = vsel %vm606, %v4119, %v4121
      %v4126 = vsel %vm606, %v4121, %v4123
      %4130 = vrot.lane.b32.xlu0 %v3986, 79
      %v4131 = vpop.permute.xlu0 %4130
      %4132 = vrot.lane.b32.xlu0 %v3987, 79
      %v4133 = vpop.permute.xlu0 %4132
      %4134 = vrot.lane.b32.xlu0 %v3988, 79
      %v4135 = vpop.permute.xlu0 %4134
      %4136 = vrot.lane.b32.xlu0 %v3989, 79
      %v4137 = vpop.permute.xlu0 %4136
      %v4138 = vsel %vm622, %v4131, %v4133
      %v4139 = vsel %vm622, %v4133, %v4135
      %v4140 = vsel %vm622, %v4135, %v4137
      %4144 = vrot.lane.b32.xlu0 %v3978, 78
      %v4145 = vpop.permute.xlu0 %4144
      %4146 = vrot.lane.b32.xlu0 %v3979, 78
      %v4147 = vpop.permute.xlu0 %4146
      %4148 = vrot.lane.b32.xlu0 %v3980, 78
      %v4149 = vpop.permute.xlu0 %4148
      %4150 = vrot.lane.b32.xlu0 %v3981, 78
      %v4151 = vpop.permute.xlu0 %4150
      %v4152 = vsel %vm638, %v4145, %v4147
      %v4153 = vsel %vm638, %v4147, %v4149
      %v4154 = vsel %vm638, %v4149, %v4151
      %4158 = vrot.lane.b32.xlu0 %v3986, 77
      %v4159 = vpop.permute.xlu0 %4158
      %4160 = vrot.lane.b32.xlu0 %v3987, 77
      %v4161 = vpop.permute.xlu0 %4160
      %4162 = vrot.lane.b32.xlu0 %v3988, 77
      %v4163 = vpop.permute.xlu0 %4162
      %4164 = vrot.lane.b32.xlu0 %v3989, 77
      %v4165 = vpop.permute.xlu0 %4164
      %v4166 = vsel %vm3096, %v4159, %v4161
      %v4167 = vsel %vm3096, %v4161, %v4163
      %v4168 = vsel %vm3096, %v4163, %v4165
      %4172 = vrot.lane.b32.xlu0 %v3978, 76
      %v4173 = vpop.permute.xlu0 %4172
      %4174 = vrot.lane.b32.xlu0 %v3979, 76
      %v4175 = vpop.permute.xlu0 %4174
      %4176 = vrot.lane.b32.xlu0 %v3980, 76
      %v4177 = vpop.permute.xlu0 %4176
      %4178 = vrot.lane.b32.xlu0 %v3981, 76
      %v4179 = vpop.permute.xlu0 %4178
      %v4180 = vsel %vm3111, %v4173, %v4175
      %v4181 = vsel %vm3111, %v4175, %v4177
      %v4182 = vsel %vm3111, %v4177, %v4179
      %4186 = vrot.lane.b32.xlu0 %v3986, 56
      %v4187 = vpop.permute.xlu0 %4186
      %4188 = vrot.lane.b32.xlu0 %v3987, 56
      %v4189 = vpop.permute.xlu0 %4188
      %4190 = vrot.lane.b32.xlu0 %v3988, 56
      %v4191 = vpop.permute.xlu0 %4190
      %4192 = vrot.lane.b32.xlu0 %v3989, 56
      %v4193 = vpop.permute.xlu0 %4192
      %v4194 = vsel %vm3126, %v4187, %v4189
      %v4195 = vsel %vm3126, %v4189, %v4191
      %v4196 = vsel %vm3126, %v4191, %v4193
      %v4200 = vsel %vm642, %v3978, %v3998
      %v4201 = vsel %vm642, %v3979, %v3999
      %v4202 = vsel %vm642, %v3980, %v4000
      %v4203 = vsel %vm642, %v4012, %v4026
      %v4204 = vsel %vm642, %v4013, %v4027
      %v4205 = vsel %vm642, %v4014, %v4028
      %v4206 = vsel %vm642, %v4040, %v4054
      %v4207 = vsel %vm642, %v4041, %v4055
      %v4208 = vsel %vm642, %v4042, %v4056
      %v4209 = vsel %vm642, %v4068, %v4082
      %v4210 = vsel %vm642, %v4069, %v4083
      %v4211 = vsel %vm642, %v4070, %v4084
      %v4212 = vsel %vm642, %v4096, %v4110
      %v4213 = vsel %vm642, %v4097, %v4111
      %v4214 = vsel %vm642, %v4098, %v4112
      %v4215 = vsel %vm642, %v4124, %v4138
      %v4216 = vsel %vm642, %v4125, %v4139
      %v4217 = vsel %vm642, %v4126, %v4140
      %v4218 = vsel %vm642, %v4152, %v4166
      %v4219 = vsel %vm642, %v4153, %v4167
      %v4220 = vsel %vm642, %v4154, %v4168
      %v4221 = vsel %vm642, %v4180, %v4194
      %v4222 = vsel %vm642, %v4181, %v4195
      %v4223 = vsel %vm642, %v4182, %v4196
      %4227 = vrot.lane.b32.xlu0 %v3978, 105
      %v4228 = vpop.permute.xlu0 %4227
      %4229 = vrot.lane.b32.xlu0 %v3979, 105
      %v4230 = vpop.permute.xlu0 %4229
      %4231 = vrot.lane.b32.xlu0 %v3980, 105
      %v4232 = vpop.permute.xlu0 %4231
      %4233 = vrot.lane.b32.xlu0 %v3981, 105
      %v4234 = vpop.permute.xlu0 %4233
      %v4235 = vsel %vm3168, %v4228, %v4230
      %v4236 = vsel %vm3168, %v4230, %v4232
      %v4237 = vsel %vm3168, %v4232, %v4234
      %v4245 = vsel %vm642, %v3981, %v3997
      %v4246 = vsel %vm642, %v4011, %v4025
      %v4247 = vsel %vm642, %v4235, %v4054
      %v4248 = vsel %vm642, %v4236, %v4055
      %v4249 = vsel %vm642, %v4237, %v4056
      %v4250 = vsel %vm642, %v4234, %v4053
      %v4251 = vsel %vm642, %v4067, %v4081
      %4268 = vrot.lane.b32.xlu0 %v4200, 55
      %v4269 = vpop.permute.xlu0 %4268
      %4270 = vrot.lane.b32.xlu0 %v4201, 55
      %v4271 = vpop.permute.xlu0 %4270
      %4272 = vrot.lane.b32.xlu0 %v4202, 55
      %v4273 = vpop.permute.xlu0 %4272
      %4274 = vrot.lane.b32.xlu0 %v4245, 55
      %v4275 = vpop.permute.xlu0 %4274
      %4276 = vrot.lane.b32.xlu0 %v4203, 55
      %v4277 = vpop.permute.xlu0 %4276
      %4278 = vrot.lane.b32.xlu0 %v4204, 55
      %v4279 = vpop.permute.xlu0 %4278
      %4280 = vrot.lane.b32.xlu0 %v4205, 55
      %v4281 = vpop.permute.xlu0 %4280
      %4282 = vrot.lane.b32.xlu0 %v4246, 55
      %v4283 = vpop.permute.xlu0 %4282
      %4284 = vrot.lane.b32.xlu0 %v4247, 55
      %v4285 = vpop.permute.xlu0 %4284
      %4286 = vrot.lane.b32.xlu0 %v4248, 55
      %v4287 = vpop.permute.xlu0 %4286
      %4288 = vrot.lane.b32.xlu0 %v4249, 55
      %v4289 = vpop.permute.xlu0 %4288
      %4290 = vrot.lane.b32.xlu0 %v4250, 55
      %v4291 = vpop.permute.xlu0 %4290
      %4292 = vrot.lane.b32.xlu0 %v4209, 55
      %v4293 = vpop.permute.xlu0 %4292
      %4294 = vrot.lane.b32.xlu0 %v4210, 55
      %v4295 = vpop.permute.xlu0 %4294
      %4296 = vrot.lane.b32.xlu0 %v4211, 55
      %v4297 = vpop.permute.xlu0 %4296
      %4298 = vrot.lane.b32.xlu0 %v4251, 55
      %v4299 = vpop.permute.xlu0 %4298
      %4300 = vrot.lane.b32.xlu0 %v4096, 55
      %v4301 = vpop.permute.xlu0 %4300
      %4302 = vrot.lane.b32.xlu0 %v4097, 55
      %v4303 = vpop.permute.xlu0 %4302
      %4304 = vrot.lane.b32.xlu0 %v4098, 55
      %v4305 = vpop.permute.xlu0 %4304
      %4306 = vrot.lane.b32.xlu0 %v4095, 55
      %v4307 = vpop.permute.xlu0 %4306
      %v4308 = vsel %vm3242, %v4269, %v4271
      %v4309 = vsel %vm3242, %v4271, %v4273
      %v4310 = vsel %vm3242, %v4273, %v4275
      %v4311 = vsel %vm3242, %v4277, %v4279
      %v4312 = vsel %vm3242, %v4279, %v4281
      %v4313 = vsel %vm3242, %v4281, %v4283
      %v4314 = vsel %vm3242, %v4285, %v4287
      %v4315 = vsel %vm3242, %v4287, %v4289
      %v4316 = vsel %vm3242, %v4289, %v4291
      %v4317 = vsel %vm3242, %v4293, %v4295
      %v4318 = vsel %vm3242, %v4295, %v4297
      %v4319 = vsel %vm3242, %v4297, %v4299
      %v4320 = vsel %vm3242, %v4301, %v4303
      %v4321 = vsel %vm3242, %v4303, %v4305
      %v4322 = vsel %vm3242, %v4305, %v4307
      %v4335 = vld [vmem:[%s6] sm:$0xff]
      %v4337 = vsel %vm471, %v4335, 0
      %v4339 = vsel %vm642, %v4320, 0
      %v4341 = vsel %vm642, %v4321, 0
      %v4343 = vsel %vm642, %v4322, 0
      %4345 = vmatprep.subr.mxu0 0.0
      %4346 = vmatpush1.msra.mxu0 0.0
      %4347 = vmatprep.subr.mxu0 0.0
      %4348 = vmatpush1.msra.mxu0 0.0
      %4349 = vmatprep.subr.mxu0 0.0
      %4350 = vmatpush1.msra.mxu0 0.0
      %4351 = vmatprep.subr.mxu0 %v4341
      %4352 = vmatpush1.msra.mxu0 %v4339
      %4353 = vmatprep.subr.mxu0 %v4318
      %4354 = vmatpush1.msra.mxu0 %v4317
      %4355 = vmatprep.subr.mxu0 %v4315
      %4356 = vmatpush1.msra.mxu0 %v4314
      %4357 = vmatprep.subr.mxu0 %v4312
      %4358 = vmatpush1.msra.mxu0 %v4311
      %4359 = vmatprep.subr.mxu0 %v4309
      %4360 = vmatpush1.msra.mxu0 %v4308
      %4361 = vmatprep.subr.mxu0 %v4222
      %4362 = vmatpush1.msra.mxu0 %v4221
      %4363 = vmatprep.subr.mxu0 %v4219
      %4364 = vmatpush1.msra.mxu0 %v4218
      %4365 = vmatprep.subr.mxu0 %v4216
      %4366 = vmatpush1.msra.mxu0 %v4215
      %4367 = vmatprep.subr.mxu0 %v4213
      %4368 = vmatpush1.msra.mxu0 %v4212
      %4369 = vmatprep.subr.mxu0 %v4210
      %4370 = vmatpush1.msra.mxu0 %v4209
      %4371 = vmatprep.subr.mxu0 %v4207
      %4372 = vmatpush1.msra.mxu0 %v4206
      %4373 = vmatprep.subr.mxu0 %v4204
      %4374 = vmatpush1.msra.mxu0 %v4203
      %4375 = vmatprep.subr.mxu0 %v4201
      %4376 = vmatpush1.msra.mxu0 %v4200
      %4377 = vmatprep.subr.mxu0 0.0
      %4378 = vmatpush2.msra.mxu0 0.0
      %4379 = vmatprep.subr.mxu0 0.0
      %4380 = vmatpush2.msra.mxu0 0.0
      %4381 = vmatprep.subr.mxu0 0.0
      %4382 = vmatpush2.msra.mxu0 0.0
      %4383 = vmatprep.subr.mxu0 0.0
      %4384 = vmatpush2.msra.mxu0 0.0
      %4385 = vmatprep.subr.mxu0 0.0
      %4386 = vmatpush2.msra.mxu0 0.0
      %4387 = vmatprep.subr.mxu0 0.0
      %4388 = vmatpush2.msra.mxu0 0.0
      %4389 = vmatprep.subr.mxu0 0.0
      %4390 = vmatpush2.msra.mxu0 0.0
      %4391 = vmatprep.subr.mxu0 0.0
      %4392 = vmatpush2.msra.mxu0 0.0
      %4393 = vmatprep.subr.mxu0 0.0
      %4394 = vmatpush2.msra.mxu0 0.0
      %4395 = vmatprep.subr.mxu0 0.0
      %4396 = vmatpush2.msra.mxu0 0.0
      %4397 = vmatprep.subr.mxu0 0.0
      %4398 = vmatpush2.msra.mxu0 0.0
      %4399 = vmatprep.subr.mxu0 0.0
      %4400 = vmatpush2.msra.mxu0 0.0
      %4401 = vmatprep.subr.mxu0 0.0
      %4402 = vmatpush2.msra.mxu0 0.0
      %4403 = vmatprep.subr.mxu0 0.0
      %4404 = vmatpush2.msra.mxu0 0.0
      %4405 = vmatprep.subr.mxu0 0.0
      %4406 = vmatpush2.msra.mxu0 0.0
      %4407 = vmatprep.subr.mxu0 0.0
      %4408 = vmatpush2.msra.mxu0 0.0
      %4409 = vmatprep.mubr.f32.mxu0 0.0
      %4410 = vmatmul.mubr.f32.gmra.mxu0 %v4337
      %v4411 = vpop.f32.mrf.mxu0
      %v4412 = vadd.f32 0.0, %v4411
      %v4413 = vpop.f32.mrf.mxu0
      %v4414 = vadd.f32 0.0, %v4413
      %4415 = vdwg.mxu0
      %4416 = vmatprep.subr.mxu0 0.0
      %4417 = vmatpush1.msra.mxu0 0.0
      %4418 = vmatprep.subr.mxu0 0.0
      %4419 = vmatpush1.msra.mxu0 0.0
      %4420 = vmatprep.subr.mxu0 0.0
      %4421 = vmatpush1.msra.mxu0 0.0
      %4422 = vmatprep.subr.mxu0 0.0
      %4423 = vmatpush1.msra.mxu0 %v4343
      %4424 = vmatprep.subr.mxu0 0.0
      %4425 = vmatpush1.msra.mxu0 %v4319
      %4426 = vmatprep.subr.mxu0 0.0
      %4427 = vmatpush1.msra.mxu0 %v4316
      %4428 = vmatprep.subr.mxu0 0.0
      %4429 = vmatpush1.msra.mxu0 %v4313
      %4430 = vmatprep.subr.mxu0 0.0
      %4431 = vmatpush1.msra.mxu0 %v4310
      %4432 = vmatprep.subr.mxu0 0.0
      %4433 = vmatpush1.msra.mxu0 %v4223
      %4434 = vmatprep.subr.mxu0 0.0
      %4435 = vmatpush1.msra.mxu0 %v4220
      %4436 = vmatprep.subr.mxu0 0.0
      %4437 = vmatpush1.msra.mxu0 %v4217
      %4438 = vmatprep.subr.mxu0 0.0
      %4439 = vmatpush1.msra.mxu0 %v4214
      %4440 = vmatprep.subr.mxu0 0.0
      %4441 = vmatpush1.msra.mxu0 %v4211
      %4442 = vmatprep.subr.mxu0 0.0
      %4443 = vmatpush1.msra.mxu0 %v4208
      %4444 = vmatprep.subr.mxu0 0.0
      %4445 = vmatpush1.msra.mxu0 %v4205
      %4446 = vmatprep.subr.mxu0 0.0
      %4447 = vmatpush1.msra.mxu0 %v4202
      %4448 = vmatprep.subr.mxu0 0.0
      %4449 = vmatpush2.msra.mxu0 0.0
      %4450 = vmatprep.subr.mxu0 0.0
      %4451 = vmatpush2.msra.mxu0 0.0
      %4452 = vmatprep.subr.mxu0 0.0
      %4453 = vmatpush2.msra.mxu0 0.0
      %4454 = vmatprep.subr.mxu0 0.0
      %4455 = vmatpush2.msra.mxu0 0.0
      %4456 = vmatprep.subr.mxu0 0.0
      %4457 = vmatpush2.msra.mxu0 0.0
      %4458 = vmatprep.subr.mxu0 0.0
      %4459 = vmatpush2.msra.mxu0 0.0
      %4460 = vmatprep.subr.mxu0 0.0
      %4461 = vmatpush2.msra.mxu0 0.0
      %4462 = vmatprep.subr.mxu0 0.0
      %4463 = vmatpush2.msra.mxu0 0.0
      %4464 = vmatprep.subr.mxu0 0.0
      %4465 = vmatpush2.msra.mxu0 0.0
      %4466 = vmatprep.subr.mxu0 0.0
      %4467 = vmatpush2.msra.mxu0 0.0
      %4468 = vmatprep.subr.mxu0 0.0
      %4469 = vmatpush2.msra.mxu0 0.0
      %4470 = vmatprep.subr.mxu0 0.0
      %4471 = vmatpush2.msra.mxu0 0.0
      %4472 = vmatprep.subr.mxu0 0.0
      %4473 = vmatpush2.msra.mxu0 0.0
      %4474 = vmatprep.subr.mxu0 0.0
      %4475 = vmatpush2.msra.mxu0 0.0
      %4476 = vmatprep.subr.mxu0 0.0
      %4477 = vmatpush2.msra.mxu0 0.0
      %4478 = vmatprep.subr.mxu0 0.0
      %4479 = vmatpush2.msra.mxu0 0.0
      %4480 = vmatprep.mubr.f32.mxu0 0.0
      %4481 = vmatmul.mubr.f32.gmra.mxu0 %v4337
      %v4482 = vpop.f32.mrf.mxu0
      %v4483 = vadd.f32 0.0, %v4482
      %v4484 = vpop.f32.mrf.mxu0
      %4485 = vdwg.mxu0
      %v4486 = vmax.f32 %v4412, 0.0
      %v4487 = vmax.f32 %v4414, 0.0
      %v4488 = vmax.f32 %v4483, 0.0
      %v4489 = vmul.f32 %v4486, %v901
      %v4490 = vmul.f32 %v4487, %v905
      %v4491 = vmul.f32 %v4488, %v909
      %4495 = vrot.lane.b32.xlu0 %v4489, 50
      %v4496 = vpop.permute.xlu0 %4495
      %4497 = vrot.lane.b32.xlu0 %v4490, 50
      %v4498 = vpop.permute.xlu0 %4497
      %4499 = vrot.lane.b32.xlu0 %v4491, 50
      %v4500 = vpop.permute.xlu0 %4499
      %v4501 = vsel %vm925, %v4496, %v4498
      %v4502 = vsel %vm925, %v4498, %v4500
      %4507 = vst.msk [vmem:[#allocation3] sm:$0xff] %vm932, %v4496
      %4508 = vst [vmem:[#allocation3 + $0x8] sm:$0xff] %v4501
      %4509 = vst [vmem:[#allocation3 + $0x10] sm:$0xff] %v4502
      %4510 = vst.msk [vmem:[#allocation3 + $0x18] sm:$0xff] %vm925, %v4500
      %v4511 = vld [vmem:[#allocation3] sm:$0xff]
      %v4512 = vld [vmem:[#allocation3 + $0x8] sm:$0xff]
      %v4513 = vld [vmem:[#allocation3 + $0x10] sm:$0xff]
      %v4514 = vld [vmem:[#allocation3 + $0x18] sm:$0xff]
      %4519 = vrot.lane.b32.xlu0 %v4511, 127
      %v4520 = vpop.permute.xlu0 %4519
      %4521 = vrot.lane.b32.xlu0 %v4512, 127
      %v4522 = vpop.permute.xlu0 %4521
      %4523 = vrot.lane.b32.xlu0 %v4513, 127
      %v4524 = vpop.permute.xlu0 %4523
      %4525 = vrot.lane.b32.xlu0 %v4514, 127
      %v4526 = vpop.permute.xlu0 %4525
      %v4527 = vsel %vm526, %v4520, %v4522
      %v4528 = vsel %vm526, %v4522, %v4524
      %v4529 = vsel %vm526, %v4524, %v4526
      %4533 = vrot.lane.b32.xlu0 %v4511, 126
      %v4534 = vpop.permute.xlu0 %4533
      %4535 = vrot.lane.b32.xlu0 %v4512, 126
      %v4536 = vpop.permute.xlu0 %4535
      %4537 = vrot.lane.b32.xlu0 %v4513, 126
      %v4538 = vpop.permute.xlu0 %4537
      %4539 = vrot.lane.b32.xlu0 %v4514, 126
      %v4540 = vpop.permute.xlu0 %4539
      %v4541 = vsel %vm542, %v4534, %v4536
      %v4542 = vsel %vm542, %v4536, %v4538
      %v4543 = vsel %vm542, %v4538, %v4540
      %4547 = vrot.lane.b32.xlu0 %v4511, 125
      %v4548 = vpop.permute.xlu0 %4547
      %4549 = vrot.lane.b32.xlu0 %v4512, 125
      %v4550 = vpop.permute.xlu0 %4549
      %4551 = vrot.lane.b32.xlu0 %v4513, 125
      %v4552 = vpop.permute.xlu0 %4551
      %4553 = vrot.lane.b32.xlu0 %v4514, 125
      %v4554 = vpop.permute.xlu0 %4553
      %v4555 = vsel %vm2953, %v4548, %v4550
      %v4556 = vsel %vm2953, %v4550, %v4552
      %v4557 = vsel %vm2953, %v4552, %v4554
      %4561 = vrot.lane.b32.xlu0 %v4511, 124
      %v4562 = vpop.permute.xlu0 %4561
      %4563 = vrot.lane.b32.xlu0 %v4512, 124
      %v4564 = vpop.permute.xlu0 %4563
      %4565 = vrot.lane.b32.xlu0 %v4513, 124
      %v4566 = vpop.permute.xlu0 %4565
      %4567 = vrot.lane.b32.xlu0 %v4514, 124
      %v4568 = vpop.permute.xlu0 %4567
      %v4569 = vsel %vm2968, %v4562, %v4564
      %v4570 = vsel %vm2968, %v4564, %v4566
      %v4571 = vsel %vm2968, %v4566, %v4568
      %4575 = vrot.lane.b32.xlu0 %v4511, 104
      %v4576 = vpop.permute.xlu0 %4575
      %4577 = vrot.lane.b32.xlu0 %v4512, 104
      %v4578 = vpop.permute.xlu0 %4577
      %4579 = vrot.lane.b32.xlu0 %v4513, 104
      %v4580 = vpop.permute.xlu0 %4579
      %4581 = vrot.lane.b32.xlu0 %v4514, 104
      %v4582 = vpop.permute.xlu0 %4581
      %v4583 = vsel %vm558, %v4576, %v4578
      %v4584 = vsel %vm558, %v4578, %v4580
      %v4585 = vsel %vm558, %v4580, %v4582
      %4589 = vrot.lane.b32.xlu0 %v4511, 103
      %v4590 = vpop.permute.xlu0 %4589
      %4591 = vrot.lane.b32.xlu0 %v4512, 103
      %v4592 = vpop.permute.xlu0 %4591
      %4593 = vrot.lane.b32.xlu0 %v4513, 103
      %v4594 = vpop.permute.xlu0 %4593
      %4595 = vrot.lane.b32.xlu0 %v4514, 103
      %v4596 = vpop.permute.xlu0 %4595
      %v4597 = vsel %vm574, %v4590, %v4592
      %v4598 = vsel %vm574, %v4592, %v4594
      %v4599 = vsel %vm574, %v4594, %v4596
      %4603 = vrot.lane.b32.xlu0 %v4511, 102
      %v4604 = vpop.permute.xlu0 %4603
      %4605 = vrot.lane.b32.xlu0 %v4512, 102
      %v4606 = vpop.permute.xlu0 %4605
      %4607 = vrot.lane.b32.xlu0 %v4513, 102
      %v4608 = vpop.permute.xlu0 %4607
      %4609 = vrot.lane.b32.xlu0 %v4514, 102
      %v4610 = vpop.permute.xlu0 %4609
      %v4611 = vsel %vm590, %v4604, %v4606
      %v4612 = vsel %vm590, %v4606, %v4608
      %v4613 = vsel %vm590, %v4608, %v4610
      %4617 = vrot.lane.b32.xlu0 %v4511, 101
      %v4618 = vpop.permute.xlu0 %4617
      %4619 = vrot.lane.b32.xlu0 %v4512, 101
      %v4620 = vpop.permute.xlu0 %4619
      %4621 = vrot.lane.b32.xlu0 %v4513, 101
      %v4622 = vpop.permute.xlu0 %4621
      %4623 = vrot.lane.b32.xlu0 %v4514, 101
      %v4624 = vpop.permute.xlu0 %4623
      %v4625 = vsel %vm3025, %v4618, %v4620
      %v4626 = vsel %vm3025, %v4620, %v4622
      %v4627 = vsel %vm3025, %v4622, %v4624
      %4631 = vrot.lane.b32.xlu0 %v4511, 100
      %v4632 = vpop.permute.xlu0 %4631
      %4633 = vrot.lane.b32.xlu0 %v4512, 100
      %v4634 = vpop.permute.xlu0 %4633
      %4635 = vrot.lane.b32.xlu0 %v4513, 100
      %v4636 = vpop.permute.xlu0 %4635
      %4637 = vrot.lane.b32.xlu0 %v4514, 100
      %v4638 = vpop.permute.xlu0 %4637
      %v4639 = vsel %vm471, %v4632, %v4634
      %v4640 = vsel %vm471, %v4634, %v4636
      %v4641 = vsel %vm471, %v4636, %v4638
      %4645 = vrot.lane.b32.xlu0 %v4511, 80
      %v4646 = vpop.permute.xlu0 %4645
      %4647 = vrot.lane.b32.xlu0 %v4512, 80
      %v4648 = vpop.permute.xlu0 %4647
      %4649 = vrot.lane.b32.xlu0 %v4513, 80
      %v4650 = vpop.permute.xlu0 %4649
      %4651 = vrot.lane.b32.xlu0 %v4514, 80
      %v4652 = vpop.permute.xlu0 %4651
      %v4653 = vsel %vm606, %v4646, %v4648
      %v4654 = vsel %vm606, %v4648, %v4650
      %v4655 = vsel %vm606, %v4650, %v4652
      %4659 = vrot.lane.b32.xlu0 %v4511, 79
      %v4660 = vpop.permute.xlu0 %4659
      %4661 = vrot.lane.b32.xlu0 %v4512, 79
      %v4662 = vpop.permute.xlu0 %4661
      %4663 = vrot.lane.b32.xlu0 %v4513, 79
      %v4664 = vpop.permute.xlu0 %4663
      %4665 = vrot.lane.b32.xlu0 %v4514, 79
      %v4666 = vpop.permute.xlu0 %4665
      %v4667 = vsel %vm622, %v4660, %v4662
      %v4668 = vsel %vm622, %v4662, %v4664
      %v4669 = vsel %vm622, %v4664, %v4666
      %4673 = vrot.lane.b32.xlu0 %v4511, 78
      %v4674 = vpop.permute.xlu0 %4673
      %4675 = vrot.lane.b32.xlu0 %v4512, 78
      %v4676 = vpop.permute.xlu0 %4675
      %4677 = vrot.lane.b32.xlu0 %v4513, 78
      %v4678 = vpop.permute.xlu0 %4677
      %4679 = vrot.lane.b32.xlu0 %v4514, 78
      %v4680 = vpop.permute.xlu0 %4679
      %v4681 = vsel %vm638, %v4674, %v4676
      %v4682 = vsel %vm638, %v4676, %v4678
      %v4683 = vsel %vm638, %v4678, %v4680
      %4687 = vrot.lane.b32.xlu0 %v4511, 77
      %v4688 = vpop.permute.xlu0 %4687
      %4689 = vrot.lane.b32.xlu0 %v4512, 77
      %v4690 = vpop.permute.xlu0 %4689
      %4691 = vrot.lane.b32.xlu0 %v4513, 77
      %v4692 = vpop.permute.xlu0 %4691
      %4693 = vrot.lane.b32.xlu0 %v4514, 77
      %v4694 = vpop.permute.xlu0 %4693
      %v4695 = vsel %vm3096, %v4688, %v4690
      %v4696 = vsel %vm3096, %v4690, %v4692
      %v4697 = vsel %vm3096, %v4692, %v4694
      %4701 = vrot.lane.b32.xlu0 %v4511, 76
      %v4702 = vpop.permute.xlu0 %4701
      %4703 = vrot.lane.b32.xlu0 %v4512, 76
      %v4704 = vpop.permute.xlu0 %4703
      %4705 = vrot.lane.b32.xlu0 %v4513, 76
      %v4706 = vpop.permute.xlu0 %4705
      %4707 = vrot.lane.b32.xlu0 %v4514, 76
      %v4708 = vpop.permute.xlu0 %4707
      %v4709 = vsel %vm3111, %v4702, %v4704
      %v4710 = vsel %vm3111, %v4704, %v4706
      %v4711 = vsel %vm3111, %v4706, %v4708
      %4715 = vrot.lane.b32.xlu0 %v4511, 56
      %v4716 = vpop.permute.xlu0 %4715
      %4717 = vrot.lane.b32.xlu0 %v4512, 56
      %v4718 = vpop.permute.xlu0 %4717
      %4719 = vrot.lane.b32.xlu0 %v4513, 56
      %v4720 = vpop.permute.xlu0 %4719
      %4721 = vrot.lane.b32.xlu0 %v4514, 56
      %v4722 = vpop.permute.xlu0 %4721
      %v4723 = vsel %vm3126, %v4716, %v4718
      %v4724 = vsel %vm3126, %v4718, %v4720
      %v4725 = vsel %vm3126, %v4720, %v4722
      %4729 = vrot.lane.b32.xlu0 %v4511, 105
      %v4730 = vpop.permute.xlu0 %4729
      %4731 = vrot.lane.b32.xlu0 %v4512, 105
      %v4732 = vpop.permute.xlu0 %4731
      %4733 = vrot.lane.b32.xlu0 %v4513, 105
      %v4734 = vpop.permute.xlu0 %4733
      %4735 = vrot.lane.b32.xlu0 %v4514, 105
      %v4736 = vpop.permute.xlu0 %4735
      %v4737 = vsel %vm3168, %v4730, %v4732
      %v4738 = vsel %vm3168, %v4732, %v4734
      %v4739 = vsel %vm3168, %v4734, %v4736
      %4740 = vrot.lane.b32.xlu0 %v4511, 55
      %v4741 = vpop.permute.xlu0 %4740
      %4742 = vrot.lane.b32.xlu0 %v4512, 55
      %v4743 = vpop.permute.xlu0 %4742
      %4744 = vrot.lane.b32.xlu0 %v4513, 55
      %v4745 = vpop.permute.xlu0 %4744
      %4746 = vrot.lane.b32.xlu0 %v4514, 55
      %v4747 = vpop.permute.xlu0 %4746
      %4748 = vrot.lane.b32.xlu0 %v4527, 55
      %v4749 = vpop.permute.xlu0 %4748
      %4750 = vrot.lane.b32.xlu0 %v4528, 55
      %v4751 = vpop.permute.xlu0 %4750
      %4752 = vrot.lane.b32.xlu0 %v4529, 55
      %v4753 = vpop.permute.xlu0 %4752
      %4754 = vrot.lane.b32.xlu0 %v4526, 55
      %v4755 = vpop.permute.xlu0 %4754
      %4756 = vrot.lane.b32.xlu0 %v4541, 55
      %v4757 = vpop.permute.xlu0 %4756
      %4758 = vrot.lane.b32.xlu0 %v4542, 55
      %v4759 = vpop.permute.xlu0 %4758
      %4760 = vrot.lane.b32.xlu0 %v4543, 55
      %v4761 = vpop.permute.xlu0 %4760
      %4762 = vrot.lane.b32.xlu0 %v4540, 55
      %v4763 = vpop.permute.xlu0 %4762
      %4764 = vrot.lane.b32.xlu0 %v4555, 55
      %v4765 = vpop.permute.xlu0 %4764
      %4766 = vrot.lane.b32.xlu0 %v4556, 55
      %v4767 = vpop.permute.xlu0 %4766
      %4768 = vrot.lane.b32.xlu0 %v4557, 55
      %v4769 = vpop.permute.xlu0 %4768
      %4770 = vrot.lane.b32.xlu0 %v4554, 55
      %v4771 = vpop.permute.xlu0 %4770
      %4772 = vrot.lane.b32.xlu0 %v4737, 55
      %v4773 = vpop.permute.xlu0 %4772
      %4774 = vrot.lane.b32.xlu0 %v4738, 55
      %v4775 = vpop.permute.xlu0 %4774
      %4776 = vrot.lane.b32.xlu0 %v4739, 55
      %v4777 = vpop.permute.xlu0 %4776
      %4778 = vrot.lane.b32.xlu0 %v4736, 55
      %v4779 = vpop.permute.xlu0 %4778
      %4780 = vrot.lane.b32.xlu0 %v4583, 55
      %v4781 = vpop.permute.xlu0 %4780
      %4782 = vrot.lane.b32.xlu0 %v4584, 55
      %v4783 = vpop.permute.xlu0 %4782
      %4784 = vrot.lane.b32.xlu0 %v4585, 55
      %v4785 = vpop.permute.xlu0 %4784
      %4786 = vrot.lane.b32.xlu0 %v4582, 55
      %v4787 = vpop.permute.xlu0 %4786
      %4788 = vrot.lane.b32.xlu0 %v4597, 55
      %v4789 = vpop.permute.xlu0 %4788
      %4790 = vrot.lane.b32.xlu0 %v4598, 55
      %v4791 = vpop.permute.xlu0 %4790
      %4792 = vrot.lane.b32.xlu0 %v4599, 55
      %v4793 = vpop.permute.xlu0 %4792
      %4794 = vrot.lane.b32.xlu0 %v4596, 55
      %v4795 = vpop.permute.xlu0 %4794
      %4796 = vrot.lane.b32.xlu0 %v4611, 55
      %v4797 = vpop.permute.xlu0 %4796
      %4798 = vrot.lane.b32.xlu0 %v4612, 55
      %v4799 = vpop.permute.xlu0 %4798
      %4800 = vrot.lane.b32.xlu0 %v4613, 55
      %v4801 = vpop.permute.xlu0 %4800
      %4802 = vrot.lane.b32.xlu0 %v4610, 55
      %v4803 = vpop.permute.xlu0 %4802
      %4804 = vrot.lane.b32.xlu0 %v4625, 55
      %v4805 = vpop.permute.xlu0 %4804
      %4806 = vrot.lane.b32.xlu0 %v4626, 55
      %v4807 = vpop.permute.xlu0 %4806
      %4808 = vrot.lane.b32.xlu0 %v4627, 55
      %v4809 = vpop.permute.xlu0 %4808
      %4810 = vrot.lane.b32.xlu0 %v4624, 55
      %v4811 = vpop.permute.xlu0 %4810
      %v4812 = vsel %vm3242, %v4741, %v4743
      %v4813 = vsel %vm3242, %v4743, %v4745
      %v4814 = vsel %vm3242, %v4745, %v4747
      %v4815 = vsel %vm3242, %v4749, %v4751
      %v4816 = vsel %vm3242, %v4751, %v4753
      %v4817 = vsel %vm3242, %v4753, %v4755
      %v4818 = vsel %vm3242, %v4757, %v4759
      %v4819 = vsel %vm3242, %v4759, %v4761
      %v4820 = vsel %vm3242, %v4761, %v4763
      %v4821 = vsel %vm3242, %v4765, %v4767
      %v4822 = vsel %vm3242, %v4767, %v4769
      %v4823 = vsel %vm3242, %v4769, %v4771
      %v4824 = vsel %vm3242, %v4773, %v4775
      %v4825 = vsel %vm3242, %v4775, %v4777
      %v4826 = vsel %vm3242, %v4777, %v4779
      %v4827 = vsel %vm3242, %v4781, %v4783
      %v4828 = vsel %vm3242, %v4783, %v4785
      %v4829 = vsel %vm3242, %v4785, %v4787
      %v4830 = vsel %vm3242, %v4789, %v4791
      %v4831 = vsel %vm3242, %v4791, %v4793
      %v4832 = vsel %vm3242, %v4793, %v4795
      %v4833 = vsel %vm3242, %v4797, %v4799
      %v4834 = vsel %vm3242, %v4799, %v4801
      %v4835 = vsel %vm3242, %v4801, %v4803
      %v4836 = vsel %vm3242, %v4805, %v4807
      %v4837 = vsel %vm3242, %v4807, %v4809
      %v4838 = vsel %vm3242, %v4809, %v4811
      %v4866 = vld [vmem:[%s11] sm:$0xff]
      %v4867 = vld [vmem:[%s11 + $0x8] sm:$0xff]
      %v4869 = vsel %vm1149, %v4867, 0
      %4871 = vmatprep.subr.mxu0 %v4724
      %4872 = vmatpush1.msra.mxu0 %v4723
      %4873 = vmatprep.subr.mxu0 %v4710
      %4874 = vmatpush1.msra.mxu0 %v4709
      %4875 = vmatprep.subr.mxu0 %v4696
      %4876 = vmatpush1.msra.mxu0 %v4695
      %4877 = vmatprep.subr.mxu0 %v4682
      %4878 = vmatpush1.msra.mxu0 %v4681
      %4879 = vmatprep.subr.mxu0 %v4668
      %4880 = vmatpush1.msra.mxu0 %v4667
      %4881 = vmatprep.subr.mxu0 %v4654
      %4882 = vmatpush1.msra.mxu0 %v4653
      %4883 = vmatprep.subr.mxu0 %v4640
      %4884 = vmatpush1.msra.mxu0 %v4639
      %4885 = vmatprep.subr.mxu0 %v4626
      %4886 = vmatpush1.msra.mxu0 %v4625
      %4887 = vmatprep.subr.mxu0 %v4612
      %4888 = vmatpush1.msra.mxu0 %v4611
      %4889 = vmatprep.subr.mxu0 %v4598
      %4890 = vmatpush1.msra.mxu0 %v4597
      %4891 = vmatprep.subr.mxu0 %v4584
      %4892 = vmatpush1.msra.mxu0 %v4583
      %4893 = vmatprep.subr.mxu0 %v4570
      %4894 = vmatpush1.msra.mxu0 %v4569
      %4895 = vmatprep.subr.mxu0 %v4556
      %4896 = vmatpush1.msra.mxu0 %v4555
      %4897 = vmatprep.subr.mxu0 %v4542
      %4898 = vmatpush1.msra.mxu0 %v4541
      %4899 = vmatprep.subr.mxu0 %v4528
      %4900 = vmatpush1.msra.mxu0 %v4527
      %4901 = vmatprep.subr.mxu0 %v4512
      %4902 = vmatpush1.msra.mxu0 %v4511
      %4903 = vmatprep.subr.mxu0 0.0
      %4904 = vmatpush2.msra.mxu0 0.0
      %4905 = vmatprep.subr.mxu0 0.0
      %4906 = vmatpush2.msra.mxu0 0.0
      %4907 = vmatprep.subr.mxu0 0.0
      %4908 = vmatpush2.msra.mxu0 0.0
      %4909 = vmatprep.subr.mxu0 0.0
      %4910 = vmatpush2.msra.mxu0 0.0
      %4911 = vmatprep.subr.mxu0 0.0
      %4912 = vmatpush2.msra.mxu0 0.0
      %4913 = vmatprep.subr.mxu0 0.0
      %4914 = vmatpush2.msra.mxu0 0.0
      %4915 = vmatprep.subr.mxu0 0.0
      %4916 = vmatpush2.msra.mxu0 0.0
      %4917 = vmatprep.subr.mxu0 %v4837
      %4918 = vmatpush2.msra.mxu0 %v4836
      %4919 = vmatprep.subr.mxu0 %v4834
      %4920 = vmatpush2.msra.mxu0 %v4833
      %4921 = vmatprep.subr.mxu0 %v4831
      %4922 = vmatpush2.msra.mxu0 %v4830
      %4923 = vmatprep.subr.mxu0 %v4828
      %4924 = vmatpush2.msra.mxu0 %v4827
      %4925 = vmatprep.subr.mxu0 %v4825
      %4926 = vmatpush2.msra.mxu0 %v4824
      %4927 = vmatprep.subr.mxu0 %v4822
      %4928 = vmatpush2.msra.mxu0 %v4821
      %4929 = vmatprep.subr.mxu0 %v4819
      %4930 = vmatpush2.msra.mxu0 %v4818
      %4931 = vmatprep.subr.mxu0 %v4816
      %4932 = vmatpush2.msra.mxu0 %v4815
      %4933 = vmatprep.subr.mxu0 %v4813
      %4934 = vmatpush2.msra.mxu0 %v4812
      %4935 = vmatprep.mubr.f32.mxu0 %v4869
      %4936 = vmatmul.mubr.f32.gmra.mxu0 %v4866
      %v4937 = vpop.f32.mrf.mxu0
      %v4938 = vadd.f32 0.0, %v4937
      %v4939 = vpop.f32.mrf.mxu0
      %v4940 = vadd.f32 0.0, %v4939
      %4941 = vdwg.mxu0
      %4942 = vmatprep.subr.mxu0 0.0
      %4943 = vmatpush1.msra.mxu0 %v4725
      %4944 = vmatprep.subr.mxu0 0.0
      %4945 = vmatpush1.msra.mxu0 %v4711
      %4946 = vmatprep.subr.mxu0 0.0
      %4947 = vmatpush1.msra.mxu0 %v4697
      %4948 = vmatprep.subr.mxu0 0.0
      %4949 = vmatpush1.msra.mxu0 %v4683
      %4950 = vmatprep.subr.mxu0 0.0
      %4951 = vmatpush1.msra.mxu0 %v4669
      %4952 = vmatprep.subr.mxu0 0.0
      %4953 = vmatpush1.msra.mxu0 %v4655
      %4954 = vmatprep.subr.mxu0 0.0
      %4955 = vmatpush1.msra.mxu0 %v4641
      %4956 = vmatprep.subr.mxu0 0.0
      %4957 = vmatpush1.msra.mxu0 %v4627
      %4958 = vmatprep.subr.mxu0 0.0
      %4959 = vmatpush1.msra.mxu0 %v4613
      %4960 = vmatprep.subr.mxu0 0.0
      %4961 = vmatpush1.msra.mxu0 %v4599
      %4962 = vmatprep.subr.mxu0 0.0
      %4963 = vmatpush1.msra.mxu0 %v4585
      %4964 = vmatprep.subr.mxu0 0.0
      %4965 = vmatpush1.msra.mxu0 %v4571
      %4966 = vmatprep.subr.mxu0 0.0
      %4967 = vmatpush1.msra.mxu0 %v4557
      %4968 = vmatprep.subr.mxu0 0.0
      %4969 = vmatpush1.msra.mxu0 %v4543
      %4970 = vmatprep.subr.mxu0 0.0
      %4971 = vmatpush1.msra.mxu0 %v4529
      %4972 = vmatprep.subr.mxu0 0.0
      %4973 = vmatpush1.msra.mxu0 %v4513
      %4974 = vmatprep.subr.mxu0 0.0
      %4975 = vmatpush2.msra.mxu0 0.0
      %4976 = vmatprep.subr.mxu0 0.0
      %4977 = vmatpush2.msra.mxu0 0.0
      %4978 = vmatprep.subr.mxu0 0.0
      %4979 = vmatpush2.msra.mxu0 0.0
      %4980 = vmatprep.subr.mxu0 0.0
      %4981 = vmatpush2.msra.mxu0 0.0
      %4982 = vmatprep.subr.mxu0 0.0
      %4983 = vmatpush2.msra.mxu0 0.0
      %4984 = vmatprep.subr.mxu0 0.0
      %4985 = vmatpush2.msra.mxu0 0.0
      %4986 = vmatprep.subr.mxu0 0.0
      %4987 = vmatpush2.msra.mxu0 0.0
      %4988 = vmatprep.subr.mxu0 0.0
      %4989 = vmatpush2.msra.mxu0 %v4838
      %4990 = vmatprep.subr.mxu0 0.0
      %4991 = vmatpush2.msra.mxu0 %v4835
      %4992 = vmatprep.subr.mxu0 0.0
      %4993 = vmatpush2.msra.mxu0 %v4832
      %4994 = vmatprep.subr.mxu0 0.0
      %4995 = vmatpush2.msra.mxu0 %v4829
      %4996 = vmatprep.subr.mxu0 0.0
      %4997 = vmatpush2.msra.mxu0 %v4826
      %4998 = vmatprep.subr.mxu0 0.0
      %4999 = vmatpush2.msra.mxu0 %v4823
      %5000 = vmatprep.subr.mxu0 0.0
      %5001 = vmatpush2.msra.mxu0 %v4820
      %5002 = vmatprep.subr.mxu0 0.0
      %5003 = vmatpush2.msra.mxu0 %v4817
      %5004 = vmatprep.subr.mxu0 0.0
      %5005 = vmatpush2.msra.mxu0 %v4814
      %5006 = vmatprep.mubr.f32.mxu0 %v4869
      %5007 = vmatmul.mubr.f32.gmra.mxu0 %v4866
      %v5008 = vpop.f32.mrf.mxu0
      %v5009 = vadd.f32 0.0, %v5008
      %v5010 = vpop.f32.mrf.mxu0
      %5011 = vdwg.mxu0
      %v5012 = vmax.f32 %v4938, 0.0
      %v5013 = vmax.f32 %v4940, 0.0
      %v5014 = vmax.f32 %v5009, 0.0
      %v5015 = vmul.f32 %v5012, %v901
      %v5016 = vmul.f32 %v5013, %v905
      %v5017 = vmul.f32 %v5014, %v909
      %v5018 = vadd.f32 %v3953, %v5015
      %v5019 = vadd.f32 %v3954, %v5016
      %v5020 = vadd.f32 %v3955, %v5017
      %v5021 = vmul.f32 %v5018, 0.2
      %v5022 = vmul.f32 %v5019, 0.2
      %v5023 = vmul.f32 %v5020, 0.2
      %5027 = vrot.lane.b32.xlu0 %v5021, 50
      %v5028 = vpop.permute.xlu0 %5027
      %5029 = vrot.lane.b32.xlu0 %v5022, 50
      %v5030 = vpop.permute.xlu0 %5029
      %5031 = vrot.lane.b32.xlu0 %v5023, 50
      %v5032 = vpop.permute.xlu0 %5031
      %v5033 = vsel %vm925, %v5028, %v5030
      %v5034 = vsel %vm925, %v5030, %v5032
      %5039 = vst.msk [vmem:[#allocation4] sm:$0xff] %vm932, %v5028
      %5040 = vst [vmem:[#allocation4 + $0x8] sm:$0xff] %v5033
      %5041 = vst [vmem:[#allocation4 + $0x10] sm:$0xff] %v5034
      %5042 = vst.msk [vmem:[#allocation4 + $0x18] sm:$0xff] %vm925, %v5032
      %v5043 = vld [vmem:[#allocation4] sm:$0xff]
      %v5044 = vld [vmem:[#allocation4 + $0x8] sm:$0xff]
      %v5045 = vld [vmem:[#allocation4 + $0x10] sm:$0xff]
      %v5046 = vld [vmem:[#allocation4 + $0x18] sm:$0xff]
      %5051 = vrot.lane.b32.xlu0 %v5043, 127
      %v5052 = vpop.permute.xlu0 %5051
      %5053 = vrot.lane.b32.xlu0 %v5044, 127
      %v5054 = vpop.permute.xlu0 %5053
      %5055 = vrot.lane.b32.xlu0 %v5045, 127
      %v5056 = vpop.permute.xlu0 %5055
      %5057 = vrot.lane.b32.xlu0 %v5046, 127
      %v5058 = vpop.permute.xlu0 %5057
      %v5059 = vsel %vm526, %v5052, %v5054
      %v5060 = vsel %vm526, %v5054, %v5056
      %v5061 = vsel %vm526, %v5056, %v5058
      %5062 = vrot.lane.b32.xlu0 %v5043, 126
      %v5063 = vpop.permute.xlu0 %5062
      %5064 = vrot.lane.b32.xlu0 %v5044, 126
      %v5065 = vpop.permute.xlu0 %5064
      %5066 = vrot.lane.b32.xlu0 %v5045, 126
      %v5067 = vpop.permute.xlu0 %5066
      %5068 = vrot.lane.b32.xlu0 %v5046, 126
      %v5069 = vpop.permute.xlu0 %5068
      %v5070 = vsel %vm542, %v5063, %v5065
      %v5071 = vsel %vm542, %v5065, %v5067
      %v5072 = vsel %vm542, %v5067, %v5069
      %5073 = vrot.lane.b32.xlu0 %v5043, 104
      %v5074 = vpop.permute.xlu0 %5073
      %5075 = vrot.lane.b32.xlu0 %v5044, 104
      %v5076 = vpop.permute.xlu0 %5075
      %5077 = vrot.lane.b32.xlu0 %v5045, 104
      %v5078 = vpop.permute.xlu0 %5077
      %5079 = vrot.lane.b32.xlu0 %v5046, 104
      %v5080 = vpop.permute.xlu0 %5079
      %v5081 = vsel %vm558, %v5074, %v5076
      %v5082 = vsel %vm558, %v5076, %v5078
      %v5083 = vsel %vm558, %v5078, %v5080
      %5084 = vrot.lane.b32.xlu0 %v5043, 103
      %v5085 = vpop.permute.xlu0 %5084
      %5086 = vrot.lane.b32.xlu0 %v5044, 103
      %v5087 = vpop.permute.xlu0 %5086
      %5088 = vrot.lane.b32.xlu0 %v5045, 103
      %v5089 = vpop.permute.xlu0 %5088
      %5090 = vrot.lane.b32.xlu0 %v5046, 103
      %v5091 = vpop.permute.xlu0 %5090
      %v5092 = vsel %vm574, %v5085, %v5087
      %v5093 = vsel %vm574, %v5087, %v5089
      %v5094 = vsel %vm574, %v5089, %v5091
      %5095 = vrot.lane.b32.xlu0 %v5043, 102
      %v5096 = vpop.permute.xlu0 %5095
      %5097 = vrot.lane.b32.xlu0 %v5044, 102
      %v5098 = vpop.permute.xlu0 %5097
      %5099 = vrot.lane.b32.xlu0 %v5045, 102
      %v5100 = vpop.permute.xlu0 %5099
      %5101 = vrot.lane.b32.xlu0 %v5046, 102
      %v5102 = vpop.permute.xlu0 %5101
      %v5103 = vsel %vm590, %v5096, %v5098
      %v5104 = vsel %vm590, %v5098, %v5100
      %v5105 = vsel %vm590, %v5100, %v5102
      %5106 = vrot.lane.b32.xlu0 %v5043, 80
      %v5107 = vpop.permute.xlu0 %5106
      %5108 = vrot.lane.b32.xlu0 %v5044, 80
      %v5109 = vpop.permute.xlu0 %5108
      %5110 = vrot.lane.b32.xlu0 %v5045, 80
      %v5111 = vpop.permute.xlu0 %5110
      %5112 = vrot.lane.b32.xlu0 %v5046, 80
      %v5113 = vpop.permute.xlu0 %5112
      %v5114 = vsel %vm606, %v5107, %v5109
      %v5115 = vsel %vm606, %v5109, %v5111
      %v5116 = vsel %vm606, %v5111, %v5113
      %5117 = vrot.lane.b32.xlu0 %v5043, 79
      %v5118 = vpop.permute.xlu0 %5117
      %5119 = vrot.lane.b32.xlu0 %v5044, 79
      %v5120 = vpop.permute.xlu0 %5119
      %5121 = vrot.lane.b32.xlu0 %v5045, 79
      %v5122 = vpop.permute.xlu0 %5121
      %5123 = vrot.lane.b32.xlu0 %v5046, 79
      %v5124 = vpop.permute.xlu0 %5123
      %v5125 = vsel %vm622, %v5118, %v5120
      %v5126 = vsel %vm622, %v5120, %v5122
      %v5127 = vsel %vm622, %v5122, %v5124
      %5128 = vrot.lane.b32.xlu0 %v5043, 78
      %v5129 = vpop.permute.xlu0 %5128
      %5130 = vrot.lane.b32.xlu0 %v5044, 78
      %v5131 = vpop.permute.xlu0 %5130
      %5132 = vrot.lane.b32.xlu0 %v5045, 78
      %v5133 = vpop.permute.xlu0 %5132
      %5134 = vrot.lane.b32.xlu0 %v5046, 78
      %v5135 = vpop.permute.xlu0 %5134
      %v5136 = vsel %vm638, %v5129, %v5131
      %v5137 = vsel %vm638, %v5131, %v5133
      %v5138 = vsel %vm638, %v5133, %v5135
      %v5139 = vld [vmem:[%s12] sm:$0xf]
      %v5140 = vld [vmem:[%s13] sm:$0xf]
      %5142 = vset.pattern.permute.xlu0 0
      %5143 = vperm.xlu0 %5142, %v5140
      %v5144 = vpop.permute.xlu0 %5143
      %5146 = vrot.lane.b32.xlu0 %v5059, 103
      %v5147 = vpop.permute.xlu0 %5146
      %5148 = vrot.lane.b32.xlu0 %v5060, 103
      %v5149 = vpop.permute.xlu0 %5148
      %5150 = vrot.lane.b32.xlu0 %v5061, 103
      %v5151 = vpop.permute.xlu0 %5150
      %5152 = vrot.lane.b32.xlu0 %v5058, 103
      %v5153 = vpop.permute.xlu0 %5152
      %5154 = vrot.lane.b32.xlu0 %v5070, 103
      %v5155 = vpop.permute.xlu0 %5154
      %5156 = vrot.lane.b32.xlu0 %v5071, 103
      %v5157 = vpop.permute.xlu0 %5156
      %5158 = vrot.lane.b32.xlu0 %v5072, 103
      %v5159 = vpop.permute.xlu0 %5158
      %5160 = vrot.lane.b32.xlu0 %v5069, 103
      %v5161 = vpop.permute.xlu0 %5160
      %5162 = vrot.lane.b32.xlu0 %v5081, 103
      %v5163 = vpop.permute.xlu0 %5162
      %5164 = vrot.lane.b32.xlu0 %v5082, 103
      %v5165 = vpop.permute.xlu0 %5164
      %5166 = vrot.lane.b32.xlu0 %v5083, 103
      %v5167 = vpop.permute.xlu0 %5166
      %5168 = vrot.lane.b32.xlu0 %v5080, 103
      %v5169 = vpop.permute.xlu0 %5168
      %5170 = vrot.lane.b32.xlu0 %v5092, 103
      %v5171 = vpop.permute.xlu0 %5170
      %5172 = vrot.lane.b32.xlu0 %v5093, 103
      %v5173 = vpop.permute.xlu0 %5172
      %5174 = vrot.lane.b32.xlu0 %v5094, 103
      %v5175 = vpop.permute.xlu0 %5174
      %5176 = vrot.lane.b32.xlu0 %v5091, 103
      %v5177 = vpop.permute.xlu0 %5176
      %5178 = vrot.lane.b32.xlu0 %v5103, 103
      %v5179 = vpop.permute.xlu0 %5178
      %5180 = vrot.lane.b32.xlu0 %v5104, 103
      %v5181 = vpop.permute.xlu0 %5180
      %5182 = vrot.lane.b32.xlu0 %v5105, 103
      %v5183 = vpop.permute.xlu0 %5182
      %5184 = vrot.lane.b32.xlu0 %v5102, 103
      %v5185 = vpop.permute.xlu0 %5184
      %5186 = vrot.lane.b32.xlu0 %v5114, 103
      %v5187 = vpop.permute.xlu0 %5186
      %5188 = vrot.lane.b32.xlu0 %v5115, 103
      %v5189 = vpop.permute.xlu0 %5188
      %5190 = vrot.lane.b32.xlu0 %v5116, 103
      %v5191 = vpop.permute.xlu0 %5190
      %5192 = vrot.lane.b32.xlu0 %v5113, 103
      %v5193 = vpop.permute.xlu0 %5192
      %5194 = vrot.lane.b32.xlu0 %v5125, 103
      %v5195 = vpop.permute.xlu0 %5194
      %5196 = vrot.lane.b32.xlu0 %v5126, 103
      %v5197 = vpop.permute.xlu0 %5196
      %5198 = vrot.lane.b32.xlu0 %v5127, 103
      %v5199 = vpop.permute.xlu0 %5198
      %5200 = vrot.lane.b32.xlu0 %v5124, 103
      %v5201 = vpop.permute.xlu0 %5200
      %5202 = vrot.lane.b32.xlu0 %v5136, 103
      %v5203 = vpop.permute.xlu0 %5202
      %5204 = vrot.lane.b32.xlu0 %v5137, 103
      %v5205 = vpop.permute.xlu0 %5204
      %5206 = vrot.lane.b32.xlu0 %v5138, 103
      %v5207 = vpop.permute.xlu0 %5206
      %5208 = vrot.lane.b32.xlu0 %v5135, 103
      %v5209 = vpop.permute.xlu0 %5208
      %v5210 = vsel %vm574, %v5147, %v5149
      %v5211 = vsel %vm574, %v5149, %v5151
      %v5212 = vsel %vm574, %v5151, %v5153
      %v5213 = vsel %vm574, %v5155, %v5157
      %v5214 = vsel %vm574, %v5157, %v5159
      %v5215 = vsel %vm574, %v5159, %v5161
      %v5216 = vsel %vm574, %v5163, %v5165
      %v5217 = vsel %vm574, %v5165, %v5167
      %v5218 = vsel %vm574, %v5167, %v5169
      %v5219 = vsel %vm574, %v5171, %v5173
      %v5220 = vsel %vm574, %v5173, %v5175
      %v5221 = vsel %vm574, %v5175, %v5177
      %v5222 = vsel %vm574, %v5179, %v5181
      %v5223 = vsel %vm574, %v5181, %v5183
      %v5224 = vsel %vm574, %v5183, %v5185
      %v5225 = vsel %vm574, %v5187, %v5189
      %v5226 = vsel %vm574, %v5189, %v5191
      %v5227 = vsel %vm574, %v5191, %v5193
      %v5228 = vsel %vm574, %v5195, %v5197
      %v5229 = vsel %vm574, %v5197, %v5199
      %v5230 = vsel %vm574, %v5199, %v5201
      %v5231 = vsel %vm574, %v5203, %v5205
      %v5232 = vsel %vm574, %v5205, %v5207
      %v5233 = vsel %vm574, %v5207, %v5209
      %v5262 = vsel %vm1149, %v5139, 0
      %5264 = vmatprep.subr.mxu0 0.0
      %5265 = vmatpush1.msra.mxu0 0.0
      %5266 = vmatprep.subr.mxu0 0.0
      %5267 = vmatpush1.msra.mxu0 0.0
      %5268 = vmatprep.subr.mxu0 0.0
      %5269 = vmatpush1.msra.mxu0 0.0
      %5270 = vmatprep.subr.mxu0 0.0
      %5271 = vmatpush1.msra.mxu0 0.0
      %5272 = vmatprep.subr.mxu0 0.0
      %5273 = vmatpush1.msra.mxu0 0.0
      %5274 = vmatprep.subr.mxu0 0.0
      %5275 = vmatpush1.msra.mxu0 0.0
      %5276 = vmatprep.subr.mxu0 0.0
      %5277 = vmatpush1.msra.mxu0 0.0
      %5278 = vmatprep.subr.mxu0 %v5232
      %5279 = vmatpush1.msra.mxu0 %v5231
      %5280 = vmatprep.subr.mxu0 %v5229
      %5281 = vmatpush1.msra.mxu0 %v5228
      %5282 = vmatprep.subr.mxu0 %v5226
      %5283 = vmatpush1.msra.mxu0 %v5225
      %5284 = vmatprep.subr.mxu0 %v5223
      %5285 = vmatpush1.msra.mxu0 %v5222
      %5286 = vmatprep.subr.mxu0 %v5220
      %5287 = vmatpush1.msra.mxu0 %v5219
      %5288 = vmatprep.subr.mxu0 %v5217
      %5289 = vmatpush1.msra.mxu0 %v5216
      %5290 = vmatprep.subr.mxu0 %v5214
      %5291 = vmatpush1.msra.mxu0 %v5213
      %5292 = vmatprep.subr.mxu0 %v5211
      %5293 = vmatpush1.msra.mxu0 %v5210
      %5294 = vmatprep.subr.mxu0 %v5093
      %5295 = vmatpush1.msra.mxu0 %v5092
      %5296 = vmatprep.subr.mxu0 0.0
      %5297 = vmatpush2.msra.mxu0 0.0
      %5298 = vmatprep.subr.mxu0 0.0
      %5299 = vmatpush2.msra.mxu0 0.0
      %5300 = vmatprep.subr.mxu0 0.0
      %5301 = vmatpush2.msra.mxu0 0.0
      %5302 = vmatprep.subr.mxu0 0.0
      %5303 = vmatpush2.msra.mxu0 0.0
      %5304 = vmatprep.subr.mxu0 0.0
      %5305 = vmatpush2.msra.mxu0 0.0
      %5306 = vmatprep.subr.mxu0 0.0
      %5307 = vmatpush2.msra.mxu0 0.0
      %5308 = vmatprep.subr.mxu0 0.0
      %5309 = vmatpush2.msra.mxu0 0.0
      %5310 = vmatprep.subr.mxu0 0.0
      %5311 = vmatpush2.msra.mxu0 0.0
      %5312 = vmatprep.subr.mxu0 0.0
      %5313 = vmatpush2.msra.mxu0 0.0
      %5314 = vmatprep.subr.mxu0 0.0
      %5315 = vmatpush2.msra.mxu0 0.0
      %5316 = vmatprep.subr.mxu0 0.0
      %5317 = vmatpush2.msra.mxu0 0.0
      %5318 = vmatprep.subr.mxu0 0.0
      %5319 = vmatpush2.msra.mxu0 0.0
      %5320 = vmatprep.subr.mxu0 0.0
      %5321 = vmatpush2.msra.mxu0 0.0
      %5322 = vmatprep.subr.mxu0 0.0
      %5323 = vmatpush2.msra.mxu0 0.0
      %5324 = vmatprep.subr.mxu0 0.0
      %5325 = vmatpush2.msra.mxu0 0.0
      %5326 = vmatprep.subr.mxu0 0.0
      %5327 = vmatpush2.msra.mxu0 0.0
      %5328 = vmatprep.mubr.f32.mxu0 0.0
      %5329 = vmatmul.mubr.f32.gmra.mxu0 %v5262
      %v5330 = vpop.f32.mrf.mxu0
      %v5331 = vadd.f32 %v5144, %v5330
      %v5332 = vpop.f32.mrf.mxu0
      %v5333 = vadd.f32 %v5144, %v5332
      %5334 = vdwg.mxu0
      %5335 = vmatprep.subr.mxu0 0.0
      %5336 = vmatpush1.msra.mxu0 0.0
      %5337 = vmatprep.subr.mxu0 0.0
      %5338 = vmatpush1.msra.mxu0 0.0
      %5339 = vmatprep.subr.mxu0 0.0
      %5340 = vmatpush1.msra.mxu0 0.0
      %5341 = vmatprep.subr.mxu0 0.0
      %5342 = vmatpush1.msra.mxu0 0.0
      %5343 = vmatprep.subr.mxu0 0.0
      %5344 = vmatpush1.msra.mxu0 0.0
      %5345 = vmatprep.subr.mxu0 0.0
      %5346 = vmatpush1.msra.mxu0 0.0
      %5347 = vmatprep.subr.mxu0 0.0
      %5348 = vmatpush1.msra.mxu0 0.0
      %5349 = vmatprep.subr.mxu0 0.0
      %5350 = vmatpush1.msra.mxu0 %v5233
      %5351 = vmatprep.subr.mxu0 0.0
      %5352 = vmatpush1.msra.mxu0 %v5230
      %5353 = vmatprep.subr.mxu0 0.0
      %5354 = vmatpush1.msra.mxu0 %v5227
      %5355 = vmatprep.subr.mxu0 0.0
      %5356 = vmatpush1.msra.mxu0 %v5224
      %5357 = vmatprep.subr.mxu0 0.0
      %5358 = vmatpush1.msra.mxu0 %v5221
      %5359 = vmatprep.subr.mxu0 0.0
      %5360 = vmatpush1.msra.mxu0 %v5218
      %5361 = vmatprep.subr.mxu0 0.0
      %5362 = vmatpush1.msra.mxu0 %v5215
      %5363 = vmatprep.subr.mxu0 0.0
      %5364 = vmatpush1.msra.mxu0 %v5212
      %5365 = vmatprep.subr.mxu0 0.0
      %5366 = vmatpush1.msra.mxu0 %v5094
      %5367 = vmatprep.subr.mxu0 0.0
      %5368 = vmatpush2.msra.mxu0 0.0
      %5369 = vmatprep.subr.mxu0 0.0
      %5370 = vmatpush2.msra.mxu0 0.0
      %5371 = vmatprep.subr.mxu0 0.0
      %5372 = vmatpush2.msra.mxu0 0.0
      %5373 = vmatprep.subr.mxu0 0.0
      %5374 = vmatpush2.msra.mxu0 0.0
      %5375 = vmatprep.subr.mxu0 0.0
      %5376 = vmatpush2.msra.mxu0 0.0
      %5377 = vmatprep.subr.mxu0 0.0
      %5378 = vmatpush2.msra.mxu0 0.0
      %5379 = vmatprep.subr.mxu0 0.0
      %5380 = vmatpush2.msra.mxu0 0.0
      %5381 = vmatprep.subr.mxu0 0.0
      %5382 = vmatpush2.msra.mxu0 0.0
      %5383 = vmatprep.subr.mxu0 0.0
      %5384 = vmatpush2.msra.mxu0 0.0
      %5385 = vmatprep.subr.mxu0 0.0
      %5386 = vmatpush2.msra.mxu0 0.0
      %5387 = vmatprep.subr.mxu0 0.0
      %5388 = vmatpush2.msra.mxu0 0.0
      %5389 = vmatprep.subr.mxu0 0.0
      %5390 = vmatpush2.msra.mxu0 0.0
      %5391 = vmatprep.subr.mxu0 0.0
      %5392 = vmatpush2.msra.mxu0 0.0
      %5393 = vmatprep.subr.mxu0 0.0
      %5394 = vmatpush2.msra.mxu0 0.0
      %5395 = vmatprep.subr.mxu0 0.0
      %5396 = vmatpush2.msra.mxu0 0.0
      %5397 = vmatprep.subr.mxu0 0.0
      %5398 = vmatpush2.msra.mxu0 0.0
      %5399 = vmatprep.mubr.f32.mxu0 0.0
      %5400 = vmatmul.mubr.f32.gmra.mxu0 %v5262
      %v5401 = vpop.f32.mrf.mxu0
      %v5402 = vadd.f32 %v5144, %v5401
      %v5403 = vpop.f32.mrf.mxu0
      %5404 = vdwg.mxu0
      %v5407 = vcombine.low %v5331, %v5333
      %5409 = vst [vmem:[%s467] sm:$0xff] %v5407
      %5410 = vst [vmem:[%s467 + $0x8] sm:$0xf] %v5402
      %p5411 = scmp.lt.s32.totalorder %s25, 1
      %s5412 = scalar_select %p5411, %s25, 1
      %s5413 = smul.addr %s5412, 3
      %s5414 = smul.addr %s5413, 4
      %s5415 = scalar_lea.vmem %s14, %s5414
      // Predicated region
      $region77: #{forward.1} parent=75 // pred_check
        %p5416 = pneg %p342
      $region78: #{forward.1} parent=75 // pred_check_branch
        %5418 = sbr.rel (%p5416) target = $region80
      $region79: #{forward.1} parent=75 // pred_region
        _
      $region80: #{forward.1} parent=75 // pred_fallthru
        _
    $region76: #{forward.1} parent=5 // pred_fallthru
      _
    %p5419 = scmp.le.s32.totalorder 2, %s20
    // Predicated region
    $region81: #{forward.1} parent=5 // pred_check
      %p5420 = pneg %p5419
    $region82: #{forward.1} parent=5 // pred_check_branch
      %5422 = sbr.rel (%p5420) target = $region84
    $region83: #{forward.1} parent=5 // pred_region
      %s5423 = ssub.s32 %s20, 2
      // Predicated region
      $region85: #{forward.1} parent=83 // pred_check
        %p5424 = pneg %p348
      $region86: #{forward.1} parent=83 // pred_check_branch
        %5426 = sbr.rel (%p5424) target = $region88
      $region87: #{forward.1} parent=83 // pred_region
        %p5427 = scmp.lt.s32.totalorder %s26, 1
        %s5428 = scalar_select %p5427, %s26, 1
        %s5429 = smul.addr %s5428, 3
        %s5430 = smul.addr %s5429, 4
        %s5431 = scalar_lea.vmem %s14, %s5430
      $region88: #{forward.1} parent=83 // pred_fallthru
        _
    $region84: #{forward.1} parent=5 // pred_fallthru
      _
  $region6: #{forward.1} parent=0 // loop_footer
    %s24 = sadd.s32 1, %s20
  $region7: #{forward.1} parent=0 // loop_footer_branch
    %19 = sbr.rel target = $region3
  $region8: #{forward.1} parent=0 // loop_exit
    _

</llo_original>
